<compile_context>
chip_gen: v7x
topology: tpu7x:2x2x1
jax: 0.10.0
libtpu: 0.0.40
codegen_flags: <defaults>
</compile_context>

<pallas_src>
import functools

import jax
import jax.numpy as jnp
from jax.experimental import pallas as pl
from jax.experimental.pallas import tpu as pltpu

# ---------------------------------------------------------------------------
# Model hyper-parameters (small, synthetic)
# ---------------------------------------------------------------------------
VOCAB = 64
D_MODEL = 32
N_HEADS = 4
D_HEAD = D_MODEL // N_HEADS
D_FF = 64
N_LAYERS = 2
MAX_REL = 8          # relative-position clipping for the bias table
EPS = 1e-6
NB_TARGET = 256      # sequences processed per grid step at scale (v5e/v7x-safe)


def _round_up(a, b):
    return ((a + b - 1) // b) * b


# ---------------------------------------------------------------------------
# Pallas kernel: full encoder stack for a block of NB sequences per grid step
# ---------------------------------------------------------------------------
def encoder_stack_kernel(ids_ref, mask_ref, bias_ref, embed_ref,
                         wqkv_ref, wo_ref, w1_ref, w2_ref,
                         ln1_ref, ln2_ref, lnf_ref, o_ref, x_scratch):
    NB, L = mask_ref.shape
    V, D = embed_ref.shape
    H = bias_ref.shape[0]
    dh = D // H
    n_layers = wqkv_ref.shape[0]
    M = NB * L

    # ---- embedding lookup in-kernel via one-hot matmul (MXU, bf16 in / f32 acc) ----
    ids = ids_ref[...]                                               # (NB, L) int32
    vocab_iota = jax.lax.broadcasted_iota(jnp.int32, (NB, L, V), 2)  # (NB, L, V)
    onehot = (vocab_iota == ids[:, :, None]).astype(jnp.bfloat16)    # (NB, L, V)
    onehot = onehot.reshape(M, V)                                    # leading-dim merge (free)
    x0 = jnp.dot(onehot, embed_ref[...],
                 preferred_element_type=jnp.float32)                 # (M, D) f32

    # ---- additive key-padding mask + relative position bias (computed once, f32) ----
    madd = ((1.0 - mask_ref[...]) * (-1e9))[:, None, :]              # (NB, 1, L)
    bias = bias_ref[...]                                             # (H, L, L)

    def rmsnorm(v, g):
        var = jnp.mean(v * v, axis=-1, keepdims=True)
        return v * jax.lax.rsqrt(var + EPS) * g

    def layer_body(layer, x):
        # dynamic leading-dim indexing of the stacked weight refs (bf16 weights)
        wqkv_l = wqkv_ref[layer]                                     # (D, 3D)
        wo_l = wo_ref[layer]                                         # (D, D)
        w1_l = w1_ref[layer]                                         # (D, D_FF)
        w2_l = w2_ref[layer]                                         # (D_FF, D)
        g1 = ln1_ref[pl.ds(layer, 1), :]                             # (1, D) f32
        g2 = ln2_ref[pl.ds(layer, 1), :]                             # (1, D) f32

        # ---- self-attention sub-block ----
        h = rmsnorm(x, g1)                                           # (M, D) f32
        qkv = jnp.dot(h.astype(jnp.bfloat16), wqkv_l,
                      preferred_element_type=jnp.float32)            # (M, 3D)
        qkv_b = qkv.astype(jnp.bfloat16)
        q3 = qkv_b[:, 0:D].reshape(NB, L, D)
        k3 = qkv_b[:, D:2 * D].reshape(NB, L, D)
        v3 = qkv_b[:, 2 * D:3 * D].reshape(NB, L, D)

        ctx_parts = []
        for hh in range(H):                          # static unroll, heads = lane slices
            lo, hi = hh * dh, (hh + 1) * dh
            qh = q3[:, :, lo:hi]                                     # (NB, L, dh) bf16
            kh = k3[:, :, lo:hi]
            vh = v3[:, :, lo:hi]
            s = jnp.einsum('nqd,nkd->nqk', qh, kh,
                           preferred_element_type=jnp.float32)       # (NB, L, L) f32
            s = s + bias[hh][None, :, :] + madd
            s = s - jnp.max(s, axis=-1, keepdims=True)
            p = jnp.exp(s)
            p = p * pl.reciprocal(jnp.sum(p, axis=-1, keepdims=True), approx=True)
            ctx_h = jnp.einsum('nqk,nkd->nqd', p.astype(jnp.bfloat16), vh,
                               preferred_element_type=jnp.float32)   # (NB, L, dh)
            ctx_parts.append(ctx_h.reshape(M, dh))
        ctx = jnp.concatenate(ctx_parts, axis=-1)                    # (M, D) lane concat
        x = x + jnp.dot(ctx.astype(jnp.bfloat16), wo_l,
                        preferred_element_type=jnp.float32)          # single wo matmul

        # ---- feed-forward sub-block ----
        h2 = rmsnorm(x, g2)
        ff = jnp.maximum(jnp.dot(h2.astype(jnp.bfloat16), w1_l,
                                 preferred_element_type=jnp.float32), 0.0)
        x = x + jnp.dot(ff.astype(jnp.bfloat16), w2_l,
                        preferred_element_type=jnp.float32)
        return x

    x = jax.lax.fori_loop(0, n_layers, layer_body, x0)

    # ---- final RMSNorm + lane-dense repack: (M, D) -> (NB, L*D) single dense store ----
    x_scratch[...] = rmsnorm(x, lnf_ref[...])                        # (M, D) f32
    parts = [x_scratch[pl.ds(l, NB, stride=L), :] for l in range(L)]  # L x (NB, D)
    o_ref[...] = jnp.concatenate(parts, axis=-1)                     # (NB, L*D)


# ---------------------------------------------------------------------------
# Parameter initialization (deterministic, synthetic)
# ---------------------------------------------------------------------------
def init_params(key):
    ks = jax.random.split(key, 10)
    s = 0.05
    wq = jax.random.normal(ks[1], (N_LAYERS, D_MODEL, D_MODEL), jnp.float32) * s
    wk = jax.random.normal(ks[2], (N_LAYERS, D_MODEL, D_MODEL), jnp.float32) * s
    wv = jax.random.normal(ks[3], (N_LAYERS, D_MODEL, D_MODEL), jnp.float32) * s
    params = dict(
        embed=jax.random.normal(ks[0], (VOCAB, D_MODEL), jnp.float32) * s,
        wqkv=jnp.concatenate([wq, wk, wv], axis=-1),      # fused (NL, D, 3D)
        wo=jax.random.normal(ks[4], (N_LAYERS, D_MODEL, D_MODEL), jnp.float32) * s,
        w1=jax.random.normal(ks[5], (N_LAYERS, D_MODEL, D_FF), jnp.float32) * s,
        w2=jax.random.normal(ks[6], (N_LAYERS, D_FF, D_MODEL), jnp.float32) * s,
        ln1=jnp.ones((N_LAYERS, D_MODEL), jnp.float32),
        ln2=jnp.ones((N_LAYERS, D_MODEL), jnp.float32),
        lnf=jnp.ones((1, D_MODEL), jnp.float32),
        rel_table=jax.random.normal(ks[7], (2 * MAX_REL + 1, N_HEADS), jnp.float32) * s,
    )
    return params


# ---------------------------------------------------------------------------
# FiD EncoderWrapper.forward
# ---------------------------------------------------------------------------
@functools.partial(jax.jit, static_argnames=("n_passages",))
def fid_encoder_forward(params, input_ids, attention_mask, *, n_passages):
    bsz, total_length = input_ids.shape
    L = total_length // n_passages
    BP = bsz * n_passages

    # --- EncoderWrapper view semantics (glue) ---
    ids = input_ids.reshape(BP, L).astype(jnp.int32)
    mask = attention_mask.reshape(BP, L).astype(jnp.float32)

    # --- sequences per grid step: multiple of 8 (sublane alignment), capped at
    #     NB_TARGET, chosen so realistic sizes give >= 2 grid steps (v7x dual TCs). ---
    NB = min(NB_TARGET, max(8, _round_up(pl.cdiv(BP, 2), 8)))
    BP_pad = _round_up(BP, NB)
    if BP_pad != BP:
        pad = BP_pad - BP
        ids = jnp.pad(ids, ((0, pad), (0, 0)))
        mask = jnp.pad(mask, ((0, pad), (0, 0)))

    # --- T5-style relative position bias table lookup (glue) ---
    pos = jnp.arange(L)
    rel = jnp.clip(pos[None, :] - pos[:, None], -MAX_REL, MAX_REL) + MAX_REL   # (L, L)
    pos_bias = jnp.transpose(params["rel_table"][rel], (2, 0, 1)).astype(jnp.float32)  # (H, L, L)

    # --- bf16 weight staging (MXU-native datapath); layer-norm gains stay f32 ---
    embed_bf = params["embed"].astype(jnp.bfloat16)
    wqkv_bf = params["wqkv"].astype(jnp.bfloat16)
    wo_bf = params["wo"].astype(jnp.bfloat16)
    w1_bf = params["w1"].astype(jnp.bfloat16)
    w2_bf = params["w2"].astype(jnp.bfloat16)

    # --- advisory cost estimate for XLA scheduling around the custom call ---
    M_tot = BP_pad * L
    flops = int(2 * M_tot * (VOCAB * D_MODEL
                             + N_LAYERS * (4 * D_MODEL * D_MODEL
                                           + 2 * L * D_MODEL
                                           + 2 * D_MODEL * D_FF)))
    transcendentals = int(M_tot * L * N_HEADS * N_LAYERS)
    weight_bytes = 2 * (VOCAB * D_MODEL
                        + N_LAYERS * (4 * D_MODEL * D_MODEL + 2 * D_MODEL * D_FF))
    bytes_accessed = int(BP_pad * L * 8 + BP_pad * L * D_MODEL * 4 + weight_bytes)

    out = pl.pallas_call(
        encoder_stack_kernel,
        out_shape=jax.ShapeDtypeStruct((BP_pad, L * D_MODEL), jnp.float32),
        grid_spec=pltpu.PrefetchScalarGridSpec(
            num_scalar_prefetch=0,
            grid=(BP_pad // NB,),
            in_specs=[
                pl.BlockSpec((NB, L), lambda i: (i, 0)),                          # token ids
                pl.BlockSpec((NB, L), lambda i: (i, 0)),                          # attention mask
                pl.BlockSpec((N_HEADS, L, L), lambda i: (0, 0, 0)),               # position bias
                pl.BlockSpec((VOCAB, D_MODEL), lambda i: (0, 0)),                 # embed table (bf16)
                pl.BlockSpec((N_LAYERS, D_MODEL, 3 * D_MODEL), lambda i: (0, 0, 0)),  # wqkv (bf16)
                pl.BlockSpec((N_LAYERS, D_MODEL, D_MODEL), lambda i: (0, 0, 0)),      # wo   (bf16)
                pl.BlockSpec((N_LAYERS, D_MODEL, D_FF), lambda i: (0, 0, 0)),         # w1   (bf16)
                pl.BlockSpec((N_LAYERS, D_FF, D_MODEL), lambda i: (0, 0, 0)),         # w2   (bf16)
                pl.BlockSpec((N_LAYERS, D_MODEL), lambda i: (0, 0)),                  # ln1
                pl.BlockSpec((N_LAYERS, D_MODEL), lambda i: (0, 0)),                  # ln2
                pl.BlockSpec((1, D_MODEL), lambda i: (0, 0)),                         # lnf
            ],
            out_specs=pl.BlockSpec((NB, L * D_MODEL), lambda i: (i, 0)),          # lane-dense out
            scratch_shapes=[pltpu.VMEM((NB * L, D_MODEL), jnp.float32)],
        ),
        compiler_params=pltpu.CompilerParams(
            dimension_semantics=("parallel",),
            vmem_limit_bytes=48 * 1024 * 1024,   # budgeted for v7x's 64 MiB/TC
        ),
        cost_estimate=pl.CostEstimate(flops=flops,
                                      transcendentals=transcendentals,
                                      bytes_accessed=bytes_accessed),
    )(ids, mask, pos_bias,
      embed_bf, wqkv_bf, wo_bf, w1_bf, w2_bf,
      params["ln1"], params["ln2"], params["lnf"])

    # --- EncoderWrapper output view: (bsz, n_passages * passage_length, d_model) ---
    out = out[:BP]                                       # drop padded sequences
    last_hidden_state = out.reshape(bsz, n_passages * L, D_MODEL)
    return last_hidden_state


# ---------------------------------------------------------------------------
# main
# ---------------------------------------------------------------------------
if __name__ == "__main__":
    key = jax.random.PRNGKey(0)
    k_ids, k_params = jax.random.split(key)

    bsz = 2
    n_passages = 2
    passage_length = 8
    total_length = n_passages * passage_length   # 16

    input_ids = jax.random.randint(k_ids, (bsz, total_length), 0, VOCAB, dtype=jnp.int32)
    # last two tokens of each passage are padding
    attention_mask = jnp.ones((bsz, n_passages, passage_length), jnp.int32)
    attention_mask = attention_mask.at[:, :, -2:].set(0).reshape(bsz, total_length)

    params = init_params(k_params)

    last_hidden = fid_encoder_forward(params, input_ids, attention_mask,
                                      n_passages=n_passages)
    last_hidden = jax.block_until_ready(last_hidden)

    assert last_hidden.shape == (bsz, n_passages * passage_length, D_MODEL)
    assert bool(jnp.all(jnp.isfinite(last_hidden)))
    print("KERNEL_OK")
</pallas_src>

<mosaic_0001>
module attributes {stable_mosaic.version = 11 : i64} {
  func.func @encoder_stack_kernel(%arg0: i32, %arg1: memref<8x8xi32, #tpu.memory_space<vmem>>, %arg2: memref<8x8xf32, #tpu.memory_space<vmem>>, %arg3: memref<4x8x8xf32, #tpu.memory_space<vmem>>, %arg4: memref<64x32xbf16, #tpu.memory_space<vmem>>, %arg5: memref<2x32x96xbf16, #tpu.memory_space<vmem>>, %arg6: memref<2x32x32xbf16, #tpu.memory_space<vmem>>, %arg7: memref<2x32x64xbf16, #tpu.memory_space<vmem>>, %arg8: memref<2x64x32xbf16, #tpu.memory_space<vmem>>, %arg9: memref<2x32xf32, #tpu.memory_space<vmem>>, %arg10: memref<2x32xf32, #tpu.memory_space<vmem>>, %arg11: memref<1x32xf32, #tpu.memory_space<vmem>>, %arg12: memref<8x256xf32, #tpu.memory_space<vmem>>, %arg13: memref<64x32xf32, #tpu.memory_space<vmem>>) attributes {dimension_semantics = [#tpu.dimension_semantics<parallel>], iteration_bounds = array<i64: 1>, scalar_prefetch = 0 : i64, scratch_operands = 1 : i64, tpu.core_type = #tpu.core_type<tc>, window_params = [{transform_indices = @transform_0, window_bounds = array<i64: 8, 8>}, {transform_indices = @transform_1, window_bounds = array<i64: 8, 8>}, {pipeline_mode = #tpu.pipeline_mode<synchronous>, transform_indices = @transform_2, window_bounds = array<i64: 4, 8, 8>}, {pipeline_mode = #tpu.pipeline_mode<synchronous>, transform_indices = @transform_3, window_bounds = array<i64: 64, 32>}, {pipeline_mode = #tpu.pipeline_mode<synchronous>, transform_indices = @transform_4, window_bounds = array<i64: 2, 32, 96>}, {pipeline_mode = #tpu.pipeline_mode<synchronous>, transform_indices = @transform_5, window_bounds = array<i64: 2, 32, 32>}, {pipeline_mode = #tpu.pipeline_mode<synchronous>, transform_indices = @transform_6, window_bounds = array<i64: 2, 32, 64>}, {pipeline_mode = #tpu.pipeline_mode<synchronous>, transform_indices = @transform_7, window_bounds = array<i64: 2, 64, 32>}, {pipeline_mode = #tpu.pipeline_mode<synchronous>, transform_indices = @transform_8, window_bounds = array<i64: 2, 32>}, {pipeline_mode = #tpu.pipeline_mode<synchronous>, transform_indices = @transform_9, window_bounds = array<i64: 2, 32>}, {pipeline_mode = #tpu.pipeline_mode<synchronous>, transform_indices = @transform_10, window_bounds = array<i64: 1, 32>}, {transform_indices = @transform_11, window_bounds = array<i64: 8, 256>}]} {
    %c0 = arith.constant 0 : index
    %c0_0 = arith.constant 0 : index
    %0 = vector.load %arg1[%c0, %c0_0] : memref<8x8xi32, #tpu.memory_space<vmem>>, vector<8x8xi32>
    %1 = tpu.iota {dimensions = array<i32: 2>} : vector<8x8x64xi32>
    %2 = vector.shape_cast %0 : vector<8x8xi32> to vector<8x8x1xi32>
    %3 = vector.broadcast %2 : vector<8x8x1xi32> to vector<8x8x64xi32>
    %4 = arith.cmpi eq, %1, %3 : vector<8x8x64xi32>
    %5 = arith.extui %4 : vector<8x8x64xi1> to vector<8x8x64xi32>
    %6 = arith.sitofp %5 : vector<8x8x64xi32> to vector<8x8x64xf32>
    %7 = arith.truncf %6 : vector<8x8x64xf32> to vector<8x8x64xbf16>
    %8 = vector.shape_cast %7 : vector<8x8x64xbf16> to vector<64x64xbf16>
    %c0_1 = arith.constant 0 : index
    %c0_2 = arith.constant 0 : index
    %9 = vector.load %arg4[%c0_1, %c0_2] : memref<64x32xbf16, #tpu.memory_space<vmem>>, vector<64x32xbf16>
    %cst = arith.constant dense<0.000000e+00> : vector<64x32xf32>
    %10 = tpu.matmul %8, %9, %cst {dimension_numbers = #tpu.dot_dimension_numbers<[1], [0], [0], [1], [0, 0, 1, 1], [], []>} : vector<64x64xbf16>, vector<64x32xbf16>, vector<64x32xf32> -> vector<64x32xf32>
    %c0_3 = arith.constant 0 : index
    %c0_4 = arith.constant 0 : index
    %11 = vector.load %arg2[%c0_3, %c0_4] : memref<8x8xf32, #tpu.memory_space<vmem>>, vector<8x8xf32>
    %cst_5 = arith.constant 1.000000e+00 : f32
    %12 = vector.broadcast %cst_5 : f32 to vector<8x8xf32>
    %13 = arith.subf %12, %11 : vector<8x8xf32>
    %cst_6 = arith.constant -1.000000e+09 : f32
    %14 = vector.broadcast %cst_6 : f32 to vector<8x8xf32>
    %15 = arith.mulf %13, %14 : vector<8x8xf32>
    %16 = vector.shape_cast %15 : vector<8x8xf32> to vector<8x1x8xf32>
    %c0_7 = arith.constant 0 : index
    %c0_8 = arith.constant 0 : index
    %c0_9 = arith.constant 0 : index
    %17 = vector.load %arg3[%c0_7, %c0_8, %c0_9] : memref<4x8x8xf32, #tpu.memory_space<vmem>>, vector<4x8x8xf32>
    %c0_i32 = arith.constant 0 : i32
    %c2_i32 = arith.constant 2 : i32
    %18 = arith.addi %c0_i32, %c2_i32 : i32
    %c1_i32 = arith.constant 1 : i32
    %19 = scf.for %arg14 = %c0_i32 to %18 step %c1_i32 iter_args(%arg15 = %10) -> (vector<64x32xf32>)  : i32 {
      %44 = arith.index_cast %arg14 : i32 to index
      %c0_29 = arith.constant 0 : index
      %c0_30 = arith.constant 0 : index
      %45 = vector.load %arg5[%44, %c0_29, %c0_30] : memref<2x32x96xbf16, #tpu.memory_space<vmem>>, vector<1x32x96xbf16>
      %46 = vector.shape_cast %45 : vector<1x32x96xbf16> to vector<32x96xbf16>
      %47 = arith.index_cast %arg14 : i32 to index
      %c0_31 = arith.constant 0 : index
      %c0_32 = arith.constant 0 : index
      %48 = vector.load %arg6[%47, %c0_31, %c0_32] : memref<2x32x32xbf16, #tpu.memory_space<vmem>>, vector<1x32x32xbf16>
      %49 = vector.shape_cast %48 : vector<1x32x32xbf16> to vector<32x32xbf16>
      %50 = arith.index_cast %arg14 : i32 to index
      %c0_33 = arith.constant 0 : index
      %c0_34 = arith.constant 0 : index
      %51 = vector.load %arg7[%50, %c0_33, %c0_34] : memref<2x32x64xbf16, #tpu.memory_space<vmem>>, vector<1x32x64xbf16>
      %52 = vector.shape_cast %51 : vector<1x32x64xbf16> to vector<32x64xbf16>
      %53 = arith.index_cast %arg14 : i32 to index
      %c0_35 = arith.constant 0 : index
      %c0_36 = arith.constant 0 : index
      %54 = vector.load %arg8[%53, %c0_35, %c0_36] : memref<2x64x32xbf16, #tpu.memory_space<vmem>>, vector<1x64x32xbf16>
      %55 = vector.shape_cast %54 : vector<1x64x32xbf16> to vector<64x32xbf16>
      %56 = arith.index_cast %arg14 : i32 to index
      %c0_37 = arith.constant 0 : index
      %57 = vector.load %arg9[%56, %c0_37] : memref<2x32xf32, #tpu.memory_space<vmem>>, vector<1x32xf32>
      %58 = arith.index_cast %arg14 : i32 to index
      %c0_38 = arith.constant 0 : index
      %59 = vector.load %arg10[%58, %c0_38] : memref<2x32xf32, #tpu.memory_space<vmem>>, vector<1x32xf32>
      %60 = arith.mulf %arg15, %arg15 : vector<64x32xf32>
      %cst_39 = arith.constant dense<0.000000e+00> : vector<64xf32>
      %61 = vector.multi_reduction <add>, %60, %cst_39 [1] : vector<64x32xf32> to vector<64xf32>
      %62 = vector.shape_cast %61 : vector<64xf32> to vector<64x1xf32>
      %cst_40 = arith.constant 3.200000e+01 : f32
      %63 = vector.broadcast %cst_40 : f32 to vector<64x1xf32>
      %64 = arith.divf %62, %63 : vector<64x1xf32>
      %cst_41 = arith.constant 9.99999997E-7 : f32
      %65 = vector.broadcast %cst_41 : f32 to vector<64x1xf32>
      %66 = arith.addf %64, %65 : vector<64x1xf32>
      %67 = math.rsqrt %66 : vector<64x1xf32>
      %68 = vector.broadcast %67 : vector<64x1xf32> to vector<64x32xf32>
      %69 = arith.mulf %arg15, %68 : vector<64x32xf32>
      %70 = vector.broadcast %57 : vector<1x32xf32> to vector<64x32xf32>
      %71 = arith.mulf %69, %70 : vector<64x32xf32>
      %72 = arith.truncf %71 : vector<64x32xf32> to vector<64x32xbf16>
      %cst_42 = arith.constant dense<0.000000e+00> : vector<64x96xf32>
      %73 = tpu.matmul %72, %46, %cst_42 {dimension_numbers = #tpu.dot_dimension_numbers<[1], [0], [0], [1], [0, 0, 1, 1], [], []>} : vector<64x32xbf16>, vector<32x96xbf16>, vector<64x96xf32> -> vector<64x96xf32>
      %74 = arith.truncf %73 : vector<64x96xf32> to vector<64x96xbf16>
      %75 = vector.extract_strided_slice %74 {offsets = [0, 0], sizes = [64, 32], strides = [1, 1]} : vector<64x96xbf16> to vector<64x32xbf16>
      %76 = vector.shape_cast %75 : vector<64x32xbf16> to vector<8x8x32xbf16>
      %77 = vector.extract_strided_slice %74 {offsets = [0, 32], sizes = [64, 32], strides = [1, 1]} : vector<64x96xbf16> to vector<64x32xbf16>
      %78 = vector.shape_cast %77 : vector<64x32xbf16> to vector<8x8x32xbf16>
      %79 = vector.extract_strided_slice %74 {offsets = [0, 64], sizes = [64, 32], strides = [1, 1]} : vector<64x96xbf16> to vector<64x32xbf16>
      %80 = vector.shape_cast %79 : vector<64x32xbf16> to vector<8x8x32xbf16>
      %81 = vector.extract_strided_slice %76 {offsets = [0, 0, 0], sizes = [8, 8, 8], strides = [1, 1, 1]} : vector<8x8x32xbf16> to vector<8x8x8xbf16>
      %82 = vector.extract_strided_slice %78 {offsets = [0, 0, 0], sizes = [8, 8, 8], strides = [1, 1, 1]} : vector<8x8x32xbf16> to vector<8x8x8xbf16>
      %83 = vector.extract_strided_slice %80 {offsets = [0, 0, 0], sizes = [8, 8, 8], strides = [1, 1, 1]} : vector<8x8x32xbf16> to vector<8x8x8xbf16>
      "tpu.trace_start"() <{level = 10 : i32, message = "nqd,nkd->nqk"}> : () -> ()
      %cst_43 = arith.constant dense<0.000000e+00> : vector<8x8x8xf32>
      %84 = tpu.matmul %81, %82, %cst_43 {dimension_numbers = #tpu.dot_dimension_numbers<[2], [2], [1], [1], [0, 0, 0, 1, 1, 1], [0], [0]>} : vector<8x8x8xbf16>, vector<8x8x8xbf16>, vector<8x8x8xf32> -> vector<8x8x8xf32>
      "tpu.trace_stop"() : () -> ()
      %85 = vector.extract_strided_slice %17 {offsets = [0, 0, 0], sizes = [1, 8, 8], strides = [1, 1, 1]} : vector<4x8x8xf32> to vector<1x8x8xf32>
      %86 = vector.shape_cast %85 : vector<1x8x8xf32> to vector<8x8xf32>
      %87 = vector.shape_cast %86 : vector<8x8xf32> to vector<1x8x8xf32>
      %88 = vector.broadcast %87 : vector<1x8x8xf32> to vector<8x8x8xf32>
      %89 = arith.addf %84, %88 : vector<8x8x8xf32>
      %90 = vector.broadcast %16 : vector<8x1x8xf32> to vector<8x8x8xf32>
      %91 = arith.addf %89, %90 : vector<8x8x8xf32>
      %cst_44 = arith.constant dense<0xFF800000> : vector<8x8xf32>
      %92 = vector.multi_reduction <maximumf>, %91, %cst_44 [2] : vector<8x8x8xf32> to vector<8x8xf32>
      %93 = vector.shape_cast %92 : vector<8x8xf32> to vector<8x8x1xf32>
      %94 = vector.broadcast %93 : vector<8x8x1xf32> to vector<8x8x8xf32>
      %95 = arith.subf %91, %94 : vector<8x8x8xf32>
      %96 = math.exp %95 : vector<8x8x8xf32>
      %cst_45 = arith.constant dense<0.000000e+00> : vector<8x8xf32>
      %97 = vector.multi_reduction <add>, %96, %cst_45 [2] : vector<8x8x8xf32> to vector<8x8xf32>
      %98 = vector.shape_cast %97 : vector<8x8xf32> to vector<8x8x1xf32>
      %99 = tpu.reciprocal %98 {approx = true} : vector<8x8x1xf32> -> vector<8x8x1xf32>
      %100 = vector.broadcast %99 : vector<8x8x1xf32> to vector<8x8x8xf32>
      %101 = arith.mulf %96, %100 : vector<8x8x8xf32>
      %102 = arith.truncf %101 : vector<8x8x8xf32> to vector<8x8x8xbf16>
      "tpu.trace_start"() <{level = 10 : i32, message = "nqk,nkd->nqd"}> : () -> ()
      %cst_46 = arith.constant dense<0.000000e+00> : vector<8x8x8xf32>
      %103 = tpu.matmul %102, %83, %cst_46 {dimension_numbers = #tpu.dot_dimension_numbers<[2], [1], [1], [2], [0, 0, 0, 1, 1, 2], [0], [0]>} : vector<8x8x8xbf16>, vector<8x8x8xbf16>, vector<8x8x8xf32> -> vector<8x8x8xf32>
      "tpu.trace_stop"() : () -> ()
      %104 = vector.shape_cast %103 : vector<8x8x8xf32> to vector<64x8xf32>
      %105 = vector.extract_strided_slice %76 {offsets = [0, 0, 8], sizes = [8, 8, 8], strides = [1, 1, 1]} : vector<8x8x32xbf16> to vector<8x8x8xbf16>
      %106 = vector.extract_strided_slice %78 {offsets = [0, 0, 8], sizes = [8, 8, 8], strides = [1, 1, 1]} : vector<8x8x32xbf16> to vector<8x8x8xbf16>
      %107 = vector.extract_strided_slice %80 {offsets = [0, 0, 8], sizes = [8, 8, 8], strides = [1, 1, 1]} : vector<8x8x32xbf16> to vector<8x8x8xbf16>
      "tpu.trace_start"() <{level = 10 : i32, message = "nqd,nkd->nqk"}> : () -> ()
      %cst_47 = arith.constant dense<0.000000e+00> : vector<8x8x8xf32>
      %108 = tpu.matmul %105, %106, %cst_47 {dimension_numbers = #tpu.dot_dimension_numbers<[2], [2], [1], [1], [0, 0, 0, 1, 1, 1], [0], [0]>} : vector<8x8x8xbf16>, vector<8x8x8xbf16>, vector<8x8x8xf32> -> vector<8x8x8xf32>
      "tpu.trace_stop"() : () -> ()
      %109 = vector.extract_strided_slice %17 {offsets = [1, 0, 0], sizes = [1, 8, 8], strides = [1, 1, 1]} : vector<4x8x8xf32> to vector<1x8x8xf32>
      %110 = vector.shape_cast %109 : vector<1x8x8xf32> to vector<8x8xf32>
      %111 = vector.shape_cast %110 : vector<8x8xf32> to vector<1x8x8xf32>
      %112 = vector.broadcast %111 : vector<1x8x8xf32> to vector<8x8x8xf32>
      %113 = arith.addf %108, %112 : vector<8x8x8xf32>
      %114 = vector.broadcast %16 : vector<8x1x8xf32> to vector<8x8x8xf32>
      %115 = arith.addf %113, %114 : vector<8x8x8xf32>
      %cst_48 = arith.constant dense<0xFF800000> : vector<8x8xf32>
      %116 = vector.multi_reduction <maximumf>, %115, %cst_48 [2] : vector<8x8x8xf32> to vector<8x8xf32>
      %117 = vector.shape_cast %116 : vector<8x8xf32> to vector<8x8x1xf32>
      %118 = vector.broadcast %117 : vector<8x8x1xf32> to vector<8x8x8xf32>
      %119 = arith.subf %115, %118 : vector<8x8x8xf32>
      %120 = math.exp %119 : vector<8x8x8xf32>
      %cst_49 = arith.constant dense<0.000000e+00> : vector<8x8xf32>
      %121 = vector.multi_reduction <add>, %120, %cst_49 [2] : vector<8x8x8xf32> to vector<8x8xf32>
      %122 = vector.shape_cast %121 : vector<8x8xf32> to vector<8x8x1xf32>
      %123 = tpu.reciprocal %122 {approx = true} : vector<8x8x1xf32> -> vector<8x8x1xf32>
      %124 = vector.broadcast %123 : vector<8x8x1xf32> to vector<8x8x8xf32>
      %125 = arith.mulf %120, %124 : vector<8x8x8xf32>
      %126 = arith.truncf %125 : vector<8x8x8xf32> to vector<8x8x8xbf16>
      "tpu.trace_start"() <{level = 10 : i32, message = "nqk,nkd->nqd"}> : () -> ()
      %cst_50 = arith.constant dense<0.000000e+00> : vector<8x8x8xf32>
      %127 = tpu.matmul %126, %107, %cst_50 {dimension_numbers = #tpu.dot_dimension_numbers<[2], [1], [1], [2], [0, 0, 0, 1, 1, 2], [0], [0]>} : vector<8x8x8xbf16>, vector<8x8x8xbf16>, vector<8x8x8xf32> -> vector<8x8x8xf32>
      "tpu.trace_stop"() : () -> ()
      %128 = vector.shape_cast %127 : vector<8x8x8xf32> to vector<64x8xf32>
      %129 = vector.extract_strided_slice %76 {offsets = [0, 0, 16], sizes = [8, 8, 8], strides = [1, 1, 1]} : vector<8x8x32xbf16> to vector<8x8x8xbf16>
      %130 = vector.extract_strided_slice %78 {offsets = [0, 0, 16], sizes = [8, 8, 8], strides = [1, 1, 1]} : vector<8x8x32xbf16> to vector<8x8x8xbf16>
      %131 = vector.extract_strided_slice %80 {offsets = [0, 0, 16], sizes = [8, 8, 8], strides = [1, 1, 1]} : vector<8x8x32xbf16> to vector<8x8x8xbf16>
      "tpu.trace_start"() <{level = 10 : i32, message = "nqd,nkd->nqk"}> : () -> ()
      %cst_51 = arith.constant dense<0.000000e+00> : vector<8x8x8xf32>
      %132 = tpu.matmul %129, %130, %cst_51 {dimension_numbers = #tpu.dot_dimension_numbers<[2], [2], [1], [1], [0, 0, 0, 1, 1, 1], [0], [0]>} : vector<8x8x8xbf16>, vector<8x8x8xbf16>, vector<8x8x8xf32> -> vector<8x8x8xf32>
      "tpu.trace_stop"() : () -> ()
      %133 = vector.extract_strided_slice %17 {offsets = [2, 0, 0], sizes = [1, 8, 8], strides = [1, 1, 1]} : vector<4x8x8xf32> to vector<1x8x8xf32>
      %134 = vector.shape_cast %133 : vector<1x8x8xf32> to vector<8x8xf32>
      %135 = vector.shape_cast %134 : vector<8x8xf32> to vector<1x8x8xf32>
      %136 = vector.broadcast %135 : vector<1x8x8xf32> to vector<8x8x8xf32>
      %137 = arith.addf %132, %136 : vector<8x8x8xf32>
      %138 = vector.broadcast %16 : vector<8x1x8xf32> to vector<8x8x8xf32>
      %139 = arith.addf %137, %138 : vector<8x8x8xf32>
      %cst_52 = arith.constant dense<0xFF800000> : vector<8x8xf32>
      %140 = vector.multi_reduction <maximumf>, %139, %cst_52 [2] : vector<8x8x8xf32> to vector<8x8xf32>
      %141 = vector.shape_cast %140 : vector<8x8xf32> to vector<8x8x1xf32>
      %142 = vector.broadcast %141 : vector<8x8x1xf32> to vector<8x8x8xf32>
      %143 = arith.subf %139, %142 : vector<8x8x8xf32>
      %144 = math.exp %143 : vector<8x8x8xf32>
      %cst_53 = arith.constant dense<0.000000e+00> : vector<8x8xf32>
      %145 = vector.multi_reduction <add>, %144, %cst_53 [2] : vector<8x8x8xf32> to vector<8x8xf32>
      %146 = vector.shape_cast %145 : vector<8x8xf32> to vector<8x8x1xf32>
      %147 = tpu.reciprocal %146 {approx = true} : vector<8x8x1xf32> -> vector<8x8x1xf32>
      %148 = vector.broadcast %147 : vector<8x8x1xf32> to vector<8x8x8xf32>
      %149 = arith.mulf %144, %148 : vector<8x8x8xf32>
      %150 = arith.truncf %149 : vector<8x8x8xf32> to vector<8x8x8xbf16>
      "tpu.trace_start"() <{level = 10 : i32, message = "nqk,nkd->nqd"}> : () -> ()
      %cst_54 = arith.constant dense<0.000000e+00> : vector<8x8x8xf32>
      %151 = tpu.matmul %150, %131, %cst_54 {dimension_numbers = #tpu.dot_dimension_numbers<[2], [1], [1], [2], [0, 0, 0, 1, 1, 2], [0], [0]>} : vector<8x8x8xbf16>, vector<8x8x8xbf16>, vector<8x8x8xf32> -> vector<8x8x8xf32>
      "tpu.trace_stop"() : () -> ()
      %152 = vector.shape_cast %151 : vector<8x8x8xf32> to vector<64x8xf32>
      %153 = vector.extract_strided_slice %76 {offsets = [0, 0, 24], sizes = [8, 8, 8], strides = [1, 1, 1]} : vector<8x8x32xbf16> to vector<8x8x8xbf16>
      %154 = vector.extract_strided_slice %78 {offsets = [0, 0, 24], sizes = [8, 8, 8], strides = [1, 1, 1]} : vector<8x8x32xbf16> to vector<8x8x8xbf16>
      %155 = vector.extract_strided_slice %80 {offsets = [0, 0, 24], sizes = [8, 8, 8], strides = [1, 1, 1]} : vector<8x8x32xbf16> to vector<8x8x8xbf16>
      "tpu.trace_start"() <{level = 10 : i32, message = "nqd,nkd->nqk"}> : () -> ()
      %cst_55 = arith.constant dense<0.000000e+00> : vector<8x8x8xf32>
      %156 = tpu.matmul %153, %154, %cst_55 {dimension_numbers = #tpu.dot_dimension_numbers<[2], [2], [1], [1], [0, 0, 0, 1, 1, 1], [0], [0]>} : vector<8x8x8xbf16>, vector<8x8x8xbf16>, vector<8x8x8xf32> -> vector<8x8x8xf32>
      "tpu.trace_stop"() : () -> ()
      %157 = vector.extract_strided_slice %17 {offsets = [3, 0, 0], sizes = [1, 8, 8], strides = [1, 1, 1]} : vector<4x8x8xf32> to vector<1x8x8xf32>
      %158 = vector.shape_cast %157 : vector<1x8x8xf32> to vector<8x8xf32>
      %159 = vector.shape_cast %158 : vector<8x8xf32> to vector<1x8x8xf32>
      %160 = vector.broadcast %159 : vector<1x8x8xf32> to vector<8x8x8xf32>
      %161 = arith.addf %156, %160 : vector<8x8x8xf32>
      %162 = vector.broadcast %16 : vector<8x1x8xf32> to vector<8x8x8xf32>
      %163 = arith.addf %161, %162 : vector<8x8x8xf32>
      %cst_56 = arith.constant dense<0xFF800000> : vector<8x8xf32>
      %164 = vector.multi_reduction <maximumf>, %163, %cst_56 [2] : vector<8x8x8xf32> to vector<8x8xf32>
      %165 = vector.shape_cast %164 : vector<8x8xf32> to vector<8x8x1xf32>
      %166 = vector.broadcast %165 : vector<8x8x1xf32> to vector<8x8x8xf32>
      %167 = arith.subf %163, %166 : vector<8x8x8xf32>
      %168 = math.exp %167 : vector<8x8x8xf32>
      %cst_57 = arith.constant dense<0.000000e+00> : vector<8x8xf32>
      %169 = vector.multi_reduction <add>, %168, %cst_57 [2] : vector<8x8x8xf32> to vector<8x8xf32>
      %170 = vector.shape_cast %169 : vector<8x8xf32> to vector<8x8x1xf32>
      %171 = tpu.reciprocal %170 {approx = true} : vector<8x8x1xf32> -> vector<8x8x1xf32>
      %172 = vector.broadcast %171 : vector<8x8x1xf32> to vector<8x8x8xf32>
      %173 = arith.mulf %168, %172 : vector<8x8x8xf32>
      %174 = arith.truncf %173 : vector<8x8x8xf32> to vector<8x8x8xbf16>
      "tpu.trace_start"() <{level = 10 : i32, message = "nqk,nkd->nqd"}> : () -> ()
      %cst_58 = arith.constant dense<0.000000e+00> : vector<8x8x8xf32>
      %175 = tpu.matmul %174, %155, %cst_58 {dimension_numbers = #tpu.dot_dimension_numbers<[2], [1], [1], [2], [0, 0, 0, 1, 1, 2], [0], [0]>} : vector<8x8x8xbf16>, vector<8x8x8xbf16>, vector<8x8x8xf32> -> vector<8x8x8xf32>
      "tpu.trace_stop"() : () -> ()
      %176 = vector.shape_cast %175 : vector<8x8x8xf32> to vector<64x8xf32>
      %177 = tpu.concatenate %104, %128, %152, %176 in 1 : vector<64x8xf32>, vector<64x8xf32>, vector<64x8xf32>, vector<64x8xf32> -> vector<64x32xf32>
      %178 = arith.truncf %177 : vector<64x32xf32> to vector<64x32xbf16>
      %cst_59 = arith.constant dense<0.000000e+00> : vector<64x32xf32>
      %179 = tpu.matmul %178, %49, %cst_59 {dimension_numbers = #tpu.dot_dimension_numbers<[1], [0], [0], [1], [0, 0, 1, 1], [], []>} : vector<64x32xbf16>, vector<32x32xbf16>, vector<64x32xf32> -> vector<64x32xf32>
      %180 = arith.addf %arg15, %179 : vector<64x32xf32>
      %181 = arith.mulf %180, %180 : vector<64x32xf32>
      %cst_60 = arith.constant dense<0.000000e+00> : vector<64xf32>
      %182 = vector.multi_reduction <add>, %181, %cst_60 [1] : vector<64x32xf32> to vector<64xf32>
      %183 = vector.shape_cast %182 : vector<64xf32> to vector<64x1xf32>
      %cst_61 = arith.constant 3.200000e+01 : f32
      %184 = vector.broadcast %cst_61 : f32 to vector<64x1xf32>
      %185 = arith.divf %183, %184 : vector<64x1xf32>
      %cst_62 = arith.constant 9.99999997E-7 : f32
      %186 = vector.broadcast %cst_62 : f32 to vector<64x1xf32>
      %187 = arith.addf %185, %186 : vector<64x1xf32>
      %188 = math.rsqrt %187 : vector<64x1xf32>
      %189 = vector.broadcast %188 : vector<64x1xf32> to vector<64x32xf32>
      %190 = arith.mulf %180, %189 : vector<64x32xf32>
      %191 = vector.broadcast %59 : vector<1x32xf32> to vector<64x32xf32>
      %192 = arith.mulf %190, %191 : vector<64x32xf32>
      %193 = arith.truncf %192 : vector<64x32xf32> to vector<64x32xbf16>
      %cst_63 = arith.constant dense<0.000000e+00> : vector<64x64xf32>
      %194 = tpu.matmul %193, %52, %cst_63 {dimension_numbers = #tpu.dot_dimension_numbers<[1], [0], [0], [1], [0, 0, 1, 1], [], []>} : vector<64x32xbf16>, vector<32x64xbf16>, vector<64x64xf32> -> vector<64x64xf32>
      %cst_64 = arith.constant 0.000000e+00 : f32
      %195 = vector.broadcast %cst_64 : f32 to vector<64x64xf32>
      %196 = arith.maximumf %194, %195 : vector<64x64xf32>
      %197 = arith.truncf %196 : vector<64x64xf32> to vector<64x64xbf16>
      %cst_65 = arith.constant dense<0.000000e+00> : vector<64x32xf32>
      %198 = tpu.matmul %197, %55, %cst_65 {dimension_numbers = #tpu.dot_dimension_numbers<[1], [0], [0], [1], [0, 0, 1, 1], [], []>} : vector<64x64xbf16>, vector<64x32xbf16>, vector<64x32xf32> -> vector<64x32xf32>
      %199 = arith.addf %180, %198 : vector<64x32xf32>
      scf.yield %199 : vector<64x32xf32>
    }
    %c2_i32_10 = arith.constant 2 : i32
    %c0_11 = arith.constant 0 : index
    %c0_12 = arith.constant 0 : index
    %20 = vector.load %arg11[%c0_11, %c0_12] : memref<1x32xf32, #tpu.memory_space<vmem>>, vector<1x32xf32>
    %21 = arith.mulf %19, %19 : vector<64x32xf32>
    %cst_13 = arith.constant dense<0.000000e+00> : vector<64xf32>
    %22 = vector.multi_reduction <add>, %21, %cst_13 [1] : vector<64x32xf32> to vector<64xf32>
    %23 = vector.shape_cast %22 : vector<64xf32> to vector<64x1xf32>
    %cst_14 = arith.constant 3.200000e+01 : f32
    %24 = vector.broadcast %cst_14 : f32 to vector<64x1xf32>
    %25 = arith.divf %23, %24 : vector<64x1xf32>
    %cst_15 = arith.constant 9.99999997E-7 : f32
    %26 = vector.broadcast %cst_15 : f32 to vector<64x1xf32>
    %27 = arith.addf %25, %26 : vector<64x1xf32>
    %28 = math.rsqrt %27 : vector<64x1xf32>
    %29 = vector.broadcast %28 : vector<64x1xf32> to vector<64x32xf32>
    %30 = arith.mulf %19, %29 : vector<64x32xf32>
    %31 = vector.broadcast %20 : vector<1x32xf32> to vector<64x32xf32>
    %32 = arith.mulf %30, %31 : vector<64x32xf32>
    %c0_16 = arith.constant 0 : index
    %c0_17 = arith.constant 0 : index
    %33 = vector.load %arg13[%c0_16, %c0_17] : memref<64x32xf32, #tpu.memory_space<vmem>>, vector<64x32xf32>
    tpu.vector_store %arg13[%c0_16, %c0_17], %32 {strides = array<i32>} : memref<64x32xf32, #tpu.memory_space<vmem>>, vector<64x32xf32>,
    %c0_18 = arith.constant 0 : index
    %c0_19 = arith.constant 0 : index
    %34 = tpu.strided_load %arg13[%c0_18, %c0_19] {strides = array<i32: 8, 1>} : memref<64x32xf32, #tpu.memory_space<vmem>>, vector<8x32xf32>
    %c1 = arith.constant 1 : index
    %c0_20 = arith.constant 0 : index
    %35 = tpu.strided_load %arg13[%c1, %c0_20] {strides = array<i32: 8, 1>} : memref<64x32xf32, #tpu.memory_space<vmem>>, vector<8x32xf32>
    %c2 = arith.constant 2 : index
    %c0_21 = arith.constant 0 : index
    %36 = tpu.strided_load %arg13[%c2, %c0_21] {strides = array<i32: 8, 1>} : memref<64x32xf32, #tpu.memory_space<vmem>>, vector<8x32xf32>
    %c3 = arith.constant 3 : index
    %c0_22 = arith.constant 0 : index
    %37 = tpu.strided_load %arg13[%c3, %c0_22] {strides = array<i32: 8, 1>} : memref<64x32xf32, #tpu.memory_space<vmem>>, vector<8x32xf32>
    %c4 = arith.constant 4 : index
    %c0_23 = arith.constant 0 : index
    %38 = tpu.strided_load %arg13[%c4, %c0_23] {strides = array<i32: 8, 1>} : memref<64x32xf32, #tpu.memory_space<vmem>>, vector<8x32xf32>
    %c5 = arith.constant 5 : index
    %c0_24 = arith.constant 0 : index
    %39 = tpu.strided_load %arg13[%c5, %c0_24] {strides = array<i32: 8, 1>} : memref<64x32xf32, #tpu.memory_space<vmem>>, vector<8x32xf32>
    %c6 = arith.constant 6 : index
    %c0_25 = arith.constant 0 : index
    %40 = tpu.strided_load %arg13[%c6, %c0_25] {strides = array<i32: 8, 1>} : memref<64x32xf32, #tpu.memory_space<vmem>>, vector<8x32xf32>
    %c7 = arith.constant 7 : index
    %c0_26 = arith.constant 0 : index
    %41 = tpu.strided_load %arg13[%c7, %c0_26] {strides = array<i32: 8, 1>} : memref<64x32xf32, #tpu.memory_space<vmem>>, vector<8x32xf32>
    %42 = tpu.concatenate %34, %35, %36, %37, %38, %39, %40, %41 in 1 : vector<8x32xf32>, vector<8x32xf32>, vector<8x32xf32>, vector<8x32xf32>, vector<8x32xf32>, vector<8x32xf32>, vector<8x32xf32>, vector<8x32xf32> -> vector<8x256xf32>
    %c0_27 = arith.constant 0 : index
    %c0_28 = arith.constant 0 : index
    %43 = vector.load %arg12[%c0_27, %c0_28] : memref<8x256xf32, #tpu.memory_space<vmem>>, vector<8x256xf32>
    tpu.vector_store %arg12[%c0_27, %c0_28], %42 {strides = array<i32>} : memref<8x256xf32, #tpu.memory_space<vmem>>, vector<8x256xf32>,
    return
  }
  func.func @transform_0(%arg0: i32) -> (i32, i32) {
    %c0_i32 = arith.constant 0 : i32
    %c0_i32_0 = arith.constant 0 : i32
    return %arg0, %c0_i32 : i32, i32
  }
  func.func @transform_1(%arg0: i32) -> (i32, i32) {
    %c0_i32 = arith.constant 0 : i32
    %c0_i32_0 = arith.constant 0 : i32
    return %arg0, %c0_i32 : i32, i32
  }
  func.func @transform_2(%arg0: i32) -> (i32, i32, i32) {
    %c0_i32 = arith.constant 0 : i32
    %c0_i32_0 = arith.constant 0 : i32
    %c0_i32_1 = arith.constant 0 : i32
    %c0_i32_2 = arith.constant 0 : i32
    return %c0_i32, %c0_i32_0, %c0_i32_1 : i32, i32, i32
  }
  func.func @transform_3(%arg0: i32) -> (i32, i32) {
    %c0_i32 = arith.constant 0 : i32
    %c0_i32_0 = arith.constant 0 : i32
    %c0_i32_1 = arith.constant 0 : i32
    return %c0_i32, %c0_i32_0 : i32, i32
  }
  func.func @transform_4(%arg0: i32) -> (i32, i32, i32) {
    %c0_i32 = arith.constant 0 : i32
    %c0_i32_0 = arith.constant 0 : i32
    %c0_i32_1 = arith.constant 0 : i32
    %c0_i32_2 = arith.constant 0 : i32
    return %c0_i32, %c0_i32_0, %c0_i32_1 : i32, i32, i32
  }
  func.func @transform_5(%arg0: i32) -> (i32, i32, i32) {
    %c0_i32 = arith.constant 0 : i32
    %c0_i32_0 = arith.constant 0 : i32
    %c0_i32_1 = arith.constant 0 : i32
    %c0_i32_2 = arith.constant 0 : i32
    return %c0_i32, %c0_i32_0, %c0_i32_1 : i32, i32, i32
  }
  func.func @transform_6(%arg0: i32) -> (i32, i32, i32) {
    %c0_i32 = arith.constant 0 : i32
    %c0_i32_0 = arith.constant 0 : i32
    %c0_i32_1 = arith.constant 0 : i32
    %c0_i32_2 = arith.constant 0 : i32
    return %c0_i32, %c0_i32_0, %c0_i32_1 : i32, i32, i32
  }
  func.func @transform_7(%arg0: i32) -> (i32, i32, i32) {
    %c0_i32 = arith.constant 0 : i32
    %c0_i32_0 = arith.constant 0 : i32
    %c0_i32_1 = arith.constant 0 : i32
    %c0_i32_2 = arith.constant 0 : i32
    return %c0_i32, %c0_i32_0, %c0_i32_1 : i32, i32, i32
  }
  func.func @transform_8(%arg0: i32) -> (i32, i32) {
    %c0_i32 = arith.constant 0 : i32
    %c0_i32_0 = arith.constant 0 : i32
    %c0_i32_1 = arith.constant 0 : i32
    return %c0_i32, %c0_i32_0 : i32, i32
  }
  func.func @transform_9(%arg0: i32) -> (i32, i32) {
    %c0_i32 = arith.constant 0 : i32
    %c0_i32_0 = arith.constant 0 : i32
    %c0_i32_1 = arith.constant 0 : i32
    return %c0_i32, %c0_i32_0 : i32, i32
  }
  func.func @transform_10(%arg0: i32) -> (i32, i32) {
    %c0_i32 = arith.constant 0 : i32
    %c0_i32_0 = arith.constant 0 : i32
    %c0_i32_1 = arith.constant 0 : i32
    return %c0_i32, %c0_i32_0 : i32, i32
  }
  func.func @transform_11(%arg0: i32) -> (i32, i32) {
    %c0_i32 = arith.constant 0 : i32
    %c0_i32_0 = arith.constant 0 : i32
    return %arg0, %c0_i32 : i32, i32
  }
}

</mosaic_0001>

<llo_original>
// kernel: fid_encoder_forward.1
$region0: #{fid_encoder_forward.1}
  #allocation0 [shape = 'u32[]', space=smem, size = 0x4, offset = 0x4, fixed_abs, tag = 'smem constant byte address 0x4 - core index']
  #allocation1 [shape = 'u32[144,128]{1,0:T(1,128)}', space=vmem, size = 0x12000, scoped, tag = 'internal scratch']
  #allocation2 [shape = 'f32[64,32]{1,0:T(8,128)}', space=vmem, size = 0x8000, scoped, tag = 'scratch operand']
  %s0 = inlined_call_operand.vmem [shape: s32[8,8], index: 0, kind: input, shape index: {}]
  %s1 = inlined_call_operand.vmem [shape: f32[8,8], index: 1, kind: input, shape index: {}]
  %s2 = inlined_call_operand.vmem [shape: f32[4,8,8], index: 2, kind: input, shape index: {}]
  %s3 = inlined_call_operand.vmem [shape: bf16[64,32], index: 3, kind: input, shape index: {}]
  %s4 = inlined_call_operand.vmem [shape: bf16[2,32,96], index: 4, kind: input, shape index: {}]
  %s5 = inlined_call_operand.vmem [shape: bf16[2,32,32], index: 5, kind: input, shape index: {}]
  %s6 = inlined_call_operand.vmem [shape: bf16[2,32,64], index: 6, kind: input, shape index: {}]
  %s7 = inlined_call_operand.vmem [shape: bf16[2,64,32], index: 7, kind: input, shape index: {}]
  %s8 = inlined_call_operand.vmem [shape: f32[2,32], index: 8, kind: input, shape index: {}]
  %s9 = inlined_call_operand.vmem [shape: f32[2,32], index: 9, kind: input, shape index: {}]
  %s10 = inlined_call_operand.vmem [shape: f32[1,32], index: 10, kind: input, shape index: {}]
  %s11 = inlined_call_operand.vmem [shape: f32[8,256], index: 11, kind: output, shape index: {}]
  %s12 = sld [smem:[#allocation0]]
  $region61: #{fid_encoder_forward.1} parent=0
    _
  %s14 = ssub.s32 1, %s12
  %s15 = scalar_select 0, %s14, %s12
  // Predicated region
  $region2: #{fid_encoder_forward.1} parent=0 // pred_check
    _
  $region3: #{fid_encoder_forward.1} parent=0 // pred_check_branch
    %17 = sbr.rel (0) target = $region5
  $region4: #{fid_encoder_forward.1} parent=0 // pred_region
    _
  $region5: #{fid_encoder_forward.1} parent=0 // pred_fallthru
    _
  // Predicated region
  $region6: #{fid_encoder_forward.1} parent=0 // pred_check
    _
  $region7: #{fid_encoder_forward.1} parent=0 // pred_check_branch
    %19 = sbr.rel (0) target = $region9
  $region8: #{fid_encoder_forward.1} parent=0 // pred_region
    _
  $region9: #{fid_encoder_forward.1} parent=0 // pred_fallthru
    _
  // Predicated region
  $region10: #{fid_encoder_forward.1} parent=0 // pred_check
    _
  $region11: #{fid_encoder_forward.1} parent=0 // pred_check_branch
    %21 = sbr.rel (0) target = $region13
  $region12: #{fid_encoder_forward.1} parent=0 // pred_region
    _
  $region13: #{fid_encoder_forward.1} parent=0 // pred_fallthru
    _
  // Predicated region
  $region14: #{fid_encoder_forward.1} parent=0 // pred_check
    _
  $region15: #{fid_encoder_forward.1} parent=0 // pred_check_branch
    %23 = sbr.rel (0) target = $region17
  $region16: #{fid_encoder_forward.1} parent=0 // pred_region
    _
  $region17: #{fid_encoder_forward.1} parent=0 // pred_fallthru
    _
  // Predicated region
  $region18: #{fid_encoder_forward.1} parent=0 // pred_check
    _
  $region19: #{fid_encoder_forward.1} parent=0 // pred_check_branch
    %25 = sbr.rel (0) target = $region21
  $region20: #{fid_encoder_forward.1} parent=0 // pred_region
    _
  $region21: #{fid_encoder_forward.1} parent=0 // pred_fallthru
    _
  // Predicated region
  $region22: #{fid_encoder_forward.1} parent=0 // pred_check
    _
  $region23: #{fid_encoder_forward.1} parent=0 // pred_check_branch
    %27 = sbr.rel (0) target = $region25
  $region24: #{fid_encoder_forward.1} parent=0 // pred_region
    _
  $region25: #{fid_encoder_forward.1} parent=0 // pred_fallthru
    _
  // Predicated region
  $region26: #{fid_encoder_forward.1} parent=0 // pred_check
    _
  $region27: #{fid_encoder_forward.1} parent=0 // pred_check_branch
    %29 = sbr.rel (0) target = $region29
  $region28: #{fid_encoder_forward.1} parent=0 // pred_region
    _
  $region29: #{fid_encoder_forward.1} parent=0 // pred_fallthru
    _
  // Predicated region
  $region30: #{fid_encoder_forward.1} parent=0 // pred_check
    _
  $region31: #{fid_encoder_forward.1} parent=0 // pred_check_branch
    %31 = sbr.rel (0) target = $region33
  $region32: #{fid_encoder_forward.1} parent=0 // pred_region
    _
  $region33: #{fid_encoder_forward.1} parent=0 // pred_fallthru
    _
  // Predicated region
  $region34: #{fid_encoder_forward.1} parent=0 // pred_check
    _
  $region35: #{fid_encoder_forward.1} parent=0 // pred_check_branch
    %33 = sbr.rel (0) target = $region37
  $region36: #{fid_encoder_forward.1} parent=0 // pred_region
    _
  $region37: #{fid_encoder_forward.1} parent=0 // pred_fallthru
    _
  // Predicated region
  $region38: #{fid_encoder_forward.1} parent=0 // pred_check
    _
  $region39: #{fid_encoder_forward.1} parent=0 // pred_check_branch
    %35 = sbr.rel (0) target = $region41
  $region40: #{fid_encoder_forward.1} parent=0 // pred_region
    _
  $region41: #{fid_encoder_forward.1} parent=0 // pred_fallthru
    _
  // Predicated region
  $region42: #{fid_encoder_forward.1} parent=0 // pred_check
    _
  $region43: #{fid_encoder_forward.1} parent=0 // pred_check_branch
    %37 = sbr.rel (0) target = $region45
  $region44: #{fid_encoder_forward.1} parent=0 // pred_region
    _
  $region45: #{fid_encoder_forward.1} parent=0 // pred_fallthru
    _
  %v39 = vld [vmem:[%s0] sm:$0xff]
  %v40 = vlaneseq
  %v41 = vand.u32 %v40, 127
  %v42 = vlaneseq
  %v43 = vshrl.u32 %v42, 7
  %v44 = vsub.s32 0, %v43
  %v45 = vrot.slane %v39, %v44
  %47 = vbcast.lane.b32.xlu0 %v45, 256
  %v48 = vpop.permute.xlu0 %47
  %v49 = vlaneseq
  %v50 = vshrl.u32 %v49, 7
  %v51 = vsub.s32 1, %v50
  %v52 = vrot.slane %v39, %v51
  %54 = vbcast.lane.b32.xlu0 %v52, 256
  %v55 = vpop.permute.xlu0 %54
  %v56 = vlaneseq
  %v57 = vshrl.u32 %v56, 7
  %v58 = vsub.s32 2, %v57
  %v59 = vrot.slane %v39, %v58
  %61 = vbcast.lane.b32.xlu0 %v59, 256
  %v62 = vpop.permute.xlu0 %61
  %v63 = vlaneseq
  %v64 = vshrl.u32 %v63, 7
  %v65 = vsub.s32 3, %v64
  %v66 = vrot.slane %v39, %v65
  %68 = vbcast.lane.b32.xlu0 %v66, 256
  %v69 = vpop.permute.xlu0 %68
  %v70 = vlaneseq
  %v71 = vshrl.u32 %v70, 7
  %v72 = vsub.s32 4, %v71
  %v73 = vrot.slane %v39, %v72
  %75 = vbcast.lane.b32.xlu0 %v73, 256
  %v76 = vpop.permute.xlu0 %75
  %v77 = vlaneseq
  %v78 = vshrl.u32 %v77, 7
  %v79 = vsub.s32 5, %v78
  %v80 = vrot.slane %v39, %v79
  %82 = vbcast.lane.b32.xlu0 %v80, 256
  %v83 = vpop.permute.xlu0 %82
  %v84 = vlaneseq
  %v85 = vshrl.u32 %v84, 7
  %v86 = vsub.s32 6, %v85
  %v87 = vrot.slane %v39, %v86
  %89 = vbcast.lane.b32.xlu0 %v87, 256
  %v90 = vpop.permute.xlu0 %89
  %v91 = vlaneseq
  %v92 = vshrl.u32 %v91, 7
  %v93 = vsub.s32 7, %v92
  %v94 = vrot.slane %v39, %v93
  %96 = vbcast.lane.b32.xlu0 %v94, 256
  %v97 = vpop.permute.xlu0 %96
  %vm98 = vcmp.eq.s32.totalorder %v41, %v48
  %vm99 = vcmp.eq.s32.totalorder %v41, %v55
  %vm100 = vcmp.eq.s32.totalorder %v41, %v62
  %vm101 = vcmp.eq.s32.totalorder %v41, %v69
  %vm102 = vcmp.eq.s32.totalorder %v41, %v76
  %vm103 = vcmp.eq.s32.totalorder %v41, %v83
  %vm104 = vcmp.eq.s32.totalorder %v41, %v90
  %vm105 = vcmp.eq.s32.totalorder %v41, %v97
  %v106 = vsel %vm98, 1, 0
  %v107 = vsel %vm99, 1, 0
  %v108 = vsel %vm100, 1, 0
  %v109 = vsel %vm101, 1, 0
  %v110 = vsel %vm102, 1, 0
  %v111 = vsel %vm103, 1, 0
  %v112 = vsel %vm104, 1, 0
  %v113 = vsel %vm105, 1, 0
  %v114 = vcvt.s32.f32 %v106
  %v115 = vcvt.s32.f32 %v107
  %v116 = vcvt.s32.f32 %v108
  %v117 = vcvt.s32.f32 %v109
  %v118 = vcvt.s32.f32 %v110
  %v119 = vcvt.s32.f32 %v111
  %v120 = vcvt.s32.f32 %v112
  %v121 = vcvt.s32.f32 %v113
  %v122 = vpack.c.bf16 %v114, %v114
  %v123 = vpack.c.bf16 %v115, %v115
  %v124 = vpack.c.bf16 %v116, %v116
  %v125 = vpack.c.bf16 %v117, %v117
  %v126 = vpack.c.bf16 %v118, %v118
  %v127 = vpack.c.bf16 %v119, %v119
  %v128 = vpack.c.bf16 %v120, %v120
  %v129 = vpack.c.bf16 %v121, %v121
  %v130 = vld [vmem:[%s3] sm:$0xf]
  %v131 = vld [vmem:[%s3 + $0x4] sm:$0xf]
  %v132 = vld [vmem:[%s3 + $0x8] sm:$0xf]
  %v133 = vld [vmem:[%s3 + $0xc] sm:$0xf]
  %v134 = vld [vmem:[%s3 + $0x10] sm:$0xf]
  %v135 = vld [vmem:[%s3 + $0x14] sm:$0xf]
  %v136 = vld [vmem:[%s3 + $0x18] sm:$0xf]
  %v137 = vld [vmem:[%s3 + $0x1c] sm:$0xf]
  %v146 = vunpack.c.l.b16 %v122
  %v147 = vunpack.c.l.b16 %v123
  %v148 = vunpack.c.l.b16 %v124
  %v149 = vunpack.c.l.b16 %v125
  %v150 = vunpack.c.l.b16 %v126
  %v151 = vunpack.c.l.b16 %v127
  %v152 = vunpack.c.l.b16 %v128
  %v153 = vunpack.c.l.b16 %v129
  %v154 = vpack.c.b16 %v147, %v146
  %v155 = vpack.c.b16 %v149, %v148
  %v156 = vpack.c.b16 %v151, %v150
  %v157 = vpack.c.b16 %v153, %v152
  %v166 = vunpack.c.l.b16 %v130
  %v167 = vunpack.c.l.b16 %v131
  %v168 = vunpack.c.l.b16 %v132
  %v169 = vunpack.c.l.b16 %v133
  %v170 = vunpack.c.l.b16 %v134
  %v171 = vunpack.c.l.b16 %v135
  %v172 = vunpack.c.l.b16 %v136
  %v173 = vunpack.c.l.b16 %v137
  %v174 = vpack.c.b16 %v167, %v166
  %v175 = vpack.c.b16 %v169, %v168
  %v176 = vpack.c.b16 %v171, %v170
  %v177 = vpack.c.b16 %v173, %v172
  %vm182 = vcmask 523264
  %v184 = vsel %vm182, %v154, 0
  %v187 = vsel %vm182, %v155, 0
  %v190 = vsel %vm182, %v156, 0
  %v193 = vsel %vm182, %v157, 0
  %195 = vmatprep.subr.bf16.mxu0 0
  %196 = vmatpush1.bf16.msra.mxu0 %v174
  %197 = vmatprep.subr.bf16.mxu0 0
  %198 = vmatpush1.bf16.msra.mxu0 %v175
  %199 = vmatprep.subr.bf16.mxu0 0
  %200 = vmatpush1.bf16.msra.mxu0 %v176
  %201 = vmatprep.subr.bf16.mxu0 0
  %202 = vmatpush1.bf16.msra.mxu0 %v177
  %203 = vmatprep.subr.bf16.mxu0 0
  %204 = vmatpush1.bf16.msra.mxu0 0
  %205 = vmatprep.subr.bf16.mxu0 0
  %206 = vmatpush1.bf16.msra.mxu0 0
  %207 = vmatprep.subr.bf16.mxu0 0
  %208 = vmatpush1.bf16.msra.mxu0 0
  %209 = vmatprep.subr.bf16.mxu0 0
  %210 = vmatpush1.bf16.msra.mxu0 0
  %211 = vmatprep.subr.bf16.mxu0 0
  %212 = vmatpush1.bf16.msra.mxu0 0
  %213 = vmatprep.subr.bf16.mxu0 0
  %214 = vmatpush1.bf16.msra.mxu0 0
  %215 = vmatprep.subr.bf16.mxu0 0
  %216 = vmatpush1.bf16.msra.mxu0 0
  %217 = vmatprep.subr.bf16.mxu0 0
  %218 = vmatpush1.bf16.msra.mxu0 0
  %219 = vmatprep.subr.bf16.mxu0 0
  %220 = vmatpush1.bf16.msra.mxu0 0
  %221 = vmatprep.subr.bf16.mxu0 0
  %222 = vmatpush1.bf16.msra.mxu0 0
  %223 = vmatprep.subr.bf16.mxu0 0
  %224 = vmatpush1.bf16.msra.mxu0 0
  %225 = vmatprep.subr.bf16.mxu0 0
  %226 = vmatpush1.bf16.msra.mxu0 0
  %227 = vmatprep.mubr.bf16.mxu0 0
  %228 = vmatmul.mubr.bf16.gmra.mrb[0].mxu0 %v184
  %v229 = vpop.f32.mrb[0].mxu0
  %v230 = vadd.f32 0.0, %v229
  %v231 = vpop.f32.mrb[0].mxu0
  %v232 = vpop.f32.mrb[0].mxu0
  %v233 = vadd.f32 0.0, %v232
  %v234 = vpop.f32.mrb[0].mxu0
  %235 = vmatprep.mubr.bf16.mxu0 0
  %236 = vmatmul.mubr.bf16.gmra.mrb[0].mxu0 %v187
  %v237 = vpop.f32.mrb[0].mxu0
  %v238 = vadd.f32 0.0, %v237
  %v239 = vpop.f32.mrb[0].mxu0
  %v240 = vpop.f32.mrb[0].mxu0
  %v241 = vadd.f32 0.0, %v240
  %v242 = vpop.f32.mrb[0].mxu0
  %243 = vmatprep.mubr.bf16.mxu0 0
  %244 = vmatmul.mubr.bf16.gmra.mrb[0].mxu0 %v190
  %v245 = vpop.f32.mrb[0].mxu0
  %v246 = vadd.f32 0.0, %v245
  %v247 = vpop.f32.mrb[0].mxu0
  %v248 = vpop.f32.mrb[0].mxu0
  %v249 = vadd.f32 0.0, %v248
  %v250 = vpop.f32.mrb[0].mxu0
  %251 = vmatprep.mubr.bf16.mxu0 0
  %252 = vmatmul.mubr.bf16.gmra.mrb[0].mxu0 %v193
  %v253 = vpop.f32.mrb[0].mxu0
  %v254 = vadd.f32 0.0, %v253
  %v255 = vpop.f32.mrb[0].mxu0
  %v256 = vpop.f32.mrb[0].mxu0
  %v257 = vadd.f32 0.0, %v256
  %v258 = vpop.f32.mrb[0].mxu0
  %259 = vdwg.mxu0
  %v260 = vld [vmem:[%s1] sm:$0xff]
  %v261 = vsub.f32 1.0, %v260
  %v262 = vmul.f32 %v261, -1e+09
  %v264 = vcombine.high %v262, %v262
  %v266 = vunpack.c.l.s4 1966171168
  %v267 = vunpack.c.0.s8 %v266
  %v268 = vlaneseq
  %v269 = vshrl.u32 %v268, 7
  %v270 = vsub.s32 %v267, %v269
  %v271 = vrot.slane %v262, %v270
  %v273 = vunpack.c.l.s4 1966171168
  %v274 = vunpack.c.0.s8 %v273
  %v275 = vlaneseq
  %v276 = vshrl.u32 %v275, 7
  %v277 = vsub.s32 %v274, %v276
  %v278 = vrot.slane %v264, %v277
  %v279 = vcombine.high %v271, %v271
  %v280 = vcombine.high %v278, %v278
  %v282 = vunpack.c.l.s4 1966171168
  %v283 = vunpack.c.0.s8 %v282
  %v284 = vlaneseq
  %v285 = vshrl.u32 %v284, 7
  %v286 = vsub.s32 %v283, %v285
  %v287 = vrot.slane %v271, %v286
  %v289 = vunpack.c.l.s4 1966171168
  %v290 = vunpack.c.0.s8 %v289
  %v291 = vlaneseq
  %v292 = vshrl.u32 %v291, 7
  %v293 = vsub.s32 %v290, %v292
  %v294 = vrot.slane %v278, %v293
  %v296 = vunpack.c.l.s4 1966171168
  %v297 = vunpack.c.0.s8 %v296
  %v298 = vlaneseq
  %v299 = vshrl.u32 %v298, 7
  %v300 = vsub.s32 %v297, %v299
  %v301 = vrot.slane %v279, %v300
  %v303 = vunpack.c.l.s4 1966171168
  %v304 = vunpack.c.0.s8 %v303
  %v305 = vlaneseq
  %v306 = vshrl.u32 %v305, 7
  %v307 = vsub.s32 %v304, %v306
  %v308 = vrot.slane %v280, %v307
  %v309 = vcombine.high %v287, %v287
  %v310 = vcombine.high %v294, %v294
  %v311 = vcombine.high %v301, %v301
  %v312 = vcombine.high %v308, %v308
  %v313 = vld [vmem:[%s2] sm:$0xff]
  %v314 = vld [vmem:[%s2 + $0x8] sm:$0xff]
  %v315 = vld [vmem:[%s2 + $0x10] sm:$0xff]
  %v316 = vld [vmem:[%s2 + $0x18] sm:$0xff]
  loop: start=0, step=1, limit=2
  $region46: #{fid_encoder_forward.1} parent=0 // loop_pre_header
    _
  $region47: #{fid_encoder_forward.1} parent=0 // loop_header
    %s318 = sphi 0, %s322
    %p319 = scmp.ge.s32.totalorder %s318, 2
    %v323 = vphi %v230, %v4643
    %v324 = vphi %v233, %v4644
    %v325 = vphi %v238, %v4645
    %v326 = vphi %v241, %v4646
    %v327 = vphi %v246, %v4647
    %v328 = vphi %v249, %v4648
    %v329 = vphi %v254, %v4649
    %v330 = vphi %v257, %v4650
  $region48: #{fid_encoder_forward.1} parent=0 // loop_header_branch
    %321 = sbr.rel (%p319) target = $region52
  $region49: #{fid_encoder_forward.1} parent=0 // loop_body
    %s331 = smul.u32 %s318, 4
    %s332 = smul.addr %s331, 4
    %s333 = scalar_lea.vmem %s4, %s332
    %v334 = vld [vmem:[%s333] sm:$0xf]
    %v335 = vld [vmem:[%s333 + $0x4] sm:$0xf]
    %v336 = vld [vmem:[%s333 + $0x8] sm:$0xf]
    %v337 = vld [vmem:[%s333 + $0xc] sm:$0xf]
    %s338 = smul.addr %s331, 4
    %s339 = scalar_lea.vmem %s5, %s338
    %v340 = vld [vmem:[%s339] sm:$0xf]
    %v341 = vld [vmem:[%s339 + $0x4] sm:$0xf]
    %v342 = vld [vmem:[%s339 + $0x8] sm:$0xf]
    %v343 = vld [vmem:[%s339 + $0xc] sm:$0xf]
    %s344 = smul.addr %s331, 4
    %s345 = scalar_lea.vmem %s6, %s344
    %v346 = vld [vmem:[%s345] sm:$0xf]
    %v347 = vld [vmem:[%s345 + $0x4] sm:$0xf]
    %v348 = vld [vmem:[%s345 + $0x8] sm:$0xf]
    %v349 = vld [vmem:[%s345 + $0xc] sm:$0xf]
    %s350 = smul.u32 %s318, 8
    %s351 = smul.addr %s350, 4
    %s352 = scalar_lea.vmem %s7, %s351
    %v353 = vld [vmem:[%s352] sm:$0xf]
    %v354 = vld [vmem:[%s352 + $0x4] sm:$0xf]
    %v355 = vld [vmem:[%s352 + $0x8] sm:$0xf]
    %v356 = vld [vmem:[%s352 + $0xc] sm:$0xf]
    %v357 = vld [vmem:[%s352 + $0x10] sm:$0xf]
    %v358 = vld [vmem:[%s352 + $0x14] sm:$0xf]
    %v359 = vld [vmem:[%s352 + $0x18] sm:$0xf]
    %v360 = vld [vmem:[%s352 + $0x1c] sm:$0xf]
    %s361 = scalar_lea.vmem %s8, %s318
    %v362 = vld [vmem:[%s361] sm:$0x1]
    %s363 = scalar_lea.vmem %s9, %s318
    %v364 = vld [vmem:[%s363] sm:$0x1]
    %v365 = vmul.f32 %v323, %v323
    %v366 = vmul.f32 %v324, %v324
    %v367 = vmul.f32 %v325, %v325
    %v368 = vmul.f32 %v326, %v326
    %v369 = vmul.f32 %v327, %v327
    %v370 = vmul.f32 %v328, %v328
    %v371 = vmul.f32 %v329, %v329
    %v372 = vmul.f32 %v330, %v330
    %vm373 = vcmask 261120
    %v374 = vsel %vm373, %v365, 0.0
    %375 = vadd.xlane.f32.xlu0 %v374
    %v376 = vpop.xlane.xlu0 %375
    %v377 = vsel %vm373, %v366, 0.0
    %378 = vadd.xlane.f32.xlu0 %v377
    %v379 = vpop.xlane.xlu0 %378
    %v380 = vsel %vm373, %v367, 0.0
    %381 = vadd.xlane.f32.xlu0 %v380
    %v382 = vpop.xlane.xlu0 %381
    %v383 = vsel %vm373, %v368, 0.0
    %384 = vadd.xlane.f32.xlu0 %v383
    %v385 = vpop.xlane.xlu0 %384
    %v386 = vsel %vm373, %v369, 0.0
    %387 = vadd.xlane.f32.xlu0 %v386
    %v388 = vpop.xlane.xlu0 %387
    %v389 = vsel %vm373, %v370, 0.0
    %390 = vadd.xlane.f32.xlu0 %v389
    %v391 = vpop.xlane.xlu0 %390
    %v392 = vsel %vm373, %v371, 0.0
    %393 = vadd.xlane.f32.xlu0 %v392
    %v394 = vpop.xlane.xlu0 %393
    %v395 = vsel %vm373, %v372, 0.0
    %396 = vadd.xlane.f32.xlu0 %v395
    %v397 = vpop.xlane.xlu0 %396
    %v398 = vrcp.pop 32.0
    %v399 = vmul.f32 %v376, %v398
    %v400 = vmul.f32 %v379, %v398
    %v401 = vmul.f32 %v382, %v398
    %v402 = vmul.f32 %v385, %v398
    %v403 = vmul.f32 %v388, %v398
    %v404 = vmul.f32 %v391, %v398
    %v405 = vmul.f32 %v394, %v398
    %v406 = vmul.f32 %v397, %v398
    %v407 = vadd.f32 %v399, 1e-06
    %v408 = vadd.f32 %v400, 1e-06
    %v409 = vadd.f32 %v401, 1e-06
    %v410 = vadd.f32 %v402, 1e-06
    %v411 = vadd.f32 %v403, 1e-06
    %v412 = vadd.f32 %v404, 1e-06
    %v413 = vadd.f32 %v405, 1e-06
    %v414 = vadd.f32 %v406, 1e-06
    %v415 = vrsqrt.pop %v407
    %v416 = vrsqrt.pop %v408
    %v417 = vrsqrt.pop %v409
    %v418 = vrsqrt.pop %v410
    %v419 = vrsqrt.pop %v411
    %v420 = vrsqrt.pop %v412
    %v421 = vrsqrt.pop %v413
    %v422 = vrsqrt.pop %v414
    %v423 = vmul.f32 %v323, %v415
    %v424 = vmul.f32 %v324, %v416
    %v425 = vmul.f32 %v325, %v417
    %v426 = vmul.f32 %v326, %v418
    %v427 = vmul.f32 %v327, %v419
    %v428 = vmul.f32 %v328, %v420
    %v429 = vmul.f32 %v329, %v421
    %v430 = vmul.f32 %v330, %v422
    %v431 = vlaneseq
    %v432 = vshrl.u32 %v431, 7
    %v433 = vsub.s32 0, %v432
    %v434 = vrot.slane %v362, %v433
    %v435 = vmul.f32 %v423, %v434
    %v436 = vmul.f32 %v424, %v434
    %v437 = vmul.f32 %v425, %v434
    %v438 = vmul.f32 %v426, %v434
    %v439 = vmul.f32 %v427, %v434
    %v440 = vmul.f32 %v428, %v434
    %v441 = vmul.f32 %v429, %v434
    %v442 = vmul.f32 %v430, %v434
    %v443 = vpack.c.bf16 %v436, %v435
    %v444 = vpack.c.bf16 %v438, %v437
    %v445 = vpack.c.bf16 %v440, %v439
    %v446 = vpack.c.bf16 %v442, %v441
    %v451 = vunpack.c.l.b16 %v334
    %v452 = vunpack.c.l.b16 %v335
    %v453 = vunpack.c.l.b16 %v336
    %v454 = vunpack.c.l.b16 %v337
    %v455 = vpack.c.b16 %v452, %v451
    %v456 = vpack.c.b16 %v454, %v453
    %v460 = vsel %vm373, %v443, 0
    %v463 = vsel %vm373, %v444, 0
    %v466 = vsel %vm373, %v445, 0
    %v469 = vsel %vm373, %v446, 0
    %471 = vmatprep.subr.bf16.mxu0 0
    %472 = vmatpush1.bf16.msra.mxu0 %v455
    %473 = vmatprep.subr.bf16.mxu0 0
    %474 = vmatpush1.bf16.msra.mxu0 %v456
    %475 = vmatprep.subr.bf16.mxu0 0
    %476 = vmatpush1.bf16.msra.mxu0 0
    %477 = vmatprep.subr.bf16.mxu0 0
    %478 = vmatpush1.bf16.msra.mxu0 0
    %479 = vmatprep.subr.bf16.mxu0 0
    %480 = vmatpush1.bf16.msra.mxu0 0
    %481 = vmatprep.subr.bf16.mxu0 0
    %482 = vmatpush1.bf16.msra.mxu0 0
    %483 = vmatprep.subr.bf16.mxu0 0
    %484 = vmatpush1.bf16.msra.mxu0 0
    %485 = vmatprep.subr.bf16.mxu0 0
    %486 = vmatpush1.bf16.msra.mxu0 0
    %487 = vmatprep.subr.bf16.mxu0 0
    %488 = vmatpush1.bf16.msra.mxu0 0
    %489 = vmatprep.subr.bf16.mxu0 0
    %490 = vmatpush1.bf16.msra.mxu0 0
    %491 = vmatprep.subr.bf16.mxu0 0
    %492 = vmatpush1.bf16.msra.mxu0 0
    %493 = vmatprep.subr.bf16.mxu0 0
    %494 = vmatpush1.bf16.msra.mxu0 0
    %495 = vmatprep.subr.bf16.mxu0 0
    %496 = vmatpush1.bf16.msra.mxu0 0
    %497 = vmatprep.subr.bf16.mxu0 0
    %498 = vmatpush1.bf16.msra.mxu0 0
    %499 = vmatprep.subr.bf16.mxu0 0
    %500 = vmatpush1.bf16.msra.mxu0 0
    %501 = vmatprep.subr.bf16.mxu0 0
    %502 = vmatpush1.bf16.msra.mxu0 0
    %503 = vmatprep.mubr.bf16.mxu0 0
    %504 = vmatmul.mubr.bf16.gmra.mrb[0].mxu0 %v460
    %v505 = vpop.f32.mrb[0].mxu0
    %v506 = vadd.f32 0.0, %v505
    %v507 = vpop.f32.mrb[0].mxu0
    %v508 = vpop.f32.mrb[0].mxu0
    %v509 = vadd.f32 0.0, %v508
    %v510 = vpop.f32.mrb[0].mxu0
    %511 = vmatprep.mubr.bf16.mxu0 0
    %512 = vmatmul.mubr.bf16.gmra.mrb[0].mxu0 %v463
    %v513 = vpop.f32.mrb[0].mxu0
    %v514 = vadd.f32 0.0, %v513
    %v515 = vpop.f32.mrb[0].mxu0
    %v516 = vpop.f32.mrb[0].mxu0
    %v517 = vadd.f32 0.0, %v516
    %v518 = vpop.f32.mrb[0].mxu0
    %519 = vmatprep.mubr.bf16.mxu0 0
    %520 = vmatmul.mubr.bf16.gmra.mrb[0].mxu0 %v466
    %v521 = vpop.f32.mrb[0].mxu0
    %v522 = vadd.f32 0.0, %v521
    %v523 = vpop.f32.mrb[0].mxu0
    %v524 = vpop.f32.mrb[0].mxu0
    %v525 = vadd.f32 0.0, %v524
    %v526 = vpop.f32.mrb[0].mxu0
    %527 = vmatprep.mubr.bf16.mxu0 0
    %528 = vmatmul.mubr.bf16.gmra.mrb[0].mxu0 %v469
    %v529 = vpop.f32.mrb[0].mxu0
    %v530 = vadd.f32 0.0, %v529
    %v531 = vpop.f32.mrb[0].mxu0
    %v532 = vpop.f32.mrb[0].mxu0
    %v533 = vadd.f32 0.0, %v532
    %v534 = vpop.f32.mrb[0].mxu0
    %535 = vdwg.mxu0
    %v536 = vpack.c.bf16 %v509, %v506
    %v537 = vpack.c.bf16 %v517, %v514
    %v538 = vpack.c.bf16 %v525, %v522
    %v539 = vpack.c.bf16 %v533, %v530
    %v544 = vunpack.c.l.b16 %v536
    %v545 = vunpack.c.h.b16 %v536
    %v546 = vunpack.c.l.b16 %v537
    %v547 = vunpack.c.h.b16 %v537
    %v548 = vunpack.c.l.b16 %v538
    %v549 = vunpack.c.h.b16 %v538
    %v550 = vunpack.c.l.b16 %v539
    %v551 = vunpack.c.h.b16 %v539
    %v552 = vpack.c.b16 %v544, %v544
    %v553 = vpack.c.b16 %v545, %v545
    %v554 = vpack.c.b16 %v546, %v546
    %v555 = vpack.c.b16 %v547, %v547
    %v556 = vpack.c.b16 %v548, %v548
    %v557 = vpack.c.b16 %v549, %v549
    %v558 = vpack.c.b16 %v550, %v550
    %v559 = vpack.c.b16 %v551, %v551
    %560 = vrot.lane.b32.xlu0 %v552, 96
    %v561 = vpop.permute.xlu0 %560
    %vm562 = vcmask 64512
    %v564 = vsel %vm562, %v552, 0
    %v567 = vsel %vm562, %v561, 0
    %569 = vmatprep.subr.bf16.mxu0 0
    %570 = vmatpush1.bf16.xpose.msra.mxu0 %v567
    %571 = vmatprep.subr.bf16.mxu0 0
    %572 = vmatpush1.bf16.xpose.msra.mxu0 0
    %573 = vmatprep.subr.bf16.mxu0 0
    %574 = vmatpush1.bf16.xpose.msra.mxu0 0
    %575 = vmatprep.subr.bf16.mxu0 0
    %576 = vmatpush1.bf16.xpose.msra.mxu0 0
    %577 = vmatprep.subr.bf16.mxu0 0
    %578 = vmatpush1.bf16.xpose.msra.mxu0 0
    %579 = vmatprep.subr.bf16.mxu0 0
    %580 = vmatpush1.bf16.xpose.msra.mxu0 0
    %581 = vmatprep.subr.bf16.mxu0 0
    %582 = vmatpush1.bf16.xpose.msra.mxu0 0
    %583 = vmatprep.subr.bf16.mxu0 0
    %584 = vmatpush1.bf16.xpose.msra.mxu0 0
    %585 = vmatprep.subr.bf16.mxu0 0
    %586 = vmatpush1.bf16.xpose.msra.mxu0 0
    %587 = vmatprep.subr.bf16.mxu0 0
    %588 = vmatpush1.bf16.xpose.msra.mxu0 0
    %589 = vmatprep.subr.bf16.mxu0 0
    %590 = vmatpush1.bf16.xpose.msra.mxu0 0
    %591 = vmatprep.subr.bf16.mxu0 0
    %592 = vmatpush1.bf16.xpose.msra.mxu0 0
    %593 = vmatprep.subr.bf16.mxu0 0
    %594 = vmatpush1.bf16.xpose.msra.mxu0 0
    %595 = vmatprep.subr.bf16.mxu0 0
    %596 = vmatpush1.bf16.xpose.msra.mxu0 0
    %597 = vmatprep.subr.bf16.mxu0 0
    %598 = vmatpush1.bf16.xpose.msra.mxu0 0
    %599 = vmatprep.subr.bf16.mxu0 0
    %600 = vmatpush1.bf16.xpose.msra.mxu0 0
    %601 = vmatprep.mubr.bf16.mxu0 0
    %602 = vmatmul.mubr.bf16.gmra.mrb[0].mxu0 %v564
    %v603 = vpop.f32.mrb[0].mxu0
    %v604 = vadd.f32 %v313, %v603
    %v605 = vpop.f32.mrb[0].mxu0
    %v606 = vpop.f32.mrb[0].mxu0
    %v607 = vpop.f32.mrb[0].mxu0
    %608 = vdwg.mxu0
    %609 = vrot.lane.b32.xlu0 %v553, 96
    %v610 = vpop.permute.xlu0 %609
    %v612 = vsel %vm562, %v553, 0
    %v615 = vsel %vm562, %v610, 0
    %617 = vmatprep.subr.bf16.mxu0 0
    %618 = vmatpush1.bf16.xpose.msra.mxu0 %v615
    %619 = vmatprep.subr.bf16.mxu0 0
    %620 = vmatpush1.bf16.xpose.msra.mxu0 0
    %621 = vmatprep.subr.bf16.mxu0 0
    %622 = vmatpush1.bf16.xpose.msra.mxu0 0
    %623 = vmatprep.subr.bf16.mxu0 0
    %624 = vmatpush1.bf16.xpose.msra.mxu0 0
    %625 = vmatprep.subr.bf16.mxu0 0
    %626 = vmatpush1.bf16.xpose.msra.mxu0 0
    %627 = vmatprep.subr.bf16.mxu0 0
    %628 = vmatpush1.bf16.xpose.msra.mxu0 0
    %629 = vmatprep.subr.bf16.mxu0 0
    %630 = vmatpush1.bf16.xpose.msra.mxu0 0
    %631 = vmatprep.subr.bf16.mxu0 0
    %632 = vmatpush1.bf16.xpose.msra.mxu0 0
    %633 = vmatprep.subr.bf16.mxu0 0
    %634 = vmatpush1.bf16.xpose.msra.mxu0 0
    %635 = vmatprep.subr.bf16.mxu0 0
    %636 = vmatpush1.bf16.xpose.msra.mxu0 0
    %637 = vmatprep.subr.bf16.mxu0 0
    %638 = vmatpush1.bf16.xpose.msra.mxu0 0
    %639 = vmatprep.subr.bf16.mxu0 0
    %640 = vmatpush1.bf16.xpose.msra.mxu0 0
    %641 = vmatprep.subr.bf16.mxu0 0
    %642 = vmatpush1.bf16.xpose.msra.mxu0 0
    %643 = vmatprep.subr.bf16.mxu0 0
    %644 = vmatpush1.bf16.xpose.msra.mxu0 0
    %645 = vmatprep.subr.bf16.mxu0 0
    %646 = vmatpush1.bf16.xpose.msra.mxu0 0
    %647 = vmatprep.subr.bf16.mxu0 0
    %648 = vmatpush1.bf16.xpose.msra.mxu0 0
    %649 = vmatprep.mubr.bf16.mxu0 0
    %650 = vmatmul.mubr.bf16.gmra.mrb[0].mxu0 %v612
    %v651 = vpop.f32.mrb[0].mxu0
    %v652 = vadd.f32 %v313, %v651
    %v653 = vpop.f32.mrb[0].mxu0
    %v654 = vpop.f32.mrb[0].mxu0
    %v655 = vpop.f32.mrb[0].mxu0
    %656 = vdwg.mxu0
    %657 = vrot.lane.b32.xlu0 %v554, 96
    %v658 = vpop.permute.xlu0 %657
    %v660 = vsel %vm562, %v554, 0
    %v663 = vsel %vm562, %v658, 0
    %665 = vmatprep.subr.bf16.mxu0 0
    %666 = vmatpush1.bf16.xpose.msra.mxu0 %v663
    %667 = vmatprep.subr.bf16.mxu0 0
    %668 = vmatpush1.bf16.xpose.msra.mxu0 0
    %669 = vmatprep.subr.bf16.mxu0 0
    %670 = vmatpush1.bf16.xpose.msra.mxu0 0
    %671 = vmatprep.subr.bf16.mxu0 0
    %672 = vmatpush1.bf16.xpose.msra.mxu0 0
    %673 = vmatprep.subr.bf16.mxu0 0
    %674 = vmatpush1.bf16.xpose.msra.mxu0 0
    %675 = vmatprep.subr.bf16.mxu0 0
    %676 = vmatpush1.bf16.xpose.msra.mxu0 0
    %677 = vmatprep.subr.bf16.mxu0 0
    %678 = vmatpush1.bf16.xpose.msra.mxu0 0
    %679 = vmatprep.subr.bf16.mxu0 0
    %680 = vmatpush1.bf16.xpose.msra.mxu0 0
    %681 = vmatprep.subr.bf16.mxu0 0
    %682 = vmatpush1.bf16.xpose.msra.mxu0 0
    %683 = vmatprep.subr.bf16.mxu0 0
    %684 = vmatpush1.bf16.xpose.msra.mxu0 0
    %685 = vmatprep.subr.bf16.mxu0 0
    %686 = vmatpush1.bf16.xpose.msra.mxu0 0
    %687 = vmatprep.subr.bf16.mxu0 0
    %688 = vmatpush1.bf16.xpose.msra.mxu0 0
    %689 = vmatprep.subr.bf16.mxu0 0
    %690 = vmatpush1.bf16.xpose.msra.mxu0 0
    %691 = vmatprep.subr.bf16.mxu0 0
    %692 = vmatpush1.bf16.xpose.msra.mxu0 0
    %693 = vmatprep.subr.bf16.mxu0 0
    %694 = vmatpush1.bf16.xpose.msra.mxu0 0
    %695 = vmatprep.subr.bf16.mxu0 0
    %696 = vmatpush1.bf16.xpose.msra.mxu0 0
    %697 = vmatprep.mubr.bf16.mxu0 0
    %698 = vmatmul.mubr.bf16.gmra.mrb[0].mxu0 %v660
    %v699 = vpop.f32.mrb[0].mxu0
    %v700 = vadd.f32 %v313, %v699
    %v701 = vpop.f32.mrb[0].mxu0
    %v702 = vpop.f32.mrb[0].mxu0
    %v703 = vpop.f32.mrb[0].mxu0
    %704 = vdwg.mxu0
    %705 = vrot.lane.b32.xlu0 %v555, 96
    %v706 = vpop.permute.xlu0 %705
    %v708 = vsel %vm562, %v555, 0
    %v711 = vsel %vm562, %v706, 0
    %713 = vmatprep.subr.bf16.mxu0 0
    %714 = vmatpush1.bf16.xpose.msra.mxu0 %v711
    %715 = vmatprep.subr.bf16.mxu0 0
    %716 = vmatpush1.bf16.xpose.msra.mxu0 0
    %717 = vmatprep.subr.bf16.mxu0 0
    %718 = vmatpush1.bf16.xpose.msra.mxu0 0
    %719 = vmatprep.subr.bf16.mxu0 0
    %720 = vmatpush1.bf16.xpose.msra.mxu0 0
    %721 = vmatprep.subr.bf16.mxu0 0
    %722 = vmatpush1.bf16.xpose.msra.mxu0 0
    %723 = vmatprep.subr.bf16.mxu0 0
    %724 = vmatpush1.bf16.xpose.msra.mxu0 0
    %725 = vmatprep.subr.bf16.mxu0 0
    %726 = vmatpush1.bf16.xpose.msra.mxu0 0
    %727 = vmatprep.subr.bf16.mxu0 0
    %728 = vmatpush1.bf16.xpose.msra.mxu0 0
    %729 = vmatprep.subr.bf16.mxu0 0
    %730 = vmatpush1.bf16.xpose.msra.mxu0 0
    %731 = vmatprep.subr.bf16.mxu0 0
    %732 = vmatpush1.bf16.xpose.msra.mxu0 0
    %733 = vmatprep.subr.bf16.mxu0 0
    %734 = vmatpush1.bf16.xpose.msra.mxu0 0
    %735 = vmatprep.subr.bf16.mxu0 0
    %736 = vmatpush1.bf16.xpose.msra.mxu0 0
    %737 = vmatprep.subr.bf16.mxu0 0
    %738 = vmatpush1.bf16.xpose.msra.mxu0 0
    %739 = vmatprep.subr.bf16.mxu0 0
    %740 = vmatpush1.bf16.xpose.msra.mxu0 0
    %741 = vmatprep.subr.bf16.mxu0 0
    %742 = vmatpush1.bf16.xpose.msra.mxu0 0
    %743 = vmatprep.subr.bf16.mxu0 0
    %744 = vmatpush1.bf16.xpose.msra.mxu0 0
    %745 = vmatprep.mubr.bf16.mxu0 0
    %746 = vmatmul.mubr.bf16.gmra.mrb[0].mxu0 %v708
    %v747 = vpop.f32.mrb[0].mxu0
    %v748 = vadd.f32 %v313, %v747
    %v749 = vpop.f32.mrb[0].mxu0
    %v750 = vpop.f32.mrb[0].mxu0
    %v751 = vpop.f32.mrb[0].mxu0
    %752 = vdwg.mxu0
    %753 = vrot.lane.b32.xlu0 %v556, 96
    %v754 = vpop.permute.xlu0 %753
    %v756 = vsel %vm562, %v556, 0
    %v759 = vsel %vm562, %v754, 0
    %761 = vmatprep.subr.bf16.mxu0 0
    %762 = vmatpush1.bf16.xpose.msra.mxu0 %v759
    %763 = vmatprep.subr.bf16.mxu0 0
    %764 = vmatpush1.bf16.xpose.msra.mxu0 0
    %765 = vmatprep.subr.bf16.mxu0 0
    %766 = vmatpush1.bf16.xpose.msra.mxu0 0
    %767 = vmatprep.subr.bf16.mxu0 0
    %768 = vmatpush1.bf16.xpose.msra.mxu0 0
    %769 = vmatprep.subr.bf16.mxu0 0
    %770 = vmatpush1.bf16.xpose.msra.mxu0 0
    %771 = vmatprep.subr.bf16.mxu0 0
    %772 = vmatpush1.bf16.xpose.msra.mxu0 0
    %773 = vmatprep.subr.bf16.mxu0 0
    %774 = vmatpush1.bf16.xpose.msra.mxu0 0
    %775 = vmatprep.subr.bf16.mxu0 0
    %776 = vmatpush1.bf16.xpose.msra.mxu0 0
    %777 = vmatprep.subr.bf16.mxu0 0
    %778 = vmatpush1.bf16.xpose.msra.mxu0 0
    %779 = vmatprep.subr.bf16.mxu0 0
    %780 = vmatpush1.bf16.xpose.msra.mxu0 0
    %781 = vmatprep.subr.bf16.mxu0 0
    %782 = vmatpush1.bf16.xpose.msra.mxu0 0
    %783 = vmatprep.subr.bf16.mxu0 0
    %784 = vmatpush1.bf16.xpose.msra.mxu0 0
    %785 = vmatprep.subr.bf16.mxu0 0
    %786 = vmatpush1.bf16.xpose.msra.mxu0 0
    %787 = vmatprep.subr.bf16.mxu0 0
    %788 = vmatpush1.bf16.xpose.msra.mxu0 0
    %789 = vmatprep.subr.bf16.mxu0 0
    %790 = vmatpush1.bf16.xpose.msra.mxu0 0
    %791 = vmatprep.subr.bf16.mxu0 0
    %792 = vmatpush1.bf16.xpose.msra.mxu0 0
    %793 = vmatprep.mubr.bf16.mxu0 0
    %794 = vmatmul.mubr.bf16.gmra.mrb[0].mxu0 %v756
    %v795 = vpop.f32.mrb[0].mxu0
    %v796 = vadd.f32 %v313, %v795
    %v797 = vpop.f32.mrb[0].mxu0
    %v798 = vpop.f32.mrb[0].mxu0
    %v799 = vpop.f32.mrb[0].mxu0
    %800 = vdwg.mxu0
    %801 = vrot.lane.b32.xlu0 %v557, 96
    %v802 = vpop.permute.xlu0 %801
    %v804 = vsel %vm562, %v557, 0
    %v807 = vsel %vm562, %v802, 0
    %809 = vmatprep.subr.bf16.mxu0 0
    %810 = vmatpush1.bf16.xpose.msra.mxu0 %v807
    %811 = vmatprep.subr.bf16.mxu0 0
    %812 = vmatpush1.bf16.xpose.msra.mxu0 0
    %813 = vmatprep.subr.bf16.mxu0 0
    %814 = vmatpush1.bf16.xpose.msra.mxu0 0
    %815 = vmatprep.subr.bf16.mxu0 0
    %816 = vmatpush1.bf16.xpose.msra.mxu0 0
    %817 = vmatprep.subr.bf16.mxu0 0
    %818 = vmatpush1.bf16.xpose.msra.mxu0 0
    %819 = vmatprep.subr.bf16.mxu0 0
    %820 = vmatpush1.bf16.xpose.msra.mxu0 0
    %821 = vmatprep.subr.bf16.mxu0 0
    %822 = vmatpush1.bf16.xpose.msra.mxu0 0
    %823 = vmatprep.subr.bf16.mxu0 0
    %824 = vmatpush1.bf16.xpose.msra.mxu0 0
    %825 = vmatprep.subr.bf16.mxu0 0
    %826 = vmatpush1.bf16.xpose.msra.mxu0 0
    %827 = vmatprep.subr.bf16.mxu0 0
    %828 = vmatpush1.bf16.xpose.msra.mxu0 0
    %829 = vmatprep.subr.bf16.mxu0 0
    %830 = vmatpush1.bf16.xpose.msra.mxu0 0
    %831 = vmatprep.subr.bf16.mxu0 0
    %832 = vmatpush1.bf16.xpose.msra.mxu0 0
    %833 = vmatprep.subr.bf16.mxu0 0
    %834 = vmatpush1.bf16.xpose.msra.mxu0 0
    %835 = vmatprep.subr.bf16.mxu0 0
    %836 = vmatpush1.bf16.xpose.msra.mxu0 0
    %837 = vmatprep.subr.bf16.mxu0 0
    %838 = vmatpush1.bf16.xpose.msra.mxu0 0
    %839 = vmatprep.subr.bf16.mxu0 0
    %840 = vmatpush1.bf16.xpose.msra.mxu0 0
    %841 = vmatprep.mubr.bf16.mxu0 0
    %842 = vmatmul.mubr.bf16.gmra.mrb[0].mxu0 %v804
    %v843 = vpop.f32.mrb[0].mxu0
    %v844 = vadd.f32 %v313, %v843
    %v845 = vpop.f32.mrb[0].mxu0
    %v846 = vpop.f32.mrb[0].mxu0
    %v847 = vpop.f32.mrb[0].mxu0
    %848 = vdwg.mxu0
    %849 = vrot.lane.b32.xlu0 %v558, 96
    %v850 = vpop.permute.xlu0 %849
    %v852 = vsel %vm562, %v558, 0
    %v855 = vsel %vm562, %v850, 0
    %857 = vmatprep.subr.bf16.mxu0 0
    %858 = vmatpush1.bf16.xpose.msra.mxu0 %v855
    %859 = vmatprep.subr.bf16.mxu0 0
    %860 = vmatpush1.bf16.xpose.msra.mxu0 0
    %861 = vmatprep.subr.bf16.mxu0 0
    %862 = vmatpush1.bf16.xpose.msra.mxu0 0
    %863 = vmatprep.subr.bf16.mxu0 0
    %864 = vmatpush1.bf16.xpose.msra.mxu0 0
    %865 = vmatprep.subr.bf16.mxu0 0
    %866 = vmatpush1.bf16.xpose.msra.mxu0 0
    %867 = vmatprep.subr.bf16.mxu0 0
    %868 = vmatpush1.bf16.xpose.msra.mxu0 0
    %869 = vmatprep.subr.bf16.mxu0 0
    %870 = vmatpush1.bf16.xpose.msra.mxu0 0
    %871 = vmatprep.subr.bf16.mxu0 0
    %872 = vmatpush1.bf16.xpose.msra.mxu0 0
    %873 = vmatprep.subr.bf16.mxu0 0
    %874 = vmatpush1.bf16.xpose.msra.mxu0 0
    %875 = vmatprep.subr.bf16.mxu0 0
    %876 = vmatpush1.bf16.xpose.msra.mxu0 0
    %877 = vmatprep.subr.bf16.mxu0 0
    %878 = vmatpush1.bf16.xpose.msra.mxu0 0
    %879 = vmatprep.subr.bf16.mxu0 0
    %880 = vmatpush1.bf16.xpose.msra.mxu0 0
    %881 = vmatprep.subr.bf16.mxu0 0
    %882 = vmatpush1.bf16.xpose.msra.mxu0 0
    %883 = vmatprep.subr.bf16.mxu0 0
    %884 = vmatpush1.bf16.xpose.msra.mxu0 0
    %885 = vmatprep.subr.bf16.mxu0 0
    %886 = vmatpush1.bf16.xpose.msra.mxu0 0
    %887 = vmatprep.subr.bf16.mxu0 0
    %888 = vmatpush1.bf16.xpose.msra.mxu0 0
    %889 = vmatprep.mubr.bf16.mxu0 0
    %890 = vmatmul.mubr.bf16.gmra.mrb[0].mxu0 %v852
    %v891 = vpop.f32.mrb[0].mxu0
    %v892 = vadd.f32 %v313, %v891
    %v893 = vpop.f32.mrb[0].mxu0
    %v894 = vpop.f32.mrb[0].mxu0
    %v895 = vpop.f32.mrb[0].mxu0
    %896 = vdwg.mxu0
    %897 = vrot.lane.b32.xlu0 %v559, 96
    %v898 = vpop.permute.xlu0 %897
    %v900 = vsel %vm562, %v559, 0
    %v903 = vsel %vm562, %v898, 0
    %905 = vmatprep.subr.bf16.mxu0 0
    %906 = vmatpush1.bf16.xpose.msra.mxu0 %v903
    %907 = vmatprep.subr.bf16.mxu0 0
    %908 = vmatpush1.bf16.xpose.msra.mxu0 0
    %909 = vmatprep.subr.bf16.mxu0 0
    %910 = vmatpush1.bf16.xpose.msra.mxu0 0
    %911 = vmatprep.subr.bf16.mxu0 0
    %912 = vmatpush1.bf16.xpose.msra.mxu0 0
    %913 = vmatprep.subr.bf16.mxu0 0
    %914 = vmatpush1.bf16.xpose.msra.mxu0 0
    %915 = vmatprep.subr.bf16.mxu0 0
    %916 = vmatpush1.bf16.xpose.msra.mxu0 0
    %917 = vmatprep.subr.bf16.mxu0 0
    %918 = vmatpush1.bf16.xpose.msra.mxu0 0
    %919 = vmatprep.subr.bf16.mxu0 0
    %920 = vmatpush1.bf16.xpose.msra.mxu0 0
    %921 = vmatprep.subr.bf16.mxu0 0
    %922 = vmatpush1.bf16.xpose.msra.mxu0 0
    %923 = vmatprep.subr.bf16.mxu0 0
    %924 = vmatpush1.bf16.xpose.msra.mxu0 0
    %925 = vmatprep.subr.bf16.mxu0 0
    %926 = vmatpush1.bf16.xpose.msra.mxu0 0
    %927 = vmatprep.subr.bf16.mxu0 0
    %928 = vmatpush1.bf16.xpose.msra.mxu0 0
    %929 = vmatprep.subr.bf16.mxu0 0
    %930 = vmatpush1.bf16.xpose.msra.mxu0 0
    %931 = vmatprep.subr.bf16.mxu0 0
    %932 = vmatpush1.bf16.xpose.msra.mxu0 0
    %933 = vmatprep.subr.bf16.mxu0 0
    %934 = vmatpush1.bf16.xpose.msra.mxu0 0
    %935 = vmatprep.subr.bf16.mxu0 0
    %936 = vmatpush1.bf16.xpose.msra.mxu0 0
    %937 = vmatprep.mubr.bf16.mxu0 0
    %938 = vmatmul.mubr.bf16.gmra.mrb[0].mxu0 %v900
    %v939 = vpop.f32.mrb[0].mxu0
    %v940 = vadd.f32 %v313, %v939
    %v941 = vpop.f32.mrb[0].mxu0
    %v942 = vpop.f32.mrb[0].mxu0
    %v943 = vpop.f32.mrb[0].mxu0
    %944 = vdwg.mxu0
    %v945 = vlaneseq
    %v946 = vshrl.u32 %v945, 7
    %v947 = vsub.s32 0, %v946
    %v948 = vrot.slane %v287, %v947
    %v949 = vlaneseq
    %v950 = vshrl.u32 %v949, 7
    %v951 = vsub.s32 0, %v950
    %v952 = vrot.slane %v301, %v951
    %v953 = vlaneseq
    %v954 = vshrl.u32 %v953, 7
    %v955 = vsub.s32 0, %v954
    %v956 = vrot.slane %v309, %v955
    %v957 = vlaneseq
    %v958 = vshrl.u32 %v957, 7
    %v959 = vsub.s32 0, %v958
    %v960 = vrot.slane %v311, %v959
    %v961 = vlaneseq
    %v962 = vshrl.u32 %v961, 7
    %v963 = vsub.s32 0, %v962
    %v964 = vrot.slane %v294, %v963
    %v965 = vlaneseq
    %v966 = vshrl.u32 %v965, 7
    %v967 = vsub.s32 0, %v966
    %v968 = vrot.slane %v308, %v967
    %v969 = vlaneseq
    %v970 = vshrl.u32 %v969, 7
    %v971 = vsub.s32 0, %v970
    %v972 = vrot.slane %v310, %v971
    %v973 = vlaneseq
    %v974 = vshrl.u32 %v973, 7
    %v975 = vsub.s32 0, %v974
    %v976 = vrot.slane %v312, %v975
    %v985 = vadd.f32 %v604, %v948
    %v986 = vadd.f32 %v652, %v952
    %v987 = vadd.f32 %v700, %v956
    %v988 = vadd.f32 %v748, %v960
    %v989 = vadd.f32 %v796, %v964
    %v990 = vadd.f32 %v844, %v968
    %v991 = vadd.f32 %v892, %v972
    %v992 = vadd.f32 %v940, %v976
    %v993 = vsel %vm562, %v985, -inf
    %994 = vmax.xlane.f32.xlu0 %v993
    %v995 = vpop.xlane.xlu0 %994
    %v996 = vsel %vm562, %v986, -inf
    %997 = vmax.xlane.f32.xlu0 %v996
    %v998 = vpop.xlane.xlu0 %997
    %v999 = vsel %vm562, %v987, -inf
    %1000 = vmax.xlane.f32.xlu0 %v999
    %v1001 = vpop.xlane.xlu0 %1000
    %v1002 = vsel %vm562, %v988, -inf
    %1003 = vmax.xlane.f32.xlu0 %v1002
    %v1004 = vpop.xlane.xlu0 %1003
    %v1005 = vsel %vm562, %v989, -inf
    %1006 = vmax.xlane.f32.xlu0 %v1005
    %v1007 = vpop.xlane.xlu0 %1006
    %v1008 = vsel %vm562, %v990, -inf
    %1009 = vmax.xlane.f32.xlu0 %v1008
    %v1010 = vpop.xlane.xlu0 %1009
    %v1011 = vsel %vm562, %v991, -inf
    %1012 = vmax.xlane.f32.xlu0 %v1011
    %v1013 = vpop.xlane.xlu0 %1012
    %v1014 = vsel %vm562, %v992, -inf
    %1015 = vmax.xlane.f32.xlu0 %v1014
    %v1016 = vpop.xlane.xlu0 %1015
    %v1017 = vsub.f32 %v985, %v995
    %v1018 = vsub.f32 %v986, %v998
    %v1019 = vsub.f32 %v987, %v1001
    %v1020 = vsub.f32 %v988, %v1004
    %v1021 = vsub.f32 %v989, %v1007
    %v1022 = vsub.f32 %v990, %v1010
    %v1023 = vsub.f32 %v991, %v1013
    %v1024 = vsub.f32 %v992, %v1016
    %v1025 = vmul.f32 %v1017, 1.442695
    %v1026 = vpow.pop %v1025
    %v1027 = vmul.f32 %v1018, 1.442695
    %v1028 = vpow.pop %v1027
    %v1029 = vmul.f32 %v1019, 1.442695
    %v1030 = vpow.pop %v1029
    %v1031 = vmul.f32 %v1020, 1.442695
    %v1032 = vpow.pop %v1031
    %v1033 = vmul.f32 %v1021, 1.442695
    %v1034 = vpow.pop %v1033
    %v1035 = vmul.f32 %v1022, 1.442695
    %v1036 = vpow.pop %v1035
    %v1037 = vmul.f32 %v1023, 1.442695
    %v1038 = vpow.pop %v1037
    %v1039 = vmul.f32 %v1024, 1.442695
    %v1040 = vpow.pop %v1039
    %v1041 = vsel %vm562, %v1026, 0.0
    %1042 = vadd.xlane.f32.xlu0 %v1041
    %v1043 = vpop.xlane.xlu0 %1042
    %v1044 = vsel %vm562, %v1028, 0.0
    %1045 = vadd.xlane.f32.xlu0 %v1044
    %v1046 = vpop.xlane.xlu0 %1045
    %v1047 = vsel %vm562, %v1030, 0.0
    %1048 = vadd.xlane.f32.xlu0 %v1047
    %v1049 = vpop.xlane.xlu0 %1048
    %v1050 = vsel %vm562, %v1032, 0.0
    %1051 = vadd.xlane.f32.xlu0 %v1050
    %v1052 = vpop.xlane.xlu0 %1051
    %v1053 = vsel %vm562, %v1034, 0.0
    %1054 = vadd.xlane.f32.xlu0 %v1053
    %v1055 = vpop.xlane.xlu0 %1054
    %v1056 = vsel %vm562, %v1036, 0.0
    %1057 = vadd.xlane.f32.xlu0 %v1056
    %v1058 = vpop.xlane.xlu0 %1057
    %v1059 = vsel %vm562, %v1038, 0.0
    %1060 = vadd.xlane.f32.xlu0 %v1059
    %v1061 = vpop.xlane.xlu0 %1060
    %v1062 = vsel %vm562, %v1040, 0.0
    %1063 = vadd.xlane.f32.xlu0 %v1062
    %v1064 = vpop.xlane.xlu0 %1063
    %v1065 = vrcp.pop %v1043
    %v1066 = vrcp.pop %v1046
    %v1067 = vrcp.pop %v1049
    %v1068 = vrcp.pop %v1052
    %v1069 = vrcp.pop %v1055
    %v1070 = vrcp.pop %v1058
    %v1071 = vrcp.pop %v1061
    %v1072 = vrcp.pop %v1064
    %v1073 = vmul.f32 %v1026, %v1065
    %v1074 = vmul.f32 %v1028, %v1066
    %v1075 = vmul.f32 %v1030, %v1067
    %v1076 = vmul.f32 %v1032, %v1068
    %v1077 = vmul.f32 %v1034, %v1069
    %v1078 = vmul.f32 %v1036, %v1070
    %v1079 = vmul.f32 %v1038, %v1071
    %v1080 = vmul.f32 %v1040, %v1072
    %v1081 = vpack.c.bf16 %v1073, %v1073
    %v1082 = vpack.c.bf16 %v1074, %v1074
    %v1083 = vpack.c.bf16 %v1075, %v1075
    %v1084 = vpack.c.bf16 %v1076, %v1076
    %v1085 = vpack.c.bf16 %v1077, %v1077
    %v1086 = vpack.c.bf16 %v1078, %v1078
    %v1087 = vpack.c.bf16 %v1079, %v1079
    %v1088 = vpack.c.bf16 %v1080, %v1080
    %1089 = vrot.lane.b32.xlu0 %v552, 64
    %v1090 = vpop.permute.xlu0 %1089
    %v1092 = vsel %vm562, %v1081, 0
    %vm1094 = vcmask 1043456
    %v1096 = vsel %vm1094, %v1090, 0
    %1098 = vmatprep.subr.bf16.mxu0 0
    %1099 = vmatpush1.bf16.msra.mxu0 %v1096
    %1100 = vmatprep.subr.bf16.mxu0 0
    %1101 = vmatpush1.bf16.msra.mxu0 0
    %1102 = vmatprep.subr.bf16.mxu0 0
    %1103 = vmatpush1.bf16.msra.mxu0 0
    %1104 = vmatprep.subr.bf16.mxu0 0
    %1105 = vmatpush1.bf16.msra.mxu0 0
    %1106 = vmatprep.subr.bf16.mxu0 0
    %1107 = vmatpush1.bf16.msra.mxu0 0
    %1108 = vmatprep.subr.bf16.mxu0 0
    %1109 = vmatpush1.bf16.msra.mxu0 0
    %1110 = vmatprep.subr.bf16.mxu0 0
    %1111 = vmatpush1.bf16.msra.mxu0 0
    %1112 = vmatprep.subr.bf16.mxu0 0
    %1113 = vmatpush1.bf16.msra.mxu0 0
    %1114 = vmatprep.subr.bf16.mxu0 0
    %1115 = vmatpush1.bf16.msra.mxu0 0
    %1116 = vmatprep.subr.bf16.mxu0 0
    %1117 = vmatpush1.bf16.msra.mxu0 0
    %1118 = vmatprep.subr.bf16.mxu0 0
    %1119 = vmatpush1.bf16.msra.mxu0 0
    %1120 = vmatprep.subr.bf16.mxu0 0
    %1121 = vmatpush1.bf16.msra.mxu0 0
    %1122 = vmatprep.subr.bf16.mxu0 0
    %1123 = vmatpush1.bf16.msra.mxu0 0
    %1124 = vmatprep.subr.bf16.mxu0 0
    %1125 = vmatpush1.bf16.msra.mxu0 0
    %1126 = vmatprep.subr.bf16.mxu0 0
    %1127 = vmatpush1.bf16.msra.mxu0 0
    %1128 = vmatprep.subr.bf16.mxu0 0
    %1129 = vmatpush1.bf16.msra.mxu0 0
    %1130 = vmatprep.mubr.bf16.mxu0 0
    %1131 = vmatmul.mubr.bf16.gmra.mrb[0].mxu0 %v1092
    %v1132 = vpop.f32.mrb[0].mxu0
    %v1133 = vadd.f32 0.0, %v1132
    %v1134 = vpop.f32.mrb[0].mxu0
    %v1135 = vpop.f32.mrb[0].mxu0
    %v1136 = vpop.f32.mrb[0].mxu0
    %1137 = vdwg.mxu0
    %1138 = vrot.lane.b32.xlu0 %v553, 64
    %v1139 = vpop.permute.xlu0 %1138
    %v1141 = vsel %vm562, %v1082, 0
    %v1144 = vsel %vm1094, %v1139, 0
    %1146 = vmatprep.subr.bf16.mxu0 0
    %1147 = vmatpush1.bf16.msra.mxu0 %v1144
    %1148 = vmatprep.subr.bf16.mxu0 0
    %1149 = vmatpush1.bf16.msra.mxu0 0
    %1150 = vmatprep.subr.bf16.mxu0 0
    %1151 = vmatpush1.bf16.msra.mxu0 0
    %1152 = vmatprep.subr.bf16.mxu0 0
    %1153 = vmatpush1.bf16.msra.mxu0 0
    %1154 = vmatprep.subr.bf16.mxu0 0
    %1155 = vmatpush1.bf16.msra.mxu0 0
    %1156 = vmatprep.subr.bf16.mxu0 0
    %1157 = vmatpush1.bf16.msra.mxu0 0
    %1158 = vmatprep.subr.bf16.mxu0 0
    %1159 = vmatpush1.bf16.msra.mxu0 0
    %1160 = vmatprep.subr.bf16.mxu0 0
    %1161 = vmatpush1.bf16.msra.mxu0 0
    %1162 = vmatprep.subr.bf16.mxu0 0
    %1163 = vmatpush1.bf16.msra.mxu0 0
    %1164 = vmatprep.subr.bf16.mxu0 0
    %1165 = vmatpush1.bf16.msra.mxu0 0
    %1166 = vmatprep.subr.bf16.mxu0 0
    %1167 = vmatpush1.bf16.msra.mxu0 0
    %1168 = vmatprep.subr.bf16.mxu0 0
    %1169 = vmatpush1.bf16.msra.mxu0 0
    %1170 = vmatprep.subr.bf16.mxu0 0
    %1171 = vmatpush1.bf16.msra.mxu0 0
    %1172 = vmatprep.subr.bf16.mxu0 0
    %1173 = vmatpush1.bf16.msra.mxu0 0
    %1174 = vmatprep.subr.bf16.mxu0 0
    %1175 = vmatpush1.bf16.msra.mxu0 0
    %1176 = vmatprep.subr.bf16.mxu0 0
    %1177 = vmatpush1.bf16.msra.mxu0 0
    %1178 = vmatprep.mubr.bf16.mxu0 0
    %1179 = vmatmul.mubr.bf16.gmra.mrb[0].mxu0 %v1141
    %v1180 = vpop.f32.mrb[0].mxu0
    %v1181 = vadd.f32 0.0, %v1180
    %v1182 = vpop.f32.mrb[0].mxu0
    %v1183 = vpop.f32.mrb[0].mxu0
    %v1184 = vpop.f32.mrb[0].mxu0
    %1185 = vdwg.mxu0
    %1186 = vrot.lane.b32.xlu0 %v554, 64
    %v1187 = vpop.permute.xlu0 %1186
    %v1189 = vsel %vm562, %v1083, 0
    %v1192 = vsel %vm1094, %v1187, 0
    %1194 = vmatprep.subr.bf16.mxu0 0
    %1195 = vmatpush1.bf16.msra.mxu0 %v1192
    %1196 = vmatprep.subr.bf16.mxu0 0
    %1197 = vmatpush1.bf16.msra.mxu0 0
    %1198 = vmatprep.subr.bf16.mxu0 0
    %1199 = vmatpush1.bf16.msra.mxu0 0
    %1200 = vmatprep.subr.bf16.mxu0 0
    %1201 = vmatpush1.bf16.msra.mxu0 0
    %1202 = vmatprep.subr.bf16.mxu0 0
    %1203 = vmatpush1.bf16.msra.mxu0 0
    %1204 = vmatprep.subr.bf16.mxu0 0
    %1205 = vmatpush1.bf16.msra.mxu0 0
    %1206 = vmatprep.subr.bf16.mxu0 0
    %1207 = vmatpush1.bf16.msra.mxu0 0
    %1208 = vmatprep.subr.bf16.mxu0 0
    %1209 = vmatpush1.bf16.msra.mxu0 0
    %1210 = vmatprep.subr.bf16.mxu0 0
    %1211 = vmatpush1.bf16.msra.mxu0 0
    %1212 = vmatprep.subr.bf16.mxu0 0
    %1213 = vmatpush1.bf16.msra.mxu0 0
    %1214 = vmatprep.subr.bf16.mxu0 0
    %1215 = vmatpush1.bf16.msra.mxu0 0
    %1216 = vmatprep.subr.bf16.mxu0 0
    %1217 = vmatpush1.bf16.msra.mxu0 0
    %1218 = vmatprep.subr.bf16.mxu0 0
    %1219 = vmatpush1.bf16.msra.mxu0 0
    %1220 = vmatprep.subr.bf16.mxu0 0
    %1221 = vmatpush1.bf16.msra.mxu0 0
    %1222 = vmatprep.subr.bf16.mxu0 0
    %1223 = vmatpush1.bf16.msra.mxu0 0
    %1224 = vmatprep.subr.bf16.mxu0 0
    %1225 = vmatpush1.bf16.msra.mxu0 0
    %1226 = vmatprep.mubr.bf16.mxu0 0
    %1227 = vmatmul.mubr.bf16.gmra.mrb[0].mxu0 %v1189
    %v1228 = vpop.f32.mrb[0].mxu0
    %v1229 = vadd.f32 0.0, %v1228
    %v1230 = vpop.f32.mrb[0].mxu0
    %v1231 = vpop.f32.mrb[0].mxu0
    %v1232 = vpop.f32.mrb[0].mxu0
    %1233 = vdwg.mxu0
    %1234 = vrot.lane.b32.xlu0 %v555, 64
    %v1235 = vpop.permute.xlu0 %1234
    %v1237 = vsel %vm562, %v1084, 0
    %v1240 = vsel %vm1094, %v1235, 0
    %1242 = vmatprep.subr.bf16.mxu0 0
    %1243 = vmatpush1.bf16.msra.mxu0 %v1240
    %1244 = vmatprep.subr.bf16.mxu0 0
    %1245 = vmatpush1.bf16.msra.mxu0 0
    %1246 = vmatprep.subr.bf16.mxu0 0
    %1247 = vmatpush1.bf16.msra.mxu0 0
    %1248 = vmatprep.subr.bf16.mxu0 0
    %1249 = vmatpush1.bf16.msra.mxu0 0
    %1250 = vmatprep.subr.bf16.mxu0 0
    %1251 = vmatpush1.bf16.msra.mxu0 0
    %1252 = vmatprep.subr.bf16.mxu0 0
    %1253 = vmatpush1.bf16.msra.mxu0 0
    %1254 = vmatprep.subr.bf16.mxu0 0
    %1255 = vmatpush1.bf16.msra.mxu0 0
    %1256 = vmatprep.subr.bf16.mxu0 0
    %1257 = vmatpush1.bf16.msra.mxu0 0
    %1258 = vmatprep.subr.bf16.mxu0 0
    %1259 = vmatpush1.bf16.msra.mxu0 0
    %1260 = vmatprep.subr.bf16.mxu0 0
    %1261 = vmatpush1.bf16.msra.mxu0 0
    %1262 = vmatprep.subr.bf16.mxu0 0
    %1263 = vmatpush1.bf16.msra.mxu0 0
    %1264 = vmatprep.subr.bf16.mxu0 0
    %1265 = vmatpush1.bf16.msra.mxu0 0
    %1266 = vmatprep.subr.bf16.mxu0 0
    %1267 = vmatpush1.bf16.msra.mxu0 0
    %1268 = vmatprep.subr.bf16.mxu0 0
    %1269 = vmatpush1.bf16.msra.mxu0 0
    %1270 = vmatprep.subr.bf16.mxu0 0
    %1271 = vmatpush1.bf16.msra.mxu0 0
    %1272 = vmatprep.subr.bf16.mxu0 0
    %1273 = vmatpush1.bf16.msra.mxu0 0
    %1274 = vmatprep.mubr.bf16.mxu0 0
    %1275 = vmatmul.mubr.bf16.gmra.mrb[0].mxu0 %v1237
    %v1276 = vpop.f32.mrb[0].mxu0
    %v1277 = vadd.f32 0.0, %v1276
    %v1278 = vpop.f32.mrb[0].mxu0
    %v1279 = vpop.f32.mrb[0].mxu0
    %v1280 = vpop.f32.mrb[0].mxu0
    %1281 = vdwg.mxu0
    %1282 = vrot.lane.b32.xlu0 %v556, 64
    %v1283 = vpop.permute.xlu0 %1282
    %v1285 = vsel %vm562, %v1085, 0
    %v1288 = vsel %vm1094, %v1283, 0
    %1290 = vmatprep.subr.bf16.mxu0 0
    %1291 = vmatpush1.bf16.msra.mxu0 %v1288
    %1292 = vmatprep.subr.bf16.mxu0 0
    %1293 = vmatpush1.bf16.msra.mxu0 0
    %1294 = vmatprep.subr.bf16.mxu0 0
    %1295 = vmatpush1.bf16.msra.mxu0 0
    %1296 = vmatprep.subr.bf16.mxu0 0
    %1297 = vmatpush1.bf16.msra.mxu0 0
    %1298 = vmatprep.subr.bf16.mxu0 0
    %1299 = vmatpush1.bf16.msra.mxu0 0
    %1300 = vmatprep.subr.bf16.mxu0 0
    %1301 = vmatpush1.bf16.msra.mxu0 0
    %1302 = vmatprep.subr.bf16.mxu0 0
    %1303 = vmatpush1.bf16.msra.mxu0 0
    %1304 = vmatprep.subr.bf16.mxu0 0
    %1305 = vmatpush1.bf16.msra.mxu0 0
    %1306 = vmatprep.subr.bf16.mxu0 0
    %1307 = vmatpush1.bf16.msra.mxu0 0
    %1308 = vmatprep.subr.bf16.mxu0 0
    %1309 = vmatpush1.bf16.msra.mxu0 0
    %1310 = vmatprep.subr.bf16.mxu0 0
    %1311 = vmatpush1.bf16.msra.mxu0 0
    %1312 = vmatprep.subr.bf16.mxu0 0
    %1313 = vmatpush1.bf16.msra.mxu0 0
    %1314 = vmatprep.subr.bf16.mxu0 0
    %1315 = vmatpush1.bf16.msra.mxu0 0
    %1316 = vmatprep.subr.bf16.mxu0 0
    %1317 = vmatpush1.bf16.msra.mxu0 0
    %1318 = vmatprep.subr.bf16.mxu0 0
    %1319 = vmatpush1.bf16.msra.mxu0 0
    %1320 = vmatprep.subr.bf16.mxu0 0
    %1321 = vmatpush1.bf16.msra.mxu0 0
    %1322 = vmatprep.mubr.bf16.mxu0 0
    %1323 = vmatmul.mubr.bf16.gmra.mrb[0].mxu0 %v1285
    %v1324 = vpop.f32.mrb[0].mxu0
    %v1325 = vadd.f32 0.0, %v1324
    %v1326 = vpop.f32.mrb[0].mxu0
    %v1327 = vpop.f32.mrb[0].mxu0
    %v1328 = vpop.f32.mrb[0].mxu0
    %1329 = vdwg.mxu0
    %1330 = vrot.lane.b32.xlu0 %v557, 64
    %v1331 = vpop.permute.xlu0 %1330
    %v1333 = vsel %vm562, %v1086, 0
    %v1336 = vsel %vm1094, %v1331, 0
    %1338 = vmatprep.subr.bf16.mxu0 0
    %1339 = vmatpush1.bf16.msra.mxu0 %v1336
    %1340 = vmatprep.subr.bf16.mxu0 0
    %1341 = vmatpush1.bf16.msra.mxu0 0
    %1342 = vmatprep.subr.bf16.mxu0 0
    %1343 = vmatpush1.bf16.msra.mxu0 0
    %1344 = vmatprep.subr.bf16.mxu0 0
    %1345 = vmatpush1.bf16.msra.mxu0 0
    %1346 = vmatprep.subr.bf16.mxu0 0
    %1347 = vmatpush1.bf16.msra.mxu0 0
    %1348 = vmatprep.subr.bf16.mxu0 0
    %1349 = vmatpush1.bf16.msra.mxu0 0
    %1350 = vmatprep.subr.bf16.mxu0 0
    %1351 = vmatpush1.bf16.msra.mxu0 0
    %1352 = vmatprep.subr.bf16.mxu0 0
    %1353 = vmatpush1.bf16.msra.mxu0 0
    %1354 = vmatprep.subr.bf16.mxu0 0
    %1355 = vmatpush1.bf16.msra.mxu0 0
    %1356 = vmatprep.subr.bf16.mxu0 0
    %1357 = vmatpush1.bf16.msra.mxu0 0
    %1358 = vmatprep.subr.bf16.mxu0 0
    %1359 = vmatpush1.bf16.msra.mxu0 0
    %1360 = vmatprep.subr.bf16.mxu0 0
    %1361 = vmatpush1.bf16.msra.mxu0 0
    %1362 = vmatprep.subr.bf16.mxu0 0
    %1363 = vmatpush1.bf16.msra.mxu0 0
    %1364 = vmatprep.subr.bf16.mxu0 0
    %1365 = vmatpush1.bf16.msra.mxu0 0
    %1366 = vmatprep.subr.bf16.mxu0 0
    %1367 = vmatpush1.bf16.msra.mxu0 0
    %1368 = vmatprep.subr.bf16.mxu0 0
    %1369 = vmatpush1.bf16.msra.mxu0 0
    %1370 = vmatprep.mubr.bf16.mxu0 0
    %1371 = vmatmul.mubr.bf16.gmra.mrb[0].mxu0 %v1333
    %v1372 = vpop.f32.mrb[0].mxu0
    %v1373 = vadd.f32 0.0, %v1372
    %v1374 = vpop.f32.mrb[0].mxu0
    %v1375 = vpop.f32.mrb[0].mxu0
    %v1376 = vpop.f32.mrb[0].mxu0
    %1377 = vdwg.mxu0
    %1378 = vrot.lane.b32.xlu0 %v558, 64
    %v1379 = vpop.permute.xlu0 %1378
    %v1381 = vsel %vm562, %v1087, 0
    %v1384 = vsel %vm1094, %v1379, 0
    %1386 = vmatprep.subr.bf16.mxu0 0
    %1387 = vmatpush1.bf16.msra.mxu0 %v1384
    %1388 = vmatprep.subr.bf16.mxu0 0
    %1389 = vmatpush1.bf16.msra.mxu0 0
    %1390 = vmatprep.subr.bf16.mxu0 0
    %1391 = vmatpush1.bf16.msra.mxu0 0
    %1392 = vmatprep.subr.bf16.mxu0 0
    %1393 = vmatpush1.bf16.msra.mxu0 0
    %1394 = vmatprep.subr.bf16.mxu0 0
    %1395 = vmatpush1.bf16.msra.mxu0 0
    %1396 = vmatprep.subr.bf16.mxu0 0
    %1397 = vmatpush1.bf16.msra.mxu0 0
    %1398 = vmatprep.subr.bf16.mxu0 0
    %1399 = vmatpush1.bf16.msra.mxu0 0
    %1400 = vmatprep.subr.bf16.mxu0 0
    %1401 = vmatpush1.bf16.msra.mxu0 0
    %1402 = vmatprep.subr.bf16.mxu0 0
    %1403 = vmatpush1.bf16.msra.mxu0 0
    %1404 = vmatprep.subr.bf16.mxu0 0
    %1405 = vmatpush1.bf16.msra.mxu0 0
    %1406 = vmatprep.subr.bf16.mxu0 0
    %1407 = vmatpush1.bf16.msra.mxu0 0
    %1408 = vmatprep.subr.bf16.mxu0 0
    %1409 = vmatpush1.bf16.msra.mxu0 0
    %1410 = vmatprep.subr.bf16.mxu0 0
    %1411 = vmatpush1.bf16.msra.mxu0 0
    %1412 = vmatprep.subr.bf16.mxu0 0
    %1413 = vmatpush1.bf16.msra.mxu0 0
    %1414 = vmatprep.subr.bf16.mxu0 0
    %1415 = vmatpush1.bf16.msra.mxu0 0
    %1416 = vmatprep.subr.bf16.mxu0 0
    %1417 = vmatpush1.bf16.msra.mxu0 0
    %1418 = vmatprep.mubr.bf16.mxu0 0
    %1419 = vmatmul.mubr.bf16.gmra.mrb[0].mxu0 %v1381
    %v1420 = vpop.f32.mrb[0].mxu0
    %v1421 = vadd.f32 0.0, %v1420
    %v1422 = vpop.f32.mrb[0].mxu0
    %v1423 = vpop.f32.mrb[0].mxu0
    %v1424 = vpop.f32.mrb[0].mxu0
    %1425 = vdwg.mxu0
    %1426 = vrot.lane.b32.xlu0 %v559, 64
    %v1427 = vpop.permute.xlu0 %1426
    %v1429 = vsel %vm562, %v1088, 0
    %v1432 = vsel %vm1094, %v1427, 0
    %1434 = vmatprep.subr.bf16.mxu0 0
    %1435 = vmatpush1.bf16.msra.mxu0 %v1432
    %1436 = vmatprep.subr.bf16.mxu0 0
    %1437 = vmatpush1.bf16.msra.mxu0 0
    %1438 = vmatprep.subr.bf16.mxu0 0
    %1439 = vmatpush1.bf16.msra.mxu0 0
    %1440 = vmatprep.subr.bf16.mxu0 0
    %1441 = vmatpush1.bf16.msra.mxu0 0
    %1442 = vmatprep.subr.bf16.mxu0 0
    %1443 = vmatpush1.bf16.msra.mxu0 0
    %1444 = vmatprep.subr.bf16.mxu0 0
    %1445 = vmatpush1.bf16.msra.mxu0 0
    %1446 = vmatprep.subr.bf16.mxu0 0
    %1447 = vmatpush1.bf16.msra.mxu0 0
    %1448 = vmatprep.subr.bf16.mxu0 0
    %1449 = vmatpush1.bf16.msra.mxu0 0
    %1450 = vmatprep.subr.bf16.mxu0 0
    %1451 = vmatpush1.bf16.msra.mxu0 0
    %1452 = vmatprep.subr.bf16.mxu0 0
    %1453 = vmatpush1.bf16.msra.mxu0 0
    %1454 = vmatprep.subr.bf16.mxu0 0
    %1455 = vmatpush1.bf16.msra.mxu0 0
    %1456 = vmatprep.subr.bf16.mxu0 0
    %1457 = vmatpush1.bf16.msra.mxu0 0
    %1458 = vmatprep.subr.bf16.mxu0 0
    %1459 = vmatpush1.bf16.msra.mxu0 0
    %1460 = vmatprep.subr.bf16.mxu0 0
    %1461 = vmatpush1.bf16.msra.mxu0 0
    %1462 = vmatprep.subr.bf16.mxu0 0
    %1463 = vmatpush1.bf16.msra.mxu0 0
    %1464 = vmatprep.subr.bf16.mxu0 0
    %1465 = vmatpush1.bf16.msra.mxu0 0
    %1466 = vmatprep.mubr.bf16.mxu0 0
    %1467 = vmatmul.mubr.bf16.gmra.mrb[0].mxu0 %v1429
    %v1468 = vpop.f32.mrb[0].mxu0
    %v1469 = vadd.f32 0.0, %v1468
    %v1470 = vpop.f32.mrb[0].mxu0
    %v1471 = vpop.f32.mrb[0].mxu0
    %v1472 = vpop.f32.mrb[0].mxu0
    %1473 = vdwg.mxu0
    %1474 = vrot.lane.b32.xlu0 %v552, 120
    %v1475 = vpop.permute.xlu0 %1474
    %1476 = vrot.lane.b32.xlu0 %v552, 88
    %v1477 = vpop.permute.xlu0 %1476
    %v1479 = vsel %vm562, %v1475, 0
    %v1482 = vsel %vm562, %v1477, 0
    %1484 = vmatprep.subr.bf16.mxu0 0
    %1485 = vmatpush1.bf16.xpose.msra.mxu0 %v1482
    %1486 = vmatprep.subr.bf16.mxu0 0
    %1487 = vmatpush1.bf16.xpose.msra.mxu0 0
    %1488 = vmatprep.subr.bf16.mxu0 0
    %1489 = vmatpush1.bf16.xpose.msra.mxu0 0
    %1490 = vmatprep.subr.bf16.mxu0 0
    %1491 = vmatpush1.bf16.xpose.msra.mxu0 0
    %1492 = vmatprep.subr.bf16.mxu0 0
    %1493 = vmatpush1.bf16.xpose.msra.mxu0 0
    %1494 = vmatprep.subr.bf16.mxu0 0
    %1495 = vmatpush1.bf16.xpose.msra.mxu0 0
    %1496 = vmatprep.subr.bf16.mxu0 0
    %1497 = vmatpush1.bf16.xpose.msra.mxu0 0
    %1498 = vmatprep.subr.bf16.mxu0 0
    %1499 = vmatpush1.bf16.xpose.msra.mxu0 0
    %1500 = vmatprep.subr.bf16.mxu0 0
    %1501 = vmatpush1.bf16.xpose.msra.mxu0 0
    %1502 = vmatprep.subr.bf16.mxu0 0
    %1503 = vmatpush1.bf16.xpose.msra.mxu0 0
    %1504 = vmatprep.subr.bf16.mxu0 0
    %1505 = vmatpush1.bf16.xpose.msra.mxu0 0
    %1506 = vmatprep.subr.bf16.mxu0 0
    %1507 = vmatpush1.bf16.xpose.msra.mxu0 0
    %1508 = vmatprep.subr.bf16.mxu0 0
    %1509 = vmatpush1.bf16.xpose.msra.mxu0 0
    %1510 = vmatprep.subr.bf16.mxu0 0
    %1511 = vmatpush1.bf16.xpose.msra.mxu0 0
    %1512 = vmatprep.subr.bf16.mxu0 0
    %1513 = vmatpush1.bf16.xpose.msra.mxu0 0
    %1514 = vmatprep.subr.bf16.mxu0 0
    %1515 = vmatpush1.bf16.xpose.msra.mxu0 0
    %1516 = vmatprep.mubr.bf16.mxu0 0
    %1517 = vmatmul.mubr.bf16.gmra.mrb[0].mxu0 %v1479
    %v1518 = vpop.f32.mrb[0].mxu0
    %v1519 = vadd.f32 %v314, %v1518
    %v1520 = vpop.f32.mrb[0].mxu0
    %v1521 = vpop.f32.mrb[0].mxu0
    %v1522 = vpop.f32.mrb[0].mxu0
    %1523 = vdwg.mxu0
    %1524 = vrot.lane.b32.xlu0 %v553, 120
    %v1525 = vpop.permute.xlu0 %1524
    %1526 = vrot.lane.b32.xlu0 %v553, 88
    %v1527 = vpop.permute.xlu0 %1526
    %v1529 = vsel %vm562, %v1525, 0
    %v1532 = vsel %vm562, %v1527, 0
    %1534 = vmatprep.subr.bf16.mxu0 0
    %1535 = vmatpush1.bf16.xpose.msra.mxu0 %v1532
    %1536 = vmatprep.subr.bf16.mxu0 0
    %1537 = vmatpush1.bf16.xpose.msra.mxu0 0
    %1538 = vmatprep.subr.bf16.mxu0 0
    %1539 = vmatpush1.bf16.xpose.msra.mxu0 0
    %1540 = vmatprep.subr.bf16.mxu0 0
    %1541 = vmatpush1.bf16.xpose.msra.mxu0 0
    %1542 = vmatprep.subr.bf16.mxu0 0
    %1543 = vmatpush1.bf16.xpose.msra.mxu0 0
    %1544 = vmatprep.subr.bf16.mxu0 0
    %1545 = vmatpush1.bf16.xpose.msra.mxu0 0
    %1546 = vmatprep.subr.bf16.mxu0 0
    %1547 = vmatpush1.bf16.xpose.msra.mxu0 0
    %1548 = vmatprep.subr.bf16.mxu0 0
    %1549 = vmatpush1.bf16.xpose.msra.mxu0 0
    %1550 = vmatprep.subr.bf16.mxu0 0
    %1551 = vmatpush1.bf16.xpose.msra.mxu0 0
    %1552 = vmatprep.subr.bf16.mxu0 0
    %1553 = vmatpush1.bf16.xpose.msra.mxu0 0
    %1554 = vmatprep.subr.bf16.mxu0 0
    %1555 = vmatpush1.bf16.xpose.msra.mxu0 0
    %1556 = vmatprep.subr.bf16.mxu0 0
    %1557 = vmatpush1.bf16.xpose.msra.mxu0 0
    %1558 = vmatprep.subr.bf16.mxu0 0
    %1559 = vmatpush1.bf16.xpose.msra.mxu0 0
    %1560 = vmatprep.subr.bf16.mxu0 0
    %1561 = vmatpush1.bf16.xpose.msra.mxu0 0
    %1562 = vmatprep.subr.bf16.mxu0 0
    %1563 = vmatpush1.bf16.xpose.msra.mxu0 0
    %1564 = vmatprep.subr.bf16.mxu0 0
    %1565 = vmatpush1.bf16.xpose.msra.mxu0 0
    %1566 = vmatprep.mubr.bf16.mxu0 0
    %1567 = vmatmul.mubr.bf16.gmra.mrb[0].mxu0 %v1529
    %v1568 = vpop.f32.mrb[0].mxu0
    %v1569 = vadd.f32 %v314, %v1568
    %v1570 = vpop.f32.mrb[0].mxu0
    %v1571 = vpop.f32.mrb[0].mxu0
    %v1572 = vpop.f32.mrb[0].mxu0
    %1573 = vdwg.mxu0
    %1574 = vrot.lane.b32.xlu0 %v554, 120
    %v1575 = vpop.permute.xlu0 %1574
    %1576 = vrot.lane.b32.xlu0 %v554, 88
    %v1577 = vpop.permute.xlu0 %1576
    %v1579 = vsel %vm562, %v1575, 0
    %v1582 = vsel %vm562, %v1577, 0
    %1584 = vmatprep.subr.bf16.mxu0 0
    %1585 = vmatpush1.bf16.xpose.msra.mxu0 %v1582
    %1586 = vmatprep.subr.bf16.mxu0 0
    %1587 = vmatpush1.bf16.xpose.msra.mxu0 0
    %1588 = vmatprep.subr.bf16.mxu0 0
    %1589 = vmatpush1.bf16.xpose.msra.mxu0 0
    %1590 = vmatprep.subr.bf16.mxu0 0
    %1591 = vmatpush1.bf16.xpose.msra.mxu0 0
    %1592 = vmatprep.subr.bf16.mxu0 0
    %1593 = vmatpush1.bf16.xpose.msra.mxu0 0
    %1594 = vmatprep.subr.bf16.mxu0 0
    %1595 = vmatpush1.bf16.xpose.msra.mxu0 0
    %1596 = vmatprep.subr.bf16.mxu0 0
    %1597 = vmatpush1.bf16.xpose.msra.mxu0 0
    %1598 = vmatprep.subr.bf16.mxu0 0
    %1599 = vmatpush1.bf16.xpose.msra.mxu0 0
    %1600 = vmatprep.subr.bf16.mxu0 0
    %1601 = vmatpush1.bf16.xpose.msra.mxu0 0
    %1602 = vmatprep.subr.bf16.mxu0 0
    %1603 = vmatpush1.bf16.xpose.msra.mxu0 0
    %1604 = vmatprep.subr.bf16.mxu0 0
    %1605 = vmatpush1.bf16.xpose.msra.mxu0 0
    %1606 = vmatprep.subr.bf16.mxu0 0
    %1607 = vmatpush1.bf16.xpose.msra.mxu0 0
    %1608 = vmatprep.subr.bf16.mxu0 0
    %1609 = vmatpush1.bf16.xpose.msra.mxu0 0
    %1610 = vmatprep.subr.bf16.mxu0 0
    %1611 = vmatpush1.bf16.xpose.msra.mxu0 0
    %1612 = vmatprep.subr.bf16.mxu0 0
    %1613 = vmatpush1.bf16.xpose.msra.mxu0 0
    %1614 = vmatprep.subr.bf16.mxu0 0
    %1615 = vmatpush1.bf16.xpose.msra.mxu0 0
    %1616 = vmatprep.mubr.bf16.mxu0 0
    %1617 = vmatmul.mubr.bf16.gmra.mrb[0].mxu0 %v1579
    %v1618 = vpop.f32.mrb[0].mxu0
    %v1619 = vadd.f32 %v314, %v1618
    %v1620 = vpop.f32.mrb[0].mxu0
    %v1621 = vpop.f32.mrb[0].mxu0
    %v1622 = vpop.f32.mrb[0].mxu0
    %1623 = vdwg.mxu0
    %1624 = vrot.lane.b32.xlu0 %v555, 120
    %v1625 = vpop.permute.xlu0 %1624
    %1626 = vrot.lane.b32.xlu0 %v555, 88
    %v1627 = vpop.permute.xlu0 %1626
    %v1629 = vsel %vm562, %v1625, 0
    %v1632 = vsel %vm562, %v1627, 0
    %1634 = vmatprep.subr.bf16.mxu0 0
    %1635 = vmatpush1.bf16.xpose.msra.mxu0 %v1632
    %1636 = vmatprep.subr.bf16.mxu0 0
    %1637 = vmatpush1.bf16.xpose.msra.mxu0 0
    %1638 = vmatprep.subr.bf16.mxu0 0
    %1639 = vmatpush1.bf16.xpose.msra.mxu0 0
    %1640 = vmatprep.subr.bf16.mxu0 0
    %1641 = vmatpush1.bf16.xpose.msra.mxu0 0
    %1642 = vmatprep.subr.bf16.mxu0 0
    %1643 = vmatpush1.bf16.xpose.msra.mxu0 0
    %1644 = vmatprep.subr.bf16.mxu0 0
    %1645 = vmatpush1.bf16.xpose.msra.mxu0 0
    %1646 = vmatprep.subr.bf16.mxu0 0
    %1647 = vmatpush1.bf16.xpose.msra.mxu0 0
    %1648 = vmatprep.subr.bf16.mxu0 0
    %1649 = vmatpush1.bf16.xpose.msra.mxu0 0
    %1650 = vmatprep.subr.bf16.mxu0 0
    %1651 = vmatpush1.bf16.xpose.msra.mxu0 0
    %1652 = vmatprep.subr.bf16.mxu0 0
    %1653 = vmatpush1.bf16.xpose.msra.mxu0 0
    %1654 = vmatprep.subr.bf16.mxu0 0
    %1655 = vmatpush1.bf16.xpose.msra.mxu0 0
    %1656 = vmatprep.subr.bf16.mxu0 0
    %1657 = vmatpush1.bf16.xpose.msra.mxu0 0
    %1658 = vmatprep.subr.bf16.mxu0 0
    %1659 = vmatpush1.bf16.xpose.msra.mxu0 0
    %1660 = vmatprep.subr.bf16.mxu0 0
    %1661 = vmatpush1.bf16.xpose.msra.mxu0 0
    %1662 = vmatprep.subr.bf16.mxu0 0
    %1663 = vmatpush1.bf16.xpose.msra.mxu0 0
    %1664 = vmatprep.subr.bf16.mxu0 0
    %1665 = vmatpush1.bf16.xpose.msra.mxu0 0
    %1666 = vmatprep.mubr.bf16.mxu0 0
    %1667 = vmatmul.mubr.bf16.gmra.mrb[0].mxu0 %v1629
    %v1668 = vpop.f32.mrb[0].mxu0
    %v1669 = vadd.f32 %v314, %v1668
    %v1670 = vpop.f32.mrb[0].mxu0
    %v1671 = vpop.f32.mrb[0].mxu0
    %v1672 = vpop.f32.mrb[0].mxu0
    %1673 = vdwg.mxu0
    %1674 = vrot.lane.b32.xlu0 %v556, 120
    %v1675 = vpop.permute.xlu0 %1674
    %1676 = vrot.lane.b32.xlu0 %v556, 88
    %v1677 = vpop.permute.xlu0 %1676
    %v1679 = vsel %vm562, %v1675, 0
    %v1682 = vsel %vm562, %v1677, 0
    %1684 = vmatprep.subr.bf16.mxu0 0
    %1685 = vmatpush1.bf16.xpose.msra.mxu0 %v1682
    %1686 = vmatprep.subr.bf16.mxu0 0
    %1687 = vmatpush1.bf16.xpose.msra.mxu0 0
    %1688 = vmatprep.subr.bf16.mxu0 0
    %1689 = vmatpush1.bf16.xpose.msra.mxu0 0
    %1690 = vmatprep.subr.bf16.mxu0 0
    %1691 = vmatpush1.bf16.xpose.msra.mxu0 0
    %1692 = vmatprep.subr.bf16.mxu0 0
    %1693 = vmatpush1.bf16.xpose.msra.mxu0 0
    %1694 = vmatprep.subr.bf16.mxu0 0
    %1695 = vmatpush1.bf16.xpose.msra.mxu0 0
    %1696 = vmatprep.subr.bf16.mxu0 0
    %1697 = vmatpush1.bf16.xpose.msra.mxu0 0
    %1698 = vmatprep.subr.bf16.mxu0 0
    %1699 = vmatpush1.bf16.xpose.msra.mxu0 0
    %1700 = vmatprep.subr.bf16.mxu0 0
    %1701 = vmatpush1.bf16.xpose.msra.mxu0 0
    %1702 = vmatprep.subr.bf16.mxu0 0
    %1703 = vmatpush1.bf16.xpose.msra.mxu0 0
    %1704 = vmatprep.subr.bf16.mxu0 0
    %1705 = vmatpush1.bf16.xpose.msra.mxu0 0
    %1706 = vmatprep.subr.bf16.mxu0 0
    %1707 = vmatpush1.bf16.xpose.msra.mxu0 0
    %1708 = vmatprep.subr.bf16.mxu0 0
    %1709 = vmatpush1.bf16.xpose.msra.mxu0 0
    %1710 = vmatprep.subr.bf16.mxu0 0
    %1711 = vmatpush1.bf16.xpose.msra.mxu0 0
    %1712 = vmatprep.subr.bf16.mxu0 0
    %1713 = vmatpush1.bf16.xpose.msra.mxu0 0
    %1714 = vmatprep.subr.bf16.mxu0 0
    %1715 = vmatpush1.bf16.xpose.msra.mxu0 0
    %1716 = vmatprep.mubr.bf16.mxu0 0
    %1717 = vmatmul.mubr.bf16.gmra.mrb[0].mxu0 %v1679
    %v1718 = vpop.f32.mrb[0].mxu0
    %v1719 = vadd.f32 %v314, %v1718
    %v1720 = vpop.f32.mrb[0].mxu0
    %v1721 = vpop.f32.mrb[0].mxu0
    %v1722 = vpop.f32.mrb[0].mxu0
    %1723 = vdwg.mxu0
    %1724 = vrot.lane.b32.xlu0 %v557, 120
    %v1725 = vpop.permute.xlu0 %1724
    %1726 = vrot.lane.b32.xlu0 %v557, 88
    %v1727 = vpop.permute.xlu0 %1726
    %v1729 = vsel %vm562, %v1725, 0
    %v1732 = vsel %vm562, %v1727, 0
    %1734 = vmatprep.subr.bf16.mxu0 0
    %1735 = vmatpush1.bf16.xpose.msra.mxu0 %v1732
    %1736 = vmatprep.subr.bf16.mxu0 0
    %1737 = vmatpush1.bf16.xpose.msra.mxu0 0
    %1738 = vmatprep.subr.bf16.mxu0 0
    %1739 = vmatpush1.bf16.xpose.msra.mxu0 0
    %1740 = vmatprep.subr.bf16.mxu0 0
    %1741 = vmatpush1.bf16.xpose.msra.mxu0 0
    %1742 = vmatprep.subr.bf16.mxu0 0
    %1743 = vmatpush1.bf16.xpose.msra.mxu0 0
    %1744 = vmatprep.subr.bf16.mxu0 0
    %1745 = vmatpush1.bf16.xpose.msra.mxu0 0
    %1746 = vmatprep.subr.bf16.mxu0 0
    %1747 = vmatpush1.bf16.xpose.msra.mxu0 0
    %1748 = vmatprep.subr.bf16.mxu0 0
    %1749 = vmatpush1.bf16.xpose.msra.mxu0 0
    %1750 = vmatprep.subr.bf16.mxu0 0
    %1751 = vmatpush1.bf16.xpose.msra.mxu0 0
    %1752 = vmatprep.subr.bf16.mxu0 0
    %1753 = vmatpush1.bf16.xpose.msra.mxu0 0
    %1754 = vmatprep.subr.bf16.mxu0 0
    %1755 = vmatpush1.bf16.xpose.msra.mxu0 0
    %1756 = vmatprep.subr.bf16.mxu0 0
    %1757 = vmatpush1.bf16.xpose.msra.mxu0 0
    %1758 = vmatprep.subr.bf16.mxu0 0
    %1759 = vmatpush1.bf16.xpose.msra.mxu0 0
    %1760 = vmatprep.subr.bf16.mxu0 0
    %1761 = vmatpush1.bf16.xpose.msra.mxu0 0
    %1762 = vmatprep.subr.bf16.mxu0 0
    %1763 = vmatpush1.bf16.xpose.msra.mxu0 0
    %1764 = vmatprep.subr.bf16.mxu0 0
    %1765 = vmatpush1.bf16.xpose.msra.mxu0 0
    %1766 = vmatprep.mubr.bf16.mxu0 0
    %1767 = vmatmul.mubr.bf16.gmra.mrb[0].mxu0 %v1729
    %v1768 = vpop.f32.mrb[0].mxu0
    %v1769 = vadd.f32 %v314, %v1768
    %v1770 = vpop.f32.mrb[0].mxu0
    %v1771 = vpop.f32.mrb[0].mxu0
    %v1772 = vpop.f32.mrb[0].mxu0
    %1773 = vdwg.mxu0
    %1774 = vrot.lane.b32.xlu0 %v558, 120
    %v1775 = vpop.permute.xlu0 %1774
    %1776 = vrot.lane.b32.xlu0 %v558, 88
    %v1777 = vpop.permute.xlu0 %1776
    %v1779 = vsel %vm562, %v1775, 0
    %v1782 = vsel %vm562, %v1777, 0
    %1784 = vmatprep.subr.bf16.mxu0 0
    %1785 = vmatpush1.bf16.xpose.msra.mxu0 %v1782
    %1786 = vmatprep.subr.bf16.mxu0 0
    %1787 = vmatpush1.bf16.xpose.msra.mxu0 0
    %1788 = vmatprep.subr.bf16.mxu0 0
    %1789 = vmatpush1.bf16.xpose.msra.mxu0 0
    %1790 = vmatprep.subr.bf16.mxu0 0
    %1791 = vmatpush1.bf16.xpose.msra.mxu0 0
    %1792 = vmatprep.subr.bf16.mxu0 0
    %1793 = vmatpush1.bf16.xpose.msra.mxu0 0
    %1794 = vmatprep.subr.bf16.mxu0 0
    %1795 = vmatpush1.bf16.xpose.msra.mxu0 0
    %1796 = vmatprep.subr.bf16.mxu0 0
    %1797 = vmatpush1.bf16.xpose.msra.mxu0 0
    %1798 = vmatprep.subr.bf16.mxu0 0
    %1799 = vmatpush1.bf16.xpose.msra.mxu0 0
    %1800 = vmatprep.subr.bf16.mxu0 0
    %1801 = vmatpush1.bf16.xpose.msra.mxu0 0
    %1802 = vmatprep.subr.bf16.mxu0 0
    %1803 = vmatpush1.bf16.xpose.msra.mxu0 0
    %1804 = vmatprep.subr.bf16.mxu0 0
    %1805 = vmatpush1.bf16.xpose.msra.mxu0 0
    %1806 = vmatprep.subr.bf16.mxu0 0
    %1807 = vmatpush1.bf16.xpose.msra.mxu0 0
    %1808 = vmatprep.subr.bf16.mxu0 0
    %1809 = vmatpush1.bf16.xpose.msra.mxu0 0
    %1810 = vmatprep.subr.bf16.mxu0 0
    %1811 = vmatpush1.bf16.xpose.msra.mxu0 0
    %1812 = vmatprep.subr.bf16.mxu0 0
    %1813 = vmatpush1.bf16.xpose.msra.mxu0 0
    %1814 = vmatprep.subr.bf16.mxu0 0
    %1815 = vmatpush1.bf16.xpose.msra.mxu0 0
    %1816 = vmatprep.mubr.bf16.mxu0 0
    %1817 = vmatmul.mubr.bf16.gmra.mrb[0].mxu0 %v1779
    %v1818 = vpop.f32.mrb[0].mxu0
    %v1819 = vadd.f32 %v314, %v1818
    %v1820 = vpop.f32.mrb[0].mxu0
    %v1821 = vpop.f32.mrb[0].mxu0
    %v1822 = vpop.f32.mrb[0].mxu0
    %1823 = vdwg.mxu0
    %1824 = vrot.lane.b32.xlu0 %v559, 120
    %v1825 = vpop.permute.xlu0 %1824
    %1826 = vrot.lane.b32.xlu0 %v559, 88
    %v1827 = vpop.permute.xlu0 %1826
    %v1829 = vsel %vm562, %v1825, 0
    %v1832 = vsel %vm562, %v1827, 0
    %1834 = vmatprep.subr.bf16.mxu0 0
    %1835 = vmatpush1.bf16.xpose.msra.mxu0 %v1832
    %1836 = vmatprep.subr.bf16.mxu0 0
    %1837 = vmatpush1.bf16.xpose.msra.mxu0 0
    %1838 = vmatprep.subr.bf16.mxu0 0
    %1839 = vmatpush1.bf16.xpose.msra.mxu0 0
    %1840 = vmatprep.subr.bf16.mxu0 0
    %1841 = vmatpush1.bf16.xpose.msra.mxu0 0
    %1842 = vmatprep.subr.bf16.mxu0 0
    %1843 = vmatpush1.bf16.xpose.msra.mxu0 0
    %1844 = vmatprep.subr.bf16.mxu0 0
    %1845 = vmatpush1.bf16.xpose.msra.mxu0 0
    %1846 = vmatprep.subr.bf16.mxu0 0
    %1847 = vmatpush1.bf16.xpose.msra.mxu0 0
    %1848 = vmatprep.subr.bf16.mxu0 0
    %1849 = vmatpush1.bf16.xpose.msra.mxu0 0
    %1850 = vmatprep.subr.bf16.mxu0 0
    %1851 = vmatpush1.bf16.xpose.msra.mxu0 0
    %1852 = vmatprep.subr.bf16.mxu0 0
    %1853 = vmatpush1.bf16.xpose.msra.mxu0 0
    %1854 = vmatprep.subr.bf16.mxu0 0
    %1855 = vmatpush1.bf16.xpose.msra.mxu0 0
    %1856 = vmatprep.subr.bf16.mxu0 0
    %1857 = vmatpush1.bf16.xpose.msra.mxu0 0
    %1858 = vmatprep.subr.bf16.mxu0 0
    %1859 = vmatpush1.bf16.xpose.msra.mxu0 0
    %1860 = vmatprep.subr.bf16.mxu0 0
    %1861 = vmatpush1.bf16.xpose.msra.mxu0 0
    %1862 = vmatprep.subr.bf16.mxu0 0
    %1863 = vmatpush1.bf16.xpose.msra.mxu0 0
    %1864 = vmatprep.subr.bf16.mxu0 0
    %1865 = vmatpush1.bf16.xpose.msra.mxu0 0
    %1866 = vmatprep.mubr.bf16.mxu0 0
    %1867 = vmatmul.mubr.bf16.gmra.mrb[0].mxu0 %v1829
    %v1868 = vpop.f32.mrb[0].mxu0
    %v1869 = vadd.f32 %v314, %v1868
    %v1870 = vpop.f32.mrb[0].mxu0
    %v1871 = vpop.f32.mrb[0].mxu0
    %v1872 = vpop.f32.mrb[0].mxu0
    %1873 = vdwg.mxu0
    %v1874 = vadd.f32 %v1519, %v948
    %v1875 = vadd.f32 %v1569, %v952
    %v1876 = vadd.f32 %v1619, %v956
    %v1877 = vadd.f32 %v1669, %v960
    %v1878 = vadd.f32 %v1719, %v964
    %v1879 = vadd.f32 %v1769, %v968
    %v1880 = vadd.f32 %v1819, %v972
    %v1881 = vadd.f32 %v1869, %v976
    %v1882 = vsel %vm562, %v1874, -inf
    %1883 = vmax.xlane.f32.xlu0 %v1882
    %v1884 = vpop.xlane.xlu0 %1883
    %v1885 = vsel %vm562, %v1875, -inf
    %1886 = vmax.xlane.f32.xlu0 %v1885
    %v1887 = vpop.xlane.xlu0 %1886
    %v1888 = vsel %vm562, %v1876, -inf
    %1889 = vmax.xlane.f32.xlu0 %v1888
    %v1890 = vpop.xlane.xlu0 %1889
    %v1891 = vsel %vm562, %v1877, -inf
    %1892 = vmax.xlane.f32.xlu0 %v1891
    %v1893 = vpop.xlane.xlu0 %1892
    %v1894 = vsel %vm562, %v1878, -inf
    %1895 = vmax.xlane.f32.xlu0 %v1894
    %v1896 = vpop.xlane.xlu0 %1895
    %v1897 = vsel %vm562, %v1879, -inf
    %1898 = vmax.xlane.f32.xlu0 %v1897
    %v1899 = vpop.xlane.xlu0 %1898
    %v1900 = vsel %vm562, %v1880, -inf
    %1901 = vmax.xlane.f32.xlu0 %v1900
    %v1902 = vpop.xlane.xlu0 %1901
    %v1903 = vsel %vm562, %v1881, -inf
    %1904 = vmax.xlane.f32.xlu0 %v1903
    %v1905 = vpop.xlane.xlu0 %1904
    %v1906 = vsub.f32 %v1874, %v1884
    %v1907 = vsub.f32 %v1875, %v1887
    %v1908 = vsub.f32 %v1876, %v1890
    %v1909 = vsub.f32 %v1877, %v1893
    %v1910 = vsub.f32 %v1878, %v1896
    %v1911 = vsub.f32 %v1879, %v1899
    %v1912 = vsub.f32 %v1880, %v1902
    %v1913 = vsub.f32 %v1881, %v1905
    %v1914 = vmul.f32 %v1906, 1.442695
    %v1915 = vpow.pop %v1914
    %v1916 = vmul.f32 %v1907, 1.442695
    %v1917 = vpow.pop %v1916
    %v1918 = vmul.f32 %v1908, 1.442695
    %v1919 = vpow.pop %v1918
    %v1920 = vmul.f32 %v1909, 1.442695
    %v1921 = vpow.pop %v1920
    %v1922 = vmul.f32 %v1910, 1.442695
    %v1923 = vpow.pop %v1922
    %v1924 = vmul.f32 %v1911, 1.442695
    %v1925 = vpow.pop %v1924
    %v1926 = vmul.f32 %v1912, 1.442695
    %v1927 = vpow.pop %v1926
    %v1928 = vmul.f32 %v1913, 1.442695
    %v1929 = vpow.pop %v1928
    %v1930 = vsel %vm562, %v1915, 0.0
    %1931 = vadd.xlane.f32.xlu0 %v1930
    %v1932 = vpop.xlane.xlu0 %1931
    %v1933 = vsel %vm562, %v1917, 0.0
    %1934 = vadd.xlane.f32.xlu0 %v1933
    %v1935 = vpop.xlane.xlu0 %1934
    %v1936 = vsel %vm562, %v1919, 0.0
    %1937 = vadd.xlane.f32.xlu0 %v1936
    %v1938 = vpop.xlane.xlu0 %1937
    %v1939 = vsel %vm562, %v1921, 0.0
    %1940 = vadd.xlane.f32.xlu0 %v1939
    %v1941 = vpop.xlane.xlu0 %1940
    %v1942 = vsel %vm562, %v1923, 0.0
    %1943 = vadd.xlane.f32.xlu0 %v1942
    %v1944 = vpop.xlane.xlu0 %1943
    %v1945 = vsel %vm562, %v1925, 0.0
    %1946 = vadd.xlane.f32.xlu0 %v1945
    %v1947 = vpop.xlane.xlu0 %1946
    %v1948 = vsel %vm562, %v1927, 0.0
    %1949 = vadd.xlane.f32.xlu0 %v1948
    %v1950 = vpop.xlane.xlu0 %1949
    %v1951 = vsel %vm562, %v1929, 0.0
    %1952 = vadd.xlane.f32.xlu0 %v1951
    %v1953 = vpop.xlane.xlu0 %1952
    %v1954 = vrcp.pop %v1932
    %v1955 = vrcp.pop %v1935
    %v1956 = vrcp.pop %v1938
    %v1957 = vrcp.pop %v1941
    %v1958 = vrcp.pop %v1944
    %v1959 = vrcp.pop %v1947
    %v1960 = vrcp.pop %v1950
    %v1961 = vrcp.pop %v1953
    %v1962 = vmul.f32 %v1915, %v1954
    %v1963 = vmul.f32 %v1917, %v1955
    %v1964 = vmul.f32 %v1919, %v1956
    %v1965 = vmul.f32 %v1921, %v1957
    %v1966 = vmul.f32 %v1923, %v1958
    %v1967 = vmul.f32 %v1925, %v1959
    %v1968 = vmul.f32 %v1927, %v1960
    %v1969 = vmul.f32 %v1929, %v1961
    %v1970 = vpack.c.bf16 %v1962, %v1962
    %v1971 = vpack.c.bf16 %v1963, %v1963
    %v1972 = vpack.c.bf16 %v1964, %v1964
    %v1973 = vpack.c.bf16 %v1965, %v1965
    %v1974 = vpack.c.bf16 %v1966, %v1966
    %v1975 = vpack.c.bf16 %v1967, %v1967
    %v1976 = vpack.c.bf16 %v1968, %v1968
    %v1977 = vpack.c.bf16 %v1969, %v1969
    %1978 = vrot.lane.b32.xlu0 %v552, 56
    %v1979 = vpop.permute.xlu0 %1978
    %v1981 = vsel %vm562, %v1970, 0
    %v1984 = vsel %vm1094, %v1979, 0
    %1986 = vmatprep.subr.bf16.mxu0 0
    %1987 = vmatpush1.bf16.msra.mxu0 %v1984
    %1988 = vmatprep.subr.bf16.mxu0 0
    %1989 = vmatpush1.bf16.msra.mxu0 0
    %1990 = vmatprep.subr.bf16.mxu0 0
    %1991 = vmatpush1.bf16.msra.mxu0 0
    %1992 = vmatprep.subr.bf16.mxu0 0
    %1993 = vmatpush1.bf16.msra.mxu0 0
    %1994 = vmatprep.subr.bf16.mxu0 0
    %1995 = vmatpush1.bf16.msra.mxu0 0
    %1996 = vmatprep.subr.bf16.mxu0 0
    %1997 = vmatpush1.bf16.msra.mxu0 0
    %1998 = vmatprep.subr.bf16.mxu0 0
    %1999 = vmatpush1.bf16.msra.mxu0 0
    %2000 = vmatprep.subr.bf16.mxu0 0
    %2001 = vmatpush1.bf16.msra.mxu0 0
    %2002 = vmatprep.subr.bf16.mxu0 0
    %2003 = vmatpush1.bf16.msra.mxu0 0
    %2004 = vmatprep.subr.bf16.mxu0 0
    %2005 = vmatpush1.bf16.msra.mxu0 0
    %2006 = vmatprep.subr.bf16.mxu0 0
    %2007 = vmatpush1.bf16.msra.mxu0 0
    %2008 = vmatprep.subr.bf16.mxu0 0
    %2009 = vmatpush1.bf16.msra.mxu0 0
    %2010 = vmatprep.subr.bf16.mxu0 0
    %2011 = vmatpush1.bf16.msra.mxu0 0
    %2012 = vmatprep.subr.bf16.mxu0 0
    %2013 = vmatpush1.bf16.msra.mxu0 0
    %2014 = vmatprep.subr.bf16.mxu0 0
    %2015 = vmatpush1.bf16.msra.mxu0 0
    %2016 = vmatprep.subr.bf16.mxu0 0
    %2017 = vmatpush1.bf16.msra.mxu0 0
    %2018 = vmatprep.mubr.bf16.mxu0 0
    %2019 = vmatmul.mubr.bf16.gmra.mrb[0].mxu0 %v1981
    %v2020 = vpop.f32.mrb[0].mxu0
    %v2021 = vadd.f32 0.0, %v2020
    %v2022 = vpop.f32.mrb[0].mxu0
    %v2023 = vpop.f32.mrb[0].mxu0
    %v2024 = vpop.f32.mrb[0].mxu0
    %2025 = vdwg.mxu0
    %2026 = vrot.lane.b32.xlu0 %v553, 56
    %v2027 = vpop.permute.xlu0 %2026
    %v2029 = vsel %vm562, %v1971, 0
    %v2032 = vsel %vm1094, %v2027, 0
    %2034 = vmatprep.subr.bf16.mxu0 0
    %2035 = vmatpush1.bf16.msra.mxu0 %v2032
    %2036 = vmatprep.subr.bf16.mxu0 0
    %2037 = vmatpush1.bf16.msra.mxu0 0
    %2038 = vmatprep.subr.bf16.mxu0 0
    %2039 = vmatpush1.bf16.msra.mxu0 0
    %2040 = vmatprep.subr.bf16.mxu0 0
    %2041 = vmatpush1.bf16.msra.mxu0 0
    %2042 = vmatprep.subr.bf16.mxu0 0
    %2043 = vmatpush1.bf16.msra.mxu0 0
    %2044 = vmatprep.subr.bf16.mxu0 0
    %2045 = vmatpush1.bf16.msra.mxu0 0
    %2046 = vmatprep.subr.bf16.mxu0 0
    %2047 = vmatpush1.bf16.msra.mxu0 0
    %2048 = vmatprep.subr.bf16.mxu0 0
    %2049 = vmatpush1.bf16.msra.mxu0 0
    %2050 = vmatprep.subr.bf16.mxu0 0
    %2051 = vmatpush1.bf16.msra.mxu0 0
    %2052 = vmatprep.subr.bf16.mxu0 0
    %2053 = vmatpush1.bf16.msra.mxu0 0
    %2054 = vmatprep.subr.bf16.mxu0 0
    %2055 = vmatpush1.bf16.msra.mxu0 0
    %2056 = vmatprep.subr.bf16.mxu0 0
    %2057 = vmatpush1.bf16.msra.mxu0 0
    %2058 = vmatprep.subr.bf16.mxu0 0
    %2059 = vmatpush1.bf16.msra.mxu0 0
    %2060 = vmatprep.subr.bf16.mxu0 0
    %2061 = vmatpush1.bf16.msra.mxu0 0
    %2062 = vmatprep.subr.bf16.mxu0 0
    %2063 = vmatpush1.bf16.msra.mxu0 0
    %2064 = vmatprep.subr.bf16.mxu0 0
    %2065 = vmatpush1.bf16.msra.mxu0 0
    %2066 = vmatprep.mubr.bf16.mxu0 0
    %2067 = vmatmul.mubr.bf16.gmra.mrb[0].mxu0 %v2029
    %v2068 = vpop.f32.mrb[0].mxu0
    %v2069 = vadd.f32 0.0, %v2068
    %v2070 = vpop.f32.mrb[0].mxu0
    %v2071 = vpop.f32.mrb[0].mxu0
    %v2072 = vpop.f32.mrb[0].mxu0
    %2073 = vdwg.mxu0
    %2074 = vrot.lane.b32.xlu0 %v554, 56
    %v2075 = vpop.permute.xlu0 %2074
    %v2077 = vsel %vm562, %v1972, 0
    %v2080 = vsel %vm1094, %v2075, 0
    %2082 = vmatprep.subr.bf16.mxu0 0
    %2083 = vmatpush1.bf16.msra.mxu0 %v2080
    %2084 = vmatprep.subr.bf16.mxu0 0
    %2085 = vmatpush1.bf16.msra.mxu0 0
    %2086 = vmatprep.subr.bf16.mxu0 0
    %2087 = vmatpush1.bf16.msra.mxu0 0
    %2088 = vmatprep.subr.bf16.mxu0 0
    %2089 = vmatpush1.bf16.msra.mxu0 0
    %2090 = vmatprep.subr.bf16.mxu0 0
    %2091 = vmatpush1.bf16.msra.mxu0 0
    %2092 = vmatprep.subr.bf16.mxu0 0
    %2093 = vmatpush1.bf16.msra.mxu0 0
    %2094 = vmatprep.subr.bf16.mxu0 0
    %2095 = vmatpush1.bf16.msra.mxu0 0
    %2096 = vmatprep.subr.bf16.mxu0 0
    %2097 = vmatpush1.bf16.msra.mxu0 0
    %2098 = vmatprep.subr.bf16.mxu0 0
    %2099 = vmatpush1.bf16.msra.mxu0 0
    %2100 = vmatprep.subr.bf16.mxu0 0
    %2101 = vmatpush1.bf16.msra.mxu0 0
    %2102 = vmatprep.subr.bf16.mxu0 0
    %2103 = vmatpush1.bf16.msra.mxu0 0
    %2104 = vmatprep.subr.bf16.mxu0 0
    %2105 = vmatpush1.bf16.msra.mxu0 0
    %2106 = vmatprep.subr.bf16.mxu0 0
    %2107 = vmatpush1.bf16.msra.mxu0 0
    %2108 = vmatprep.subr.bf16.mxu0 0
    %2109 = vmatpush1.bf16.msra.mxu0 0
    %2110 = vmatprep.subr.bf16.mxu0 0
    %2111 = vmatpush1.bf16.msra.mxu0 0
    %2112 = vmatprep.subr.bf16.mxu0 0
    %2113 = vmatpush1.bf16.msra.mxu0 0
    %2114 = vmatprep.mubr.bf16.mxu0 0
    %2115 = vmatmul.mubr.bf16.gmra.mrb[0].mxu0 %v2077
    %v2116 = vpop.f32.mrb[0].mxu0
    %v2117 = vadd.f32 0.0, %v2116
    %v2118 = vpop.f32.mrb[0].mxu0
    %v2119 = vpop.f32.mrb[0].mxu0
    %v2120 = vpop.f32.mrb[0].mxu0
    %2121 = vdwg.mxu0
    %2122 = vrot.lane.b32.xlu0 %v555, 56
    %v2123 = vpop.permute.xlu0 %2122
    %v2125 = vsel %vm562, %v1973, 0
    %v2128 = vsel %vm1094, %v2123, 0
    %2130 = vmatprep.subr.bf16.mxu0 0
    %2131 = vmatpush1.bf16.msra.mxu0 %v2128
    %2132 = vmatprep.subr.bf16.mxu0 0
    %2133 = vmatpush1.bf16.msra.mxu0 0
    %2134 = vmatprep.subr.bf16.mxu0 0
    %2135 = vmatpush1.bf16.msra.mxu0 0
    %2136 = vmatprep.subr.bf16.mxu0 0
    %2137 = vmatpush1.bf16.msra.mxu0 0
    %2138 = vmatprep.subr.bf16.mxu0 0
    %2139 = vmatpush1.bf16.msra.mxu0 0
    %2140 = vmatprep.subr.bf16.mxu0 0
    %2141 = vmatpush1.bf16.msra.mxu0 0
    %2142 = vmatprep.subr.bf16.mxu0 0
    %2143 = vmatpush1.bf16.msra.mxu0 0
    %2144 = vmatprep.subr.bf16.mxu0 0
    %2145 = vmatpush1.bf16.msra.mxu0 0
    %2146 = vmatprep.subr.bf16.mxu0 0
    %2147 = vmatpush1.bf16.msra.mxu0 0
    %2148 = vmatprep.subr.bf16.mxu0 0
    %2149 = vmatpush1.bf16.msra.mxu0 0
    %2150 = vmatprep.subr.bf16.mxu0 0
    %2151 = vmatpush1.bf16.msra.mxu0 0
    %2152 = vmatprep.subr.bf16.mxu0 0
    %2153 = vmatpush1.bf16.msra.mxu0 0
    %2154 = vmatprep.subr.bf16.mxu0 0
    %2155 = vmatpush1.bf16.msra.mxu0 0
    %2156 = vmatprep.subr.bf16.mxu0 0
    %2157 = vmatpush1.bf16.msra.mxu0 0
    %2158 = vmatprep.subr.bf16.mxu0 0
    %2159 = vmatpush1.bf16.msra.mxu0 0
    %2160 = vmatprep.subr.bf16.mxu0 0
    %2161 = vmatpush1.bf16.msra.mxu0 0
    %2162 = vmatprep.mubr.bf16.mxu0 0
    %2163 = vmatmul.mubr.bf16.gmra.mrb[0].mxu0 %v2125
    %v2164 = vpop.f32.mrb[0].mxu0
    %v2165 = vadd.f32 0.0, %v2164
    %v2166 = vpop.f32.mrb[0].mxu0
    %v2167 = vpop.f32.mrb[0].mxu0
    %v2168 = vpop.f32.mrb[0].mxu0
    %2169 = vdwg.mxu0
    %2170 = vrot.lane.b32.xlu0 %v556, 56
    %v2171 = vpop.permute.xlu0 %2170
    %v2173 = vsel %vm562, %v1974, 0
    %v2176 = vsel %vm1094, %v2171, 0
    %2178 = vmatprep.subr.bf16.mxu0 0
    %2179 = vmatpush1.bf16.msra.mxu0 %v2176
    %2180 = vmatprep.subr.bf16.mxu0 0
    %2181 = vmatpush1.bf16.msra.mxu0 0
    %2182 = vmatprep.subr.bf16.mxu0 0
    %2183 = vmatpush1.bf16.msra.mxu0 0
    %2184 = vmatprep.subr.bf16.mxu0 0
    %2185 = vmatpush1.bf16.msra.mxu0 0
    %2186 = vmatprep.subr.bf16.mxu0 0
    %2187 = vmatpush1.bf16.msra.mxu0 0
    %2188 = vmatprep.subr.bf16.mxu0 0
    %2189 = vmatpush1.bf16.msra.mxu0 0
    %2190 = vmatprep.subr.bf16.mxu0 0
    %2191 = vmatpush1.bf16.msra.mxu0 0
    %2192 = vmatprep.subr.bf16.mxu0 0
    %2193 = vmatpush1.bf16.msra.mxu0 0
    %2194 = vmatprep.subr.bf16.mxu0 0
    %2195 = vmatpush1.bf16.msra.mxu0 0
    %2196 = vmatprep.subr.bf16.mxu0 0
    %2197 = vmatpush1.bf16.msra.mxu0 0
    %2198 = vmatprep.subr.bf16.mxu0 0
    %2199 = vmatpush1.bf16.msra.mxu0 0
    %2200 = vmatprep.subr.bf16.mxu0 0
    %2201 = vmatpush1.bf16.msra.mxu0 0
    %2202 = vmatprep.subr.bf16.mxu0 0
    %2203 = vmatpush1.bf16.msra.mxu0 0
    %2204 = vmatprep.subr.bf16.mxu0 0
    %2205 = vmatpush1.bf16.msra.mxu0 0
    %2206 = vmatprep.subr.bf16.mxu0 0
    %2207 = vmatpush1.bf16.msra.mxu0 0
    %2208 = vmatprep.subr.bf16.mxu0 0
    %2209 = vmatpush1.bf16.msra.mxu0 0
    %2210 = vmatprep.mubr.bf16.mxu0 0
    %2211 = vmatmul.mubr.bf16.gmra.mrb[0].mxu0 %v2173
    %v2212 = vpop.f32.mrb[0].mxu0
    %v2213 = vadd.f32 0.0, %v2212
    %v2214 = vpop.f32.mrb[0].mxu0
    %v2215 = vpop.f32.mrb[0].mxu0
    %v2216 = vpop.f32.mrb[0].mxu0
    %2217 = vdwg.mxu0
    %2218 = vrot.lane.b32.xlu0 %v557, 56
    %v2219 = vpop.permute.xlu0 %2218
    %v2221 = vsel %vm562, %v1975, 0
    %v2224 = vsel %vm1094, %v2219, 0
    %2226 = vmatprep.subr.bf16.mxu0 0
    %2227 = vmatpush1.bf16.msra.mxu0 %v2224
    %2228 = vmatprep.subr.bf16.mxu0 0
    %2229 = vmatpush1.bf16.msra.mxu0 0
    %2230 = vmatprep.subr.bf16.mxu0 0
    %2231 = vmatpush1.bf16.msra.mxu0 0
    %2232 = vmatprep.subr.bf16.mxu0 0
    %2233 = vmatpush1.bf16.msra.mxu0 0
    %2234 = vmatprep.subr.bf16.mxu0 0
    %2235 = vmatpush1.bf16.msra.mxu0 0
    %2236 = vmatprep.subr.bf16.mxu0 0
    %2237 = vmatpush1.bf16.msra.mxu0 0
    %2238 = vmatprep.subr.bf16.mxu0 0
    %2239 = vmatpush1.bf16.msra.mxu0 0
    %2240 = vmatprep.subr.bf16.mxu0 0
    %2241 = vmatpush1.bf16.msra.mxu0 0
    %2242 = vmatprep.subr.bf16.mxu0 0
    %2243 = vmatpush1.bf16.msra.mxu0 0
    %2244 = vmatprep.subr.bf16.mxu0 0
    %2245 = vmatpush1.bf16.msra.mxu0 0
    %2246 = vmatprep.subr.bf16.mxu0 0
    %2247 = vmatpush1.bf16.msra.mxu0 0
    %2248 = vmatprep.subr.bf16.mxu0 0
    %2249 = vmatpush1.bf16.msra.mxu0 0
    %2250 = vmatprep.subr.bf16.mxu0 0
    %2251 = vmatpush1.bf16.msra.mxu0 0
    %2252 = vmatprep.subr.bf16.mxu0 0
    %2253 = vmatpush1.bf16.msra.mxu0 0
    %2254 = vmatprep.subr.bf16.mxu0 0
    %2255 = vmatpush1.bf16.msra.mxu0 0
    %2256 = vmatprep.subr.bf16.mxu0 0
    %2257 = vmatpush1.bf16.msra.mxu0 0
    %2258 = vmatprep.mubr.bf16.mxu0 0
    %2259 = vmatmul.mubr.bf16.gmra.mrb[0].mxu0 %v2221
    %v2260 = vpop.f32.mrb[0].mxu0
    %v2261 = vadd.f32 0.0, %v2260
    %v2262 = vpop.f32.mrb[0].mxu0
    %v2263 = vpop.f32.mrb[0].mxu0
    %v2264 = vpop.f32.mrb[0].mxu0
    %2265 = vdwg.mxu0
    %2266 = vrot.lane.b32.xlu0 %v558, 56
    %v2267 = vpop.permute.xlu0 %2266
    %v2269 = vsel %vm562, %v1976, 0
    %v2272 = vsel %vm1094, %v2267, 0
    %2274 = vmatprep.subr.bf16.mxu0 0
    %2275 = vmatpush1.bf16.msra.mxu0 %v2272
    %2276 = vmatprep.subr.bf16.mxu0 0
    %2277 = vmatpush1.bf16.msra.mxu0 0
    %2278 = vmatprep.subr.bf16.mxu0 0
    %2279 = vmatpush1.bf16.msra.mxu0 0
    %2280 = vmatprep.subr.bf16.mxu0 0
    %2281 = vmatpush1.bf16.msra.mxu0 0
    %2282 = vmatprep.subr.bf16.mxu0 0
    %2283 = vmatpush1.bf16.msra.mxu0 0
    %2284 = vmatprep.subr.bf16.mxu0 0
    %2285 = vmatpush1.bf16.msra.mxu0 0
    %2286 = vmatprep.subr.bf16.mxu0 0
    %2287 = vmatpush1.bf16.msra.mxu0 0
    %2288 = vmatprep.subr.bf16.mxu0 0
    %2289 = vmatpush1.bf16.msra.mxu0 0
    %2290 = vmatprep.subr.bf16.mxu0 0
    %2291 = vmatpush1.bf16.msra.mxu0 0
    %2292 = vmatprep.subr.bf16.mxu0 0
    %2293 = vmatpush1.bf16.msra.mxu0 0
    %2294 = vmatprep.subr.bf16.mxu0 0
    %2295 = vmatpush1.bf16.msra.mxu0 0
    %2296 = vmatprep.subr.bf16.mxu0 0
    %2297 = vmatpush1.bf16.msra.mxu0 0
    %2298 = vmatprep.subr.bf16.mxu0 0
    %2299 = vmatpush1.bf16.msra.mxu0 0
    %2300 = vmatprep.subr.bf16.mxu0 0
    %2301 = vmatpush1.bf16.msra.mxu0 0
    %2302 = vmatprep.subr.bf16.mxu0 0
    %2303 = vmatpush1.bf16.msra.mxu0 0
    %2304 = vmatprep.subr.bf16.mxu0 0
    %2305 = vmatpush1.bf16.msra.mxu0 0
    %2306 = vmatprep.mubr.bf16.mxu0 0
    %2307 = vmatmul.mubr.bf16.gmra.mrb[0].mxu0 %v2269
    %v2308 = vpop.f32.mrb[0].mxu0
    %v2309 = vadd.f32 0.0, %v2308
    %v2310 = vpop.f32.mrb[0].mxu0
    %v2311 = vpop.f32.mrb[0].mxu0
    %v2312 = vpop.f32.mrb[0].mxu0
    %2313 = vdwg.mxu0
    %2314 = vrot.lane.b32.xlu0 %v559, 56
    %v2315 = vpop.permute.xlu0 %2314
    %v2317 = vsel %vm562, %v1977, 0
    %v2320 = vsel %vm1094, %v2315, 0
    %2322 = vmatprep.subr.bf16.mxu0 0
    %2323 = vmatpush1.bf16.msra.mxu0 %v2320
    %2324 = vmatprep.subr.bf16.mxu0 0
    %2325 = vmatpush1.bf16.msra.mxu0 0
    %2326 = vmatprep.subr.bf16.mxu0 0
    %2327 = vmatpush1.bf16.msra.mxu0 0
    %2328 = vmatprep.subr.bf16.mxu0 0
    %2329 = vmatpush1.bf16.msra.mxu0 0
    %2330 = vmatprep.subr.bf16.mxu0 0
    %2331 = vmatpush1.bf16.msra.mxu0 0
    %2332 = vmatprep.subr.bf16.mxu0 0
    %2333 = vmatpush1.bf16.msra.mxu0 0
    %2334 = vmatprep.subr.bf16.mxu0 0
    %2335 = vmatpush1.bf16.msra.mxu0 0
    %2336 = vmatprep.subr.bf16.mxu0 0
    %2337 = vmatpush1.bf16.msra.mxu0 0
    %2338 = vmatprep.subr.bf16.mxu0 0
    %2339 = vmatpush1.bf16.msra.mxu0 0
    %2340 = vmatprep.subr.bf16.mxu0 0
    %2341 = vmatpush1.bf16.msra.mxu0 0
    %2342 = vmatprep.subr.bf16.mxu0 0
    %2343 = vmatpush1.bf16.msra.mxu0 0
    %2344 = vmatprep.subr.bf16.mxu0 0
    %2345 = vmatpush1.bf16.msra.mxu0 0
    %2346 = vmatprep.subr.bf16.mxu0 0
    %2347 = vmatpush1.bf16.msra.mxu0 0
    %2348 = vmatprep.subr.bf16.mxu0 0
    %2349 = vmatpush1.bf16.msra.mxu0 0
    %2350 = vmatprep.subr.bf16.mxu0 0
    %2351 = vmatpush1.bf16.msra.mxu0 0
    %2352 = vmatprep.subr.bf16.mxu0 0
    %2353 = vmatpush1.bf16.msra.mxu0 0
    %2354 = vmatprep.mubr.bf16.mxu0 0
    %2355 = vmatmul.mubr.bf16.gmra.mrb[0].mxu0 %v2317
    %v2356 = vpop.f32.mrb[0].mxu0
    %v2357 = vadd.f32 0.0, %v2356
    %v2358 = vpop.f32.mrb[0].mxu0
    %v2359 = vpop.f32.mrb[0].mxu0
    %v2360 = vpop.f32.mrb[0].mxu0
    %2361 = vdwg.mxu0
    %2362 = vrot.lane.b32.xlu0 %v552, 112
    %v2363 = vpop.permute.xlu0 %2362
    %2364 = vrot.lane.b32.xlu0 %v552, 80
    %v2365 = vpop.permute.xlu0 %2364
    %v2367 = vsel %vm562, %v2363, 0
    %v2370 = vsel %vm562, %v2365, 0
    %2372 = vmatprep.subr.bf16.mxu0 0
    %2373 = vmatpush1.bf16.xpose.msra.mxu0 %v2370
    %2374 = vmatprep.subr.bf16.mxu0 0
    %2375 = vmatpush1.bf16.xpose.msra.mxu0 0
    %2376 = vmatprep.subr.bf16.mxu0 0
    %2377 = vmatpush1.bf16.xpose.msra.mxu0 0
    %2378 = vmatprep.subr.bf16.mxu0 0
    %2379 = vmatpush1.bf16.xpose.msra.mxu0 0
    %2380 = vmatprep.subr.bf16.mxu0 0
    %2381 = vmatpush1.bf16.xpose.msra.mxu0 0
    %2382 = vmatprep.subr.bf16.mxu0 0
    %2383 = vmatpush1.bf16.xpose.msra.mxu0 0
    %2384 = vmatprep.subr.bf16.mxu0 0
    %2385 = vmatpush1.bf16.xpose.msra.mxu0 0
    %2386 = vmatprep.subr.bf16.mxu0 0
    %2387 = vmatpush1.bf16.xpose.msra.mxu0 0
    %2388 = vmatprep.subr.bf16.mxu0 0
    %2389 = vmatpush1.bf16.xpose.msra.mxu0 0
    %2390 = vmatprep.subr.bf16.mxu0 0
    %2391 = vmatpush1.bf16.xpose.msra.mxu0 0
    %2392 = vmatprep.subr.bf16.mxu0 0
    %2393 = vmatpush1.bf16.xpose.msra.mxu0 0
    %2394 = vmatprep.subr.bf16.mxu0 0
    %2395 = vmatpush1.bf16.xpose.msra.mxu0 0
    %2396 = vmatprep.subr.bf16.mxu0 0
    %2397 = vmatpush1.bf16.xpose.msra.mxu0 0
    %2398 = vmatprep.subr.bf16.mxu0 0
    %2399 = vmatpush1.bf16.xpose.msra.mxu0 0
    %2400 = vmatprep.subr.bf16.mxu0 0
    %2401 = vmatpush1.bf16.xpose.msra.mxu0 0
    %2402 = vmatprep.subr.bf16.mxu0 0
    %2403 = vmatpush1.bf16.xpose.msra.mxu0 0
    %2404 = vmatprep.mubr.bf16.mxu0 0
    %2405 = vmatmul.mubr.bf16.gmra.mrb[0].mxu0 %v2367
    %v2406 = vpop.f32.mrb[0].mxu0
    %v2407 = vadd.f32 %v315, %v2406
    %v2408 = vpop.f32.mrb[0].mxu0
    %v2409 = vpop.f32.mrb[0].mxu0
    %v2410 = vpop.f32.mrb[0].mxu0
    %2411 = vdwg.mxu0
    %2412 = vrot.lane.b32.xlu0 %v553, 112
    %v2413 = vpop.permute.xlu0 %2412
    %2414 = vrot.lane.b32.xlu0 %v553, 80
    %v2415 = vpop.permute.xlu0 %2414
    %v2417 = vsel %vm562, %v2413, 0
    %v2420 = vsel %vm562, %v2415, 0
    %2422 = vmatprep.subr.bf16.mxu0 0
    %2423 = vmatpush1.bf16.xpose.msra.mxu0 %v2420
    %2424 = vmatprep.subr.bf16.mxu0 0
    %2425 = vmatpush1.bf16.xpose.msra.mxu0 0
    %2426 = vmatprep.subr.bf16.mxu0 0
    %2427 = vmatpush1.bf16.xpose.msra.mxu0 0
    %2428 = vmatprep.subr.bf16.mxu0 0
    %2429 = vmatpush1.bf16.xpose.msra.mxu0 0
    %2430 = vmatprep.subr.bf16.mxu0 0
    %2431 = vmatpush1.bf16.xpose.msra.mxu0 0
    %2432 = vmatprep.subr.bf16.mxu0 0
    %2433 = vmatpush1.bf16.xpose.msra.mxu0 0
    %2434 = vmatprep.subr.bf16.mxu0 0
    %2435 = vmatpush1.bf16.xpose.msra.mxu0 0
    %2436 = vmatprep.subr.bf16.mxu0 0
    %2437 = vmatpush1.bf16.xpose.msra.mxu0 0
    %2438 = vmatprep.subr.bf16.mxu0 0
    %2439 = vmatpush1.bf16.xpose.msra.mxu0 0
    %2440 = vmatprep.subr.bf16.mxu0 0
    %2441 = vmatpush1.bf16.xpose.msra.mxu0 0
    %2442 = vmatprep.subr.bf16.mxu0 0
    %2443 = vmatpush1.bf16.xpose.msra.mxu0 0
    %2444 = vmatprep.subr.bf16.mxu0 0
    %2445 = vmatpush1.bf16.xpose.msra.mxu0 0
    %2446 = vmatprep.subr.bf16.mxu0 0
    %2447 = vmatpush1.bf16.xpose.msra.mxu0 0
    %2448 = vmatprep.subr.bf16.mxu0 0
    %2449 = vmatpush1.bf16.xpose.msra.mxu0 0
    %2450 = vmatprep.subr.bf16.mxu0 0
    %2451 = vmatpush1.bf16.xpose.msra.mxu0 0
    %2452 = vmatprep.subr.bf16.mxu0 0
    %2453 = vmatpush1.bf16.xpose.msra.mxu0 0
    %2454 = vmatprep.mubr.bf16.mxu0 0
    %2455 = vmatmul.mubr.bf16.gmra.mrb[0].mxu0 %v2417
    %v2456 = vpop.f32.mrb[0].mxu0
    %v2457 = vadd.f32 %v315, %v2456
    %v2458 = vpop.f32.mrb[0].mxu0
    %v2459 = vpop.f32.mrb[0].mxu0
    %v2460 = vpop.f32.mrb[0].mxu0
    %2461 = vdwg.mxu0
    %2462 = vrot.lane.b32.xlu0 %v554, 112
    %v2463 = vpop.permute.xlu0 %2462
    %2464 = vrot.lane.b32.xlu0 %v554, 80
    %v2465 = vpop.permute.xlu0 %2464
    %v2467 = vsel %vm562, %v2463, 0
    %v2470 = vsel %vm562, %v2465, 0
    %2472 = vmatprep.subr.bf16.mxu0 0
    %2473 = vmatpush1.bf16.xpose.msra.mxu0 %v2470
    %2474 = vmatprep.subr.bf16.mxu0 0
    %2475 = vmatpush1.bf16.xpose.msra.mxu0 0
    %2476 = vmatprep.subr.bf16.mxu0 0
    %2477 = vmatpush1.bf16.xpose.msra.mxu0 0
    %2478 = vmatprep.subr.bf16.mxu0 0
    %2479 = vmatpush1.bf16.xpose.msra.mxu0 0
    %2480 = vmatprep.subr.bf16.mxu0 0
    %2481 = vmatpush1.bf16.xpose.msra.mxu0 0
    %2482 = vmatprep.subr.bf16.mxu0 0
    %2483 = vmatpush1.bf16.xpose.msra.mxu0 0
    %2484 = vmatprep.subr.bf16.mxu0 0
    %2485 = vmatpush1.bf16.xpose.msra.mxu0 0
    %2486 = vmatprep.subr.bf16.mxu0 0
    %2487 = vmatpush1.bf16.xpose.msra.mxu0 0
    %2488 = vmatprep.subr.bf16.mxu0 0
    %2489 = vmatpush1.bf16.xpose.msra.mxu0 0
    %2490 = vmatprep.subr.bf16.mxu0 0
    %2491 = vmatpush1.bf16.xpose.msra.mxu0 0
    %2492 = vmatprep.subr.bf16.mxu0 0
    %2493 = vmatpush1.bf16.xpose.msra.mxu0 0
    %2494 = vmatprep.subr.bf16.mxu0 0
    %2495 = vmatpush1.bf16.xpose.msra.mxu0 0
    %2496 = vmatprep.subr.bf16.mxu0 0
    %2497 = vmatpush1.bf16.xpose.msra.mxu0 0
    %2498 = vmatprep.subr.bf16.mxu0 0
    %2499 = vmatpush1.bf16.xpose.msra.mxu0 0
    %2500 = vmatprep.subr.bf16.mxu0 0
    %2501 = vmatpush1.bf16.xpose.msra.mxu0 0
    %2502 = vmatprep.subr.bf16.mxu0 0
    %2503 = vmatpush1.bf16.xpose.msra.mxu0 0
    %2504 = vmatprep.mubr.bf16.mxu0 0
    %2505 = vmatmul.mubr.bf16.gmra.mrb[0].mxu0 %v2467
    %v2506 = vpop.f32.mrb[0].mxu0
    %v2507 = vadd.f32 %v315, %v2506
    %v2508 = vpop.f32.mrb[0].mxu0
    %v2509 = vpop.f32.mrb[0].mxu0
    %v2510 = vpop.f32.mrb[0].mxu0
    %2511 = vdwg.mxu0
    %2512 = vrot.lane.b32.xlu0 %v555, 112
    %v2513 = vpop.permute.xlu0 %2512
    %2514 = vrot.lane.b32.xlu0 %v555, 80
    %v2515 = vpop.permute.xlu0 %2514
    %v2517 = vsel %vm562, %v2513, 0
    %v2520 = vsel %vm562, %v2515, 0
    %2522 = vmatprep.subr.bf16.mxu0 0
    %2523 = vmatpush1.bf16.xpose.msra.mxu0 %v2520
    %2524 = vmatprep.subr.bf16.mxu0 0
    %2525 = vmatpush1.bf16.xpose.msra.mxu0 0
    %2526 = vmatprep.subr.bf16.mxu0 0
    %2527 = vmatpush1.bf16.xpose.msra.mxu0 0
    %2528 = vmatprep.subr.bf16.mxu0 0
    %2529 = vmatpush1.bf16.xpose.msra.mxu0 0
    %2530 = vmatprep.subr.bf16.mxu0 0
    %2531 = vmatpush1.bf16.xpose.msra.mxu0 0
    %2532 = vmatprep.subr.bf16.mxu0 0
    %2533 = vmatpush1.bf16.xpose.msra.mxu0 0
    %2534 = vmatprep.subr.bf16.mxu0 0
    %2535 = vmatpush1.bf16.xpose.msra.mxu0 0
    %2536 = vmatprep.subr.bf16.mxu0 0
    %2537 = vmatpush1.bf16.xpose.msra.mxu0 0
    %2538 = vmatprep.subr.bf16.mxu0 0
    %2539 = vmatpush1.bf16.xpose.msra.mxu0 0
    %2540 = vmatprep.subr.bf16.mxu0 0
    %2541 = vmatpush1.bf16.xpose.msra.mxu0 0
    %2542 = vmatprep.subr.bf16.mxu0 0
    %2543 = vmatpush1.bf16.xpose.msra.mxu0 0
    %2544 = vmatprep.subr.bf16.mxu0 0
    %2545 = vmatpush1.bf16.xpose.msra.mxu0 0
    %2546 = vmatprep.subr.bf16.mxu0 0
    %2547 = vmatpush1.bf16.xpose.msra.mxu0 0
    %2548 = vmatprep.subr.bf16.mxu0 0
    %2549 = vmatpush1.bf16.xpose.msra.mxu0 0
    %2550 = vmatprep.subr.bf16.mxu0 0
    %2551 = vmatpush1.bf16.xpose.msra.mxu0 0
    %2552 = vmatprep.subr.bf16.mxu0 0
    %2553 = vmatpush1.bf16.xpose.msra.mxu0 0
    %2554 = vmatprep.mubr.bf16.mxu0 0
    %2555 = vmatmul.mubr.bf16.gmra.mrb[0].mxu0 %v2517
    %v2556 = vpop.f32.mrb[0].mxu0
    %v2557 = vadd.f32 %v315, %v2556
    %v2558 = vpop.f32.mrb[0].mxu0
    %v2559 = vpop.f32.mrb[0].mxu0
    %v2560 = vpop.f32.mrb[0].mxu0
    %2561 = vdwg.mxu0
    %2562 = vrot.lane.b32.xlu0 %v556, 112
    %v2563 = vpop.permute.xlu0 %2562
    %2564 = vrot.lane.b32.xlu0 %v556, 80
    %v2565 = vpop.permute.xlu0 %2564
    %v2567 = vsel %vm562, %v2563, 0
    %v2570 = vsel %vm562, %v2565, 0
    %2572 = vmatprep.subr.bf16.mxu0 0
    %2573 = vmatpush1.bf16.xpose.msra.mxu0 %v2570
    %2574 = vmatprep.subr.bf16.mxu0 0
    %2575 = vmatpush1.bf16.xpose.msra.mxu0 0
    %2576 = vmatprep.subr.bf16.mxu0 0
    %2577 = vmatpush1.bf16.xpose.msra.mxu0 0
    %2578 = vmatprep.subr.bf16.mxu0 0
    %2579 = vmatpush1.bf16.xpose.msra.mxu0 0
    %2580 = vmatprep.subr.bf16.mxu0 0
    %2581 = vmatpush1.bf16.xpose.msra.mxu0 0
    %2582 = vmatprep.subr.bf16.mxu0 0
    %2583 = vmatpush1.bf16.xpose.msra.mxu0 0
    %2584 = vmatprep.subr.bf16.mxu0 0
    %2585 = vmatpush1.bf16.xpose.msra.mxu0 0
    %2586 = vmatprep.subr.bf16.mxu0 0
    %2587 = vmatpush1.bf16.xpose.msra.mxu0 0
    %2588 = vmatprep.subr.bf16.mxu0 0
    %2589 = vmatpush1.bf16.xpose.msra.mxu0 0
    %2590 = vmatprep.subr.bf16.mxu0 0
    %2591 = vmatpush1.bf16.xpose.msra.mxu0 0
    %2592 = vmatprep.subr.bf16.mxu0 0
    %2593 = vmatpush1.bf16.xpose.msra.mxu0 0
    %2594 = vmatprep.subr.bf16.mxu0 0
    %2595 = vmatpush1.bf16.xpose.msra.mxu0 0
    %2596 = vmatprep.subr.bf16.mxu0 0
    %2597 = vmatpush1.bf16.xpose.msra.mxu0 0
    %2598 = vmatprep.subr.bf16.mxu0 0
    %2599 = vmatpush1.bf16.xpose.msra.mxu0 0
    %2600 = vmatprep.subr.bf16.mxu0 0
    %2601 = vmatpush1.bf16.xpose.msra.mxu0 0
    %2602 = vmatprep.subr.bf16.mxu0 0
    %2603 = vmatpush1.bf16.xpose.msra.mxu0 0
    %2604 = vmatprep.mubr.bf16.mxu0 0
    %2605 = vmatmul.mubr.bf16.gmra.mrb[0].mxu0 %v2567
    %v2606 = vpop.f32.mrb[0].mxu0
    %v2607 = vadd.f32 %v315, %v2606
    %v2608 = vpop.f32.mrb[0].mxu0
    %v2609 = vpop.f32.mrb[0].mxu0
    %v2610 = vpop.f32.mrb[0].mxu0
    %2611 = vdwg.mxu0
    %2612 = vrot.lane.b32.xlu0 %v557, 112
    %v2613 = vpop.permute.xlu0 %2612
    %2614 = vrot.lane.b32.xlu0 %v557, 80
    %v2615 = vpop.permute.xlu0 %2614
    %v2617 = vsel %vm562, %v2613, 0
    %v2620 = vsel %vm562, %v2615, 0
    %2622 = vmatprep.subr.bf16.mxu0 0
    %2623 = vmatpush1.bf16.xpose.msra.mxu0 %v2620
    %2624 = vmatprep.subr.bf16.mxu0 0
    %2625 = vmatpush1.bf16.xpose.msra.mxu0 0
    %2626 = vmatprep.subr.bf16.mxu0 0
    %2627 = vmatpush1.bf16.xpose.msra.mxu0 0
    %2628 = vmatprep.subr.bf16.mxu0 0
    %2629 = vmatpush1.bf16.xpose.msra.mxu0 0
    %2630 = vmatprep.subr.bf16.mxu0 0
    %2631 = vmatpush1.bf16.xpose.msra.mxu0 0
    %2632 = vmatprep.subr.bf16.mxu0 0
    %2633 = vmatpush1.bf16.xpose.msra.mxu0 0
    %2634 = vmatprep.subr.bf16.mxu0 0
    %2635 = vmatpush1.bf16.xpose.msra.mxu0 0
    %2636 = vmatprep.subr.bf16.mxu0 0
    %2637 = vmatpush1.bf16.xpose.msra.mxu0 0
    %2638 = vmatprep.subr.bf16.mxu0 0
    %2639 = vmatpush1.bf16.xpose.msra.mxu0 0
    %2640 = vmatprep.subr.bf16.mxu0 0
    %2641 = vmatpush1.bf16.xpose.msra.mxu0 0
    %2642 = vmatprep.subr.bf16.mxu0 0
    %2643 = vmatpush1.bf16.xpose.msra.mxu0 0
    %2644 = vmatprep.subr.bf16.mxu0 0
    %2645 = vmatpush1.bf16.xpose.msra.mxu0 0
    %2646 = vmatprep.subr.bf16.mxu0 0
    %2647 = vmatpush1.bf16.xpose.msra.mxu0 0
    %2648 = vmatprep.subr.bf16.mxu0 0
    %2649 = vmatpush1.bf16.xpose.msra.mxu0 0
    %2650 = vmatprep.subr.bf16.mxu0 0
    %2651 = vmatpush1.bf16.xpose.msra.mxu0 0
    %2652 = vmatprep.subr.bf16.mxu0 0
    %2653 = vmatpush1.bf16.xpose.msra.mxu0 0
    %2654 = vmatprep.mubr.bf16.mxu0 0
    %2655 = vmatmul.mubr.bf16.gmra.mrb[0].mxu0 %v2617
    %v2656 = vpop.f32.mrb[0].mxu0
    %v2657 = vadd.f32 %v315, %v2656
    %v2658 = vpop.f32.mrb[0].mxu0
    %v2659 = vpop.f32.mrb[0].mxu0
    %v2660 = vpop.f32.mrb[0].mxu0
    %2661 = vdwg.mxu0
    %2662 = vrot.lane.b32.xlu0 %v558, 112
    %v2663 = vpop.permute.xlu0 %2662
    %2664 = vrot.lane.b32.xlu0 %v558, 80
    %v2665 = vpop.permute.xlu0 %2664
    %v2667 = vsel %vm562, %v2663, 0
    %v2670 = vsel %vm562, %v2665, 0
    %2672 = vmatprep.subr.bf16.mxu0 0
    %2673 = vmatpush1.bf16.xpose.msra.mxu0 %v2670
    %2674 = vmatprep.subr.bf16.mxu0 0
    %2675 = vmatpush1.bf16.xpose.msra.mxu0 0
    %2676 = vmatprep.subr.bf16.mxu0 0
    %2677 = vmatpush1.bf16.xpose.msra.mxu0 0
    %2678 = vmatprep.subr.bf16.mxu0 0
    %2679 = vmatpush1.bf16.xpose.msra.mxu0 0
    %2680 = vmatprep.subr.bf16.mxu0 0
    %2681 = vmatpush1.bf16.xpose.msra.mxu0 0
    %2682 = vmatprep.subr.bf16.mxu0 0
    %2683 = vmatpush1.bf16.xpose.msra.mxu0 0
    %2684 = vmatprep.subr.bf16.mxu0 0
    %2685 = vmatpush1.bf16.xpose.msra.mxu0 0
    %2686 = vmatprep.subr.bf16.mxu0 0
    %2687 = vmatpush1.bf16.xpose.msra.mxu0 0
    %2688 = vmatprep.subr.bf16.mxu0 0
    %2689 = vmatpush1.bf16.xpose.msra.mxu0 0
    %2690 = vmatprep.subr.bf16.mxu0 0
    %2691 = vmatpush1.bf16.xpose.msra.mxu0 0
    %2692 = vmatprep.subr.bf16.mxu0 0
    %2693 = vmatpush1.bf16.xpose.msra.mxu0 0
    %2694 = vmatprep.subr.bf16.mxu0 0
    %2695 = vmatpush1.bf16.xpose.msra.mxu0 0
    %2696 = vmatprep.subr.bf16.mxu0 0
    %2697 = vmatpush1.bf16.xpose.msra.mxu0 0
    %2698 = vmatprep.subr.bf16.mxu0 0
    %2699 = vmatpush1.bf16.xpose.msra.mxu0 0
    %2700 = vmatprep.subr.bf16.mxu0 0
    %2701 = vmatpush1.bf16.xpose.msra.mxu0 0
    %2702 = vmatprep.subr.bf16.mxu0 0
    %2703 = vmatpush1.bf16.xpose.msra.mxu0 0
    %2704 = vmatprep.mubr.bf16.mxu0 0
    %2705 = vmatmul.mubr.bf16.gmra.mrb[0].mxu0 %v2667
    %v2706 = vpop.f32.mrb[0].mxu0
    %v2707 = vadd.f32 %v315, %v2706
    %v2708 = vpop.f32.mrb[0].mxu0
    %v2709 = vpop.f32.mrb[0].mxu0
    %v2710 = vpop.f32.mrb[0].mxu0
    %2711 = vdwg.mxu0
    %2712 = vrot.lane.b32.xlu0 %v559, 112
    %v2713 = vpop.permute.xlu0 %2712
    %2714 = vrot.lane.b32.xlu0 %v559, 80
    %v2715 = vpop.permute.xlu0 %2714
    %v2717 = vsel %vm562, %v2713, 0
    %v2720 = vsel %vm562, %v2715, 0
    %2722 = vmatprep.subr.bf16.mxu0 0
    %2723 = vmatpush1.bf16.xpose.msra.mxu0 %v2720
    %2724 = vmatprep.subr.bf16.mxu0 0
    %2725 = vmatpush1.bf16.xpose.msra.mxu0 0
    %2726 = vmatprep.subr.bf16.mxu0 0
    %2727 = vmatpush1.bf16.xpose.msra.mxu0 0
    %2728 = vmatprep.subr.bf16.mxu0 0
    %2729 = vmatpush1.bf16.xpose.msra.mxu0 0
    %2730 = vmatprep.subr.bf16.mxu0 0
    %2731 = vmatpush1.bf16.xpose.msra.mxu0 0
    %2732 = vmatprep.subr.bf16.mxu0 0
    %2733 = vmatpush1.bf16.xpose.msra.mxu0 0
    %2734 = vmatprep.subr.bf16.mxu0 0
    %2735 = vmatpush1.bf16.xpose.msra.mxu0 0
    %2736 = vmatprep.subr.bf16.mxu0 0
    %2737 = vmatpush1.bf16.xpose.msra.mxu0 0
    %2738 = vmatprep.subr.bf16.mxu0 0
    %2739 = vmatpush1.bf16.xpose.msra.mxu0 0
    %2740 = vmatprep.subr.bf16.mxu0 0
    %2741 = vmatpush1.bf16.xpose.msra.mxu0 0
    %2742 = vmatprep.subr.bf16.mxu0 0
    %2743 = vmatpush1.bf16.xpose.msra.mxu0 0
    %2744 = vmatprep.subr.bf16.mxu0 0
    %2745 = vmatpush1.bf16.xpose.msra.mxu0 0
    %2746 = vmatprep.subr.bf16.mxu0 0
    %2747 = vmatpush1.bf16.xpose.msra.mxu0 0
    %2748 = vmatprep.subr.bf16.mxu0 0
    %2749 = vmatpush1.bf16.xpose.msra.mxu0 0
    %2750 = vmatprep.subr.bf16.mxu0 0
    %2751 = vmatpush1.bf16.xpose.msra.mxu0 0
    %2752 = vmatprep.subr.bf16.mxu0 0
    %2753 = vmatpush1.bf16.xpose.msra.mxu0 0
    %2754 = vmatprep.mubr.bf16.mxu0 0
    %2755 = vmatmul.mubr.bf16.gmra.mrb[0].mxu0 %v2717
    %v2756 = vpop.f32.mrb[0].mxu0
    %v2757 = vadd.f32 %v315, %v2756
    %v2758 = vpop.f32.mrb[0].mxu0
    %v2759 = vpop.f32.mrb[0].mxu0
    %v2760 = vpop.f32.mrb[0].mxu0
    %2761 = vdwg.mxu0
    %v2762 = vadd.f32 %v2407, %v948
    %v2763 = vadd.f32 %v2457, %v952
    %v2764 = vadd.f32 %v2507, %v956
    %v2765 = vadd.f32 %v2557, %v960
    %v2766 = vadd.f32 %v2607, %v964
    %v2767 = vadd.f32 %v2657, %v968
    %v2768 = vadd.f32 %v2707, %v972
    %v2769 = vadd.f32 %v2757, %v976
    %v2770 = vsel %vm562, %v2762, -inf
    %2771 = vmax.xlane.f32.xlu0 %v2770
    %v2772 = vpop.xlane.xlu0 %2771
    %v2773 = vsel %vm562, %v2763, -inf
    %2774 = vmax.xlane.f32.xlu0 %v2773
    %v2775 = vpop.xlane.xlu0 %2774
    %v2776 = vsel %vm562, %v2764, -inf
    %2777 = vmax.xlane.f32.xlu0 %v2776
    %v2778 = vpop.xlane.xlu0 %2777
    %v2779 = vsel %vm562, %v2765, -inf
    %2780 = vmax.xlane.f32.xlu0 %v2779
    %v2781 = vpop.xlane.xlu0 %2780
    %v2782 = vsel %vm562, %v2766, -inf
    %2783 = vmax.xlane.f32.xlu0 %v2782
    %v2784 = vpop.xlane.xlu0 %2783
    %v2785 = vsel %vm562, %v2767, -inf
    %2786 = vmax.xlane.f32.xlu0 %v2785
    %v2787 = vpop.xlane.xlu0 %2786
    %v2788 = vsel %vm562, %v2768, -inf
    %2789 = vmax.xlane.f32.xlu0 %v2788
    %v2790 = vpop.xlane.xlu0 %2789
    %v2791 = vsel %vm562, %v2769, -inf
    %2792 = vmax.xlane.f32.xlu0 %v2791
    %v2793 = vpop.xlane.xlu0 %2792
    %v2794 = vsub.f32 %v2762, %v2772
    %v2795 = vsub.f32 %v2763, %v2775
    %v2796 = vsub.f32 %v2764, %v2778
    %v2797 = vsub.f32 %v2765, %v2781
    %v2798 = vsub.f32 %v2766, %v2784
    %v2799 = vsub.f32 %v2767, %v2787
    %v2800 = vsub.f32 %v2768, %v2790
    %v2801 = vsub.f32 %v2769, %v2793
    %v2802 = vmul.f32 %v2794, 1.442695
    %v2803 = vpow.pop %v2802
    %v2804 = vmul.f32 %v2795, 1.442695
    %v2805 = vpow.pop %v2804
    %v2806 = vmul.f32 %v2796, 1.442695
    %v2807 = vpow.pop %v2806
    %v2808 = vmul.f32 %v2797, 1.442695
    %v2809 = vpow.pop %v2808
    %v2810 = vmul.f32 %v2798, 1.442695
    %v2811 = vpow.pop %v2810
    %v2812 = vmul.f32 %v2799, 1.442695
    %v2813 = vpow.pop %v2812
    %v2814 = vmul.f32 %v2800, 1.442695
    %v2815 = vpow.pop %v2814
    %v2816 = vmul.f32 %v2801, 1.442695
    %v2817 = vpow.pop %v2816
    %v2818 = vsel %vm562, %v2803, 0.0
    %2819 = vadd.xlane.f32.xlu0 %v2818
    %v2820 = vpop.xlane.xlu0 %2819
    %v2821 = vsel %vm562, %v2805, 0.0
    %2822 = vadd.xlane.f32.xlu0 %v2821
    %v2823 = vpop.xlane.xlu0 %2822
    %v2824 = vsel %vm562, %v2807, 0.0
    %2825 = vadd.xlane.f32.xlu0 %v2824
    %v2826 = vpop.xlane.xlu0 %2825
    %v2827 = vsel %vm562, %v2809, 0.0
    %2828 = vadd.xlane.f32.xlu0 %v2827
    %v2829 = vpop.xlane.xlu0 %2828
    %v2830 = vsel %vm562, %v2811, 0.0
    %2831 = vadd.xlane.f32.xlu0 %v2830
    %v2832 = vpop.xlane.xlu0 %2831
    %v2833 = vsel %vm562, %v2813, 0.0
    %2834 = vadd.xlane.f32.xlu0 %v2833
    %v2835 = vpop.xlane.xlu0 %2834
    %v2836 = vsel %vm562, %v2815, 0.0
    %2837 = vadd.xlane.f32.xlu0 %v2836
    %v2838 = vpop.xlane.xlu0 %2837
    %v2839 = vsel %vm562, %v2817, 0.0
    %2840 = vadd.xlane.f32.xlu0 %v2839
    %v2841 = vpop.xlane.xlu0 %2840
    %v2842 = vrcp.pop %v2820
    %v2843 = vrcp.pop %v2823
    %v2844 = vrcp.pop %v2826
    %v2845 = vrcp.pop %v2829
    %v2846 = vrcp.pop %v2832
    %v2847 = vrcp.pop %v2835
    %v2848 = vrcp.pop %v2838
    %v2849 = vrcp.pop %v2841
    %v2850 = vmul.f32 %v2803, %v2842
    %v2851 = vmul.f32 %v2805, %v2843
    %v2852 = vmul.f32 %v2807, %v2844
    %v2853 = vmul.f32 %v2809, %v2845
    %v2854 = vmul.f32 %v2811, %v2846
    %v2855 = vmul.f32 %v2813, %v2847
    %v2856 = vmul.f32 %v2815, %v2848
    %v2857 = vmul.f32 %v2817, %v2849
    %v2858 = vpack.c.bf16 %v2850, %v2850
    %v2859 = vpack.c.bf16 %v2851, %v2851
    %v2860 = vpack.c.bf16 %v2852, %v2852
    %v2861 = vpack.c.bf16 %v2853, %v2853
    %v2862 = vpack.c.bf16 %v2854, %v2854
    %v2863 = vpack.c.bf16 %v2855, %v2855
    %v2864 = vpack.c.bf16 %v2856, %v2856
    %v2865 = vpack.c.bf16 %v2857, %v2857
    %2866 = vrot.lane.b32.xlu0 %v552, 48
    %v2867 = vpop.permute.xlu0 %2866
    %v2869 = vsel %vm562, %v2858, 0
    %v2872 = vsel %vm1094, %v2867, 0
    %2874 = vmatprep.subr.bf16.mxu0 0
    %2875 = vmatpush1.bf16.msra.mxu0 %v2872
    %2876 = vmatprep.subr.bf16.mxu0 0
    %2877 = vmatpush1.bf16.msra.mxu0 0
    %2878 = vmatprep.subr.bf16.mxu0 0
    %2879 = vmatpush1.bf16.msra.mxu0 0
    %2880 = vmatprep.subr.bf16.mxu0 0
    %2881 = vmatpush1.bf16.msra.mxu0 0
    %2882 = vmatprep.subr.bf16.mxu0 0
    %2883 = vmatpush1.bf16.msra.mxu0 0
    %2884 = vmatprep.subr.bf16.mxu0 0
    %2885 = vmatpush1.bf16.msra.mxu0 0
    %2886 = vmatprep.subr.bf16.mxu0 0
    %2887 = vmatpush1.bf16.msra.mxu0 0
    %2888 = vmatprep.subr.bf16.mxu0 0
    %2889 = vmatpush1.bf16.msra.mxu0 0
    %2890 = vmatprep.subr.bf16.mxu0 0
    %2891 = vmatpush1.bf16.msra.mxu0 0
    %2892 = vmatprep.subr.bf16.mxu0 0
    %2893 = vmatpush1.bf16.msra.mxu0 0
    %2894 = vmatprep.subr.bf16.mxu0 0
    %2895 = vmatpush1.bf16.msra.mxu0 0
    %2896 = vmatprep.subr.bf16.mxu0 0
    %2897 = vmatpush1.bf16.msra.mxu0 0
    %2898 = vmatprep.subr.bf16.mxu0 0
    %2899 = vmatpush1.bf16.msra.mxu0 0
    %2900 = vmatprep.subr.bf16.mxu0 0
    %2901 = vmatpush1.bf16.msra.mxu0 0
    %2902 = vmatprep.subr.bf16.mxu0 0
    %2903 = vmatpush1.bf16.msra.mxu0 0
    %2904 = vmatprep.subr.bf16.mxu0 0
    %2905 = vmatpush1.bf16.msra.mxu0 0
    %2906 = vmatprep.mubr.bf16.mxu0 0
    %2907 = vmatmul.mubr.bf16.gmra.mrb[0].mxu0 %v2869
    %v2908 = vpop.f32.mrb[0].mxu0
    %v2909 = vadd.f32 0.0, %v2908
    %v2910 = vpop.f32.mrb[0].mxu0
    %v2911 = vpop.f32.mrb[0].mxu0
    %v2912 = vpop.f32.mrb[0].mxu0
    %2913 = vdwg.mxu0
    %2914 = vrot.lane.b32.xlu0 %v553, 48
    %v2915 = vpop.permute.xlu0 %2914
    %v2917 = vsel %vm562, %v2859, 0
    %v2920 = vsel %vm1094, %v2915, 0
    %2922 = vmatprep.subr.bf16.mxu0 0
    %2923 = vmatpush1.bf16.msra.mxu0 %v2920
    %2924 = vmatprep.subr.bf16.mxu0 0
    %2925 = vmatpush1.bf16.msra.mxu0 0
    %2926 = vmatprep.subr.bf16.mxu0 0
    %2927 = vmatpush1.bf16.msra.mxu0 0
    %2928 = vmatprep.subr.bf16.mxu0 0
    %2929 = vmatpush1.bf16.msra.mxu0 0
    %2930 = vmatprep.subr.bf16.mxu0 0
    %2931 = vmatpush1.bf16.msra.mxu0 0
    %2932 = vmatprep.subr.bf16.mxu0 0
    %2933 = vmatpush1.bf16.msra.mxu0 0
    %2934 = vmatprep.subr.bf16.mxu0 0
    %2935 = vmatpush1.bf16.msra.mxu0 0
    %2936 = vmatprep.subr.bf16.mxu0 0
    %2937 = vmatpush1.bf16.msra.mxu0 0
    %2938 = vmatprep.subr.bf16.mxu0 0
    %2939 = vmatpush1.bf16.msra.mxu0 0
    %2940 = vmatprep.subr.bf16.mxu0 0
    %2941 = vmatpush1.bf16.msra.mxu0 0
    %2942 = vmatprep.subr.bf16.mxu0 0
    %2943 = vmatpush1.bf16.msra.mxu0 0
    %2944 = vmatprep.subr.bf16.mxu0 0
    %2945 = vmatpush1.bf16.msra.mxu0 0
    %2946 = vmatprep.subr.bf16.mxu0 0
    %2947 = vmatpush1.bf16.msra.mxu0 0
    %2948 = vmatprep.subr.bf16.mxu0 0
    %2949 = vmatpush1.bf16.msra.mxu0 0
    %2950 = vmatprep.subr.bf16.mxu0 0
    %2951 = vmatpush1.bf16.msra.mxu0 0
    %2952 = vmatprep.subr.bf16.mxu0 0
    %2953 = vmatpush1.bf16.msra.mxu0 0
    %2954 = vmatprep.mubr.bf16.mxu0 0
    %2955 = vmatmul.mubr.bf16.gmra.mrb[0].mxu0 %v2917
    %v2956 = vpop.f32.mrb[0].mxu0
    %v2957 = vadd.f32 0.0, %v2956
    %v2958 = vpop.f32.mrb[0].mxu0
    %v2959 = vpop.f32.mrb[0].mxu0
    %v2960 = vpop.f32.mrb[0].mxu0
    %2961 = vdwg.mxu0
    %2962 = vrot.lane.b32.xlu0 %v554, 48
    %v2963 = vpop.permute.xlu0 %2962
    %v2965 = vsel %vm562, %v2860, 0
    %v2968 = vsel %vm1094, %v2963, 0
    %2970 = vmatprep.subr.bf16.mxu0 0
    %2971 = vmatpush1.bf16.msra.mxu0 %v2968
    %2972 = vmatprep.subr.bf16.mxu0 0
    %2973 = vmatpush1.bf16.msra.mxu0 0
    %2974 = vmatprep.subr.bf16.mxu0 0
    %2975 = vmatpush1.bf16.msra.mxu0 0
    %2976 = vmatprep.subr.bf16.mxu0 0
    %2977 = vmatpush1.bf16.msra.mxu0 0
    %2978 = vmatprep.subr.bf16.mxu0 0
    %2979 = vmatpush1.bf16.msra.mxu0 0
    %2980 = vmatprep.subr.bf16.mxu0 0
    %2981 = vmatpush1.bf16.msra.mxu0 0
    %2982 = vmatprep.subr.bf16.mxu0 0
    %2983 = vmatpush1.bf16.msra.mxu0 0
    %2984 = vmatprep.subr.bf16.mxu0 0
    %2985 = vmatpush1.bf16.msra.mxu0 0
    %2986 = vmatprep.subr.bf16.mxu0 0
    %2987 = vmatpush1.bf16.msra.mxu0 0
    %2988 = vmatprep.subr.bf16.mxu0 0
    %2989 = vmatpush1.bf16.msra.mxu0 0
    %2990 = vmatprep.subr.bf16.mxu0 0
    %2991 = vmatpush1.bf16.msra.mxu0 0
    %2992 = vmatprep.subr.bf16.mxu0 0
    %2993 = vmatpush1.bf16.msra.mxu0 0
    %2994 = vmatprep.subr.bf16.mxu0 0
    %2995 = vmatpush1.bf16.msra.mxu0 0
    %2996 = vmatprep.subr.bf16.mxu0 0
    %2997 = vmatpush1.bf16.msra.mxu0 0
    %2998 = vmatprep.subr.bf16.mxu0 0
    %2999 = vmatpush1.bf16.msra.mxu0 0
    %3000 = vmatprep.subr.bf16.mxu0 0
    %3001 = vmatpush1.bf16.msra.mxu0 0
    %3002 = vmatprep.mubr.bf16.mxu0 0
    %3003 = vmatmul.mubr.bf16.gmra.mrb[0].mxu0 %v2965
    %v3004 = vpop.f32.mrb[0].mxu0
    %v3005 = vadd.f32 0.0, %v3004
    %v3006 = vpop.f32.mrb[0].mxu0
    %v3007 = vpop.f32.mrb[0].mxu0
    %v3008 = vpop.f32.mrb[0].mxu0
    %3009 = vdwg.mxu0
    %3010 = vrot.lane.b32.xlu0 %v555, 48
    %v3011 = vpop.permute.xlu0 %3010
    %v3013 = vsel %vm562, %v2861, 0
    %v3016 = vsel %vm1094, %v3011, 0
    %3018 = vmatprep.subr.bf16.mxu0 0
    %3019 = vmatpush1.bf16.msra.mxu0 %v3016
    %3020 = vmatprep.subr.bf16.mxu0 0
    %3021 = vmatpush1.bf16.msra.mxu0 0
    %3022 = vmatprep.subr.bf16.mxu0 0
    %3023 = vmatpush1.bf16.msra.mxu0 0
    %3024 = vmatprep.subr.bf16.mxu0 0
    %3025 = vmatpush1.bf16.msra.mxu0 0
    %3026 = vmatprep.subr.bf16.mxu0 0
    %3027 = vmatpush1.bf16.msra.mxu0 0
    %3028 = vmatprep.subr.bf16.mxu0 0
    %3029 = vmatpush1.bf16.msra.mxu0 0
    %3030 = vmatprep.subr.bf16.mxu0 0
    %3031 = vmatpush1.bf16.msra.mxu0 0
    %3032 = vmatprep.subr.bf16.mxu0 0
    %3033 = vmatpush1.bf16.msra.mxu0 0
    %3034 = vmatprep.subr.bf16.mxu0 0
    %3035 = vmatpush1.bf16.msra.mxu0 0
    %3036 = vmatprep.subr.bf16.mxu0 0
    %3037 = vmatpush1.bf16.msra.mxu0 0
    %3038 = vmatprep.subr.bf16.mxu0 0
    %3039 = vmatpush1.bf16.msra.mxu0 0
    %3040 = vmatprep.subr.bf16.mxu0 0
    %3041 = vmatpush1.bf16.msra.mxu0 0
    %3042 = vmatprep.subr.bf16.mxu0 0
    %3043 = vmatpush1.bf16.msra.mxu0 0
    %3044 = vmatprep.subr.bf16.mxu0 0
    %3045 = vmatpush1.bf16.msra.mxu0 0
    %3046 = vmatprep.subr.bf16.mxu0 0
    %3047 = vmatpush1.bf16.msra.mxu0 0
    %3048 = vmatprep.subr.bf16.mxu0 0
    %3049 = vmatpush1.bf16.msra.mxu0 0
    %3050 = vmatprep.mubr.bf16.mxu0 0
    %3051 = vmatmul.mubr.bf16.gmra.mrb[0].mxu0 %v3013
    %v3052 = vpop.f32.mrb[0].mxu0
    %v3053 = vadd.f32 0.0, %v3052
    %v3054 = vpop.f32.mrb[0].mxu0
    %v3055 = vpop.f32.mrb[0].mxu0
    %v3056 = vpop.f32.mrb[0].mxu0
    %3057 = vdwg.mxu0
    %3058 = vrot.lane.b32.xlu0 %v556, 48
    %v3059 = vpop.permute.xlu0 %3058
    %v3061 = vsel %vm562, %v2862, 0
    %v3064 = vsel %vm1094, %v3059, 0
    %3066 = vmatprep.subr.bf16.mxu0 0
    %3067 = vmatpush1.bf16.msra.mxu0 %v3064
    %3068 = vmatprep.subr.bf16.mxu0 0
    %3069 = vmatpush1.bf16.msra.mxu0 0
    %3070 = vmatprep.subr.bf16.mxu0 0
    %3071 = vmatpush1.bf16.msra.mxu0 0
    %3072 = vmatprep.subr.bf16.mxu0 0
    %3073 = vmatpush1.bf16.msra.mxu0 0
    %3074 = vmatprep.subr.bf16.mxu0 0
    %3075 = vmatpush1.bf16.msra.mxu0 0
    %3076 = vmatprep.subr.bf16.mxu0 0
    %3077 = vmatpush1.bf16.msra.mxu0 0
    %3078 = vmatprep.subr.bf16.mxu0 0
    %3079 = vmatpush1.bf16.msra.mxu0 0
    %3080 = vmatprep.subr.bf16.mxu0 0
    %3081 = vmatpush1.bf16.msra.mxu0 0
    %3082 = vmatprep.subr.bf16.mxu0 0
    %3083 = vmatpush1.bf16.msra.mxu0 0
    %3084 = vmatprep.subr.bf16.mxu0 0
    %3085 = vmatpush1.bf16.msra.mxu0 0
    %3086 = vmatprep.subr.bf16.mxu0 0
    %3087 = vmatpush1.bf16.msra.mxu0 0
    %3088 = vmatprep.subr.bf16.mxu0 0
    %3089 = vmatpush1.bf16.msra.mxu0 0
    %3090 = vmatprep.subr.bf16.mxu0 0
    %3091 = vmatpush1.bf16.msra.mxu0 0
    %3092 = vmatprep.subr.bf16.mxu0 0
    %3093 = vmatpush1.bf16.msra.mxu0 0
    %3094 = vmatprep.subr.bf16.mxu0 0
    %3095 = vmatpush1.bf16.msra.mxu0 0
    %3096 = vmatprep.subr.bf16.mxu0 0
    %3097 = vmatpush1.bf16.msra.mxu0 0
    %3098 = vmatprep.mubr.bf16.mxu0 0
    %3099 = vmatmul.mubr.bf16.gmra.mrb[0].mxu0 %v3061
    %v3100 = vpop.f32.mrb[0].mxu0
    %v3101 = vadd.f32 0.0, %v3100
    %v3102 = vpop.f32.mrb[0].mxu0
    %v3103 = vpop.f32.mrb[0].mxu0
    %v3104 = vpop.f32.mrb[0].mxu0
    %3105 = vdwg.mxu0
    %3106 = vrot.lane.b32.xlu0 %v557, 48
    %v3107 = vpop.permute.xlu0 %3106
    %v3109 = vsel %vm562, %v2863, 0
    %v3112 = vsel %vm1094, %v3107, 0
    %3114 = vmatprep.subr.bf16.mxu0 0
    %3115 = vmatpush1.bf16.msra.mxu0 %v3112
    %3116 = vmatprep.subr.bf16.mxu0 0
    %3117 = vmatpush1.bf16.msra.mxu0 0
    %3118 = vmatprep.subr.bf16.mxu0 0
    %3119 = vmatpush1.bf16.msra.mxu0 0
    %3120 = vmatprep.subr.bf16.mxu0 0
    %3121 = vmatpush1.bf16.msra.mxu0 0
    %3122 = vmatprep.subr.bf16.mxu0 0
    %3123 = vmatpush1.bf16.msra.mxu0 0
    %3124 = vmatprep.subr.bf16.mxu0 0
    %3125 = vmatpush1.bf16.msra.mxu0 0
    %3126 = vmatprep.subr.bf16.mxu0 0
    %3127 = vmatpush1.bf16.msra.mxu0 0
    %3128 = vmatprep.subr.bf16.mxu0 0
    %3129 = vmatpush1.bf16.msra.mxu0 0
    %3130 = vmatprep.subr.bf16.mxu0 0
    %3131 = vmatpush1.bf16.msra.mxu0 0
    %3132 = vmatprep.subr.bf16.mxu0 0
    %3133 = vmatpush1.bf16.msra.mxu0 0
    %3134 = vmatprep.subr.bf16.mxu0 0
    %3135 = vmatpush1.bf16.msra.mxu0 0
    %3136 = vmatprep.subr.bf16.mxu0 0
    %3137 = vmatpush1.bf16.msra.mxu0 0
    %3138 = vmatprep.subr.bf16.mxu0 0
    %3139 = vmatpush1.bf16.msra.mxu0 0
    %3140 = vmatprep.subr.bf16.mxu0 0
    %3141 = vmatpush1.bf16.msra.mxu0 0
    %3142 = vmatprep.subr.bf16.mxu0 0
    %3143 = vmatpush1.bf16.msra.mxu0 0
    %3144 = vmatprep.subr.bf16.mxu0 0
    %3145 = vmatpush1.bf16.msra.mxu0 0
    %3146 = vmatprep.mubr.bf16.mxu0 0
    %3147 = vmatmul.mubr.bf16.gmra.mrb[0].mxu0 %v3109
    %v3148 = vpop.f32.mrb[0].mxu0
    %v3149 = vadd.f32 0.0, %v3148
    %v3150 = vpop.f32.mrb[0].mxu0
    %v3151 = vpop.f32.mrb[0].mxu0
    %v3152 = vpop.f32.mrb[0].mxu0
    %3153 = vdwg.mxu0
    %3154 = vrot.lane.b32.xlu0 %v558, 48
    %v3155 = vpop.permute.xlu0 %3154
    %v3157 = vsel %vm562, %v2864, 0
    %v3160 = vsel %vm1094, %v3155, 0
    %3162 = vmatprep.subr.bf16.mxu0 0
    %3163 = vmatpush1.bf16.msra.mxu0 %v3160
    %3164 = vmatprep.subr.bf16.mxu0 0
    %3165 = vmatpush1.bf16.msra.mxu0 0
    %3166 = vmatprep.subr.bf16.mxu0 0
    %3167 = vmatpush1.bf16.msra.mxu0 0
    %3168 = vmatprep.subr.bf16.mxu0 0
    %3169 = vmatpush1.bf16.msra.mxu0 0
    %3170 = vmatprep.subr.bf16.mxu0 0
    %3171 = vmatpush1.bf16.msra.mxu0 0
    %3172 = vmatprep.subr.bf16.mxu0 0
    %3173 = vmatpush1.bf16.msra.mxu0 0
    %3174 = vmatprep.subr.bf16.mxu0 0
    %3175 = vmatpush1.bf16.msra.mxu0 0
    %3176 = vmatprep.subr.bf16.mxu0 0
    %3177 = vmatpush1.bf16.msra.mxu0 0
    %3178 = vmatprep.subr.bf16.mxu0 0
    %3179 = vmatpush1.bf16.msra.mxu0 0
    %3180 = vmatprep.subr.bf16.mxu0 0
    %3181 = vmatpush1.bf16.msra.mxu0 0
    %3182 = vmatprep.subr.bf16.mxu0 0
    %3183 = vmatpush1.bf16.msra.mxu0 0
    %3184 = vmatprep.subr.bf16.mxu0 0
    %3185 = vmatpush1.bf16.msra.mxu0 0
    %3186 = vmatprep.subr.bf16.mxu0 0
    %3187 = vmatpush1.bf16.msra.mxu0 0
    %3188 = vmatprep.subr.bf16.mxu0 0
    %3189 = vmatpush1.bf16.msra.mxu0 0
    %3190 = vmatprep.subr.bf16.mxu0 0
    %3191 = vmatpush1.bf16.msra.mxu0 0
    %3192 = vmatprep.subr.bf16.mxu0 0
    %3193 = vmatpush1.bf16.msra.mxu0 0
    %3194 = vmatprep.mubr.bf16.mxu0 0
    %3195 = vmatmul.mubr.bf16.gmra.mrb[0].mxu0 %v3157
    %v3196 = vpop.f32.mrb[0].mxu0
    %v3197 = vadd.f32 0.0, %v3196
    %v3198 = vpop.f32.mrb[0].mxu0
    %v3199 = vpop.f32.mrb[0].mxu0
    %v3200 = vpop.f32.mrb[0].mxu0
    %3201 = vdwg.mxu0
    %3202 = vrot.lane.b32.xlu0 %v559, 48
    %v3203 = vpop.permute.xlu0 %3202
    %v3205 = vsel %vm562, %v2865, 0
    %v3208 = vsel %vm1094, %v3203, 0
    %3210 = vmatprep.subr.bf16.mxu0 0
    %3211 = vmatpush1.bf16.msra.mxu0 %v3208
    %3212 = vmatprep.subr.bf16.mxu0 0
    %3213 = vmatpush1.bf16.msra.mxu0 0
    %3214 = vmatprep.subr.bf16.mxu0 0
    %3215 = vmatpush1.bf16.msra.mxu0 0
    %3216 = vmatprep.subr.bf16.mxu0 0
    %3217 = vmatpush1.bf16.msra.mxu0 0
    %3218 = vmatprep.subr.bf16.mxu0 0
    %3219 = vmatpush1.bf16.msra.mxu0 0
    %3220 = vmatprep.subr.bf16.mxu0 0
    %3221 = vmatpush1.bf16.msra.mxu0 0
    %3222 = vmatprep.subr.bf16.mxu0 0
    %3223 = vmatpush1.bf16.msra.mxu0 0
    %3224 = vmatprep.subr.bf16.mxu0 0
    %3225 = vmatpush1.bf16.msra.mxu0 0
    %3226 = vmatprep.subr.bf16.mxu0 0
    %3227 = vmatpush1.bf16.msra.mxu0 0
    %3228 = vmatprep.subr.bf16.mxu0 0
    %3229 = vmatpush1.bf16.msra.mxu0 0
    %3230 = vmatprep.subr.bf16.mxu0 0
    %3231 = vmatpush1.bf16.msra.mxu0 0
    %3232 = vmatprep.subr.bf16.mxu0 0
    %3233 = vmatpush1.bf16.msra.mxu0 0
    %3234 = vmatprep.subr.bf16.mxu0 0
    %3235 = vmatpush1.bf16.msra.mxu0 0
    %3236 = vmatprep.subr.bf16.mxu0 0
    %3237 = vmatpush1.bf16.msra.mxu0 0
    %3238 = vmatprep.subr.bf16.mxu0 0
    %3239 = vmatpush1.bf16.msra.mxu0 0
    %3240 = vmatprep.subr.bf16.mxu0 0
    %3241 = vmatpush1.bf16.msra.mxu0 0
    %3242 = vmatprep.mubr.bf16.mxu0 0
    %3243 = vmatmul.mubr.bf16.gmra.mrb[0].mxu0 %v3205
    %v3244 = vpop.f32.mrb[0].mxu0
    %v3245 = vadd.f32 0.0, %v3244
    %v3246 = vpop.f32.mrb[0].mxu0
    %v3247 = vpop.f32.mrb[0].mxu0
    %v3248 = vpop.f32.mrb[0].mxu0
    %3249 = vdwg.mxu0
    %3250 = vrot.lane.b32.xlu0 %v552, 104
    %v3251 = vpop.permute.xlu0 %3250
    %3252 = vrot.lane.b32.xlu0 %v552, 72
    %v3253 = vpop.permute.xlu0 %3252
    %v3255 = vsel %vm562, %v3251, 0
    %v3258 = vsel %vm562, %v3253, 0
    %3260 = vmatprep.subr.bf16.mxu0 0
    %3261 = vmatpush1.bf16.xpose.msra.mxu0 %v3258
    %3262 = vmatprep.subr.bf16.mxu0 0
    %3263 = vmatpush1.bf16.xpose.msra.mxu0 0
    %3264 = vmatprep.subr.bf16.mxu0 0
    %3265 = vmatpush1.bf16.xpose.msra.mxu0 0
    %3266 = vmatprep.subr.bf16.mxu0 0
    %3267 = vmatpush1.bf16.xpose.msra.mxu0 0
    %3268 = vmatprep.subr.bf16.mxu0 0
    %3269 = vmatpush1.bf16.xpose.msra.mxu0 0
    %3270 = vmatprep.subr.bf16.mxu0 0
    %3271 = vmatpush1.bf16.xpose.msra.mxu0 0
    %3272 = vmatprep.subr.bf16.mxu0 0
    %3273 = vmatpush1.bf16.xpose.msra.mxu0 0
    %3274 = vmatprep.subr.bf16.mxu0 0
    %3275 = vmatpush1.bf16.xpose.msra.mxu0 0
    %3276 = vmatprep.subr.bf16.mxu0 0
    %3277 = vmatpush1.bf16.xpose.msra.mxu0 0
    %3278 = vmatprep.subr.bf16.mxu0 0
    %3279 = vmatpush1.bf16.xpose.msra.mxu0 0
    %3280 = vmatprep.subr.bf16.mxu0 0
    %3281 = vmatpush1.bf16.xpose.msra.mxu0 0
    %3282 = vmatprep.subr.bf16.mxu0 0
    %3283 = vmatpush1.bf16.xpose.msra.mxu0 0
    %3284 = vmatprep.subr.bf16.mxu0 0
    %3285 = vmatpush1.bf16.xpose.msra.mxu0 0
    %3286 = vmatprep.subr.bf16.mxu0 0
    %3287 = vmatpush1.bf16.xpose.msra.mxu0 0
    %3288 = vmatprep.subr.bf16.mxu0 0
    %3289 = vmatpush1.bf16.xpose.msra.mxu0 0
    %3290 = vmatprep.subr.bf16.mxu0 0
    %3291 = vmatpush1.bf16.xpose.msra.mxu0 0
    %3292 = vmatprep.mubr.bf16.mxu0 0
    %3293 = vmatmul.mubr.bf16.gmra.mrb[0].mxu0 %v3255
    %v3294 = vpop.f32.mrb[0].mxu0
    %v3295 = vadd.f32 %v316, %v3294
    %v3296 = vpop.f32.mrb[0].mxu0
    %v3297 = vpop.f32.mrb[0].mxu0
    %v3298 = vpop.f32.mrb[0].mxu0
    %3299 = vdwg.mxu0
    %3300 = vrot.lane.b32.xlu0 %v553, 104
    %v3301 = vpop.permute.xlu0 %3300
    %3302 = vrot.lane.b32.xlu0 %v553, 72
    %v3303 = vpop.permute.xlu0 %3302
    %v3305 = vsel %vm562, %v3301, 0
    %v3308 = vsel %vm562, %v3303, 0
    %3310 = vmatprep.subr.bf16.mxu0 0
    %3311 = vmatpush1.bf16.xpose.msra.mxu0 %v3308
    %3312 = vmatprep.subr.bf16.mxu0 0
    %3313 = vmatpush1.bf16.xpose.msra.mxu0 0
    %3314 = vmatprep.subr.bf16.mxu0 0
    %3315 = vmatpush1.bf16.xpose.msra.mxu0 0
    %3316 = vmatprep.subr.bf16.mxu0 0
    %3317 = vmatpush1.bf16.xpose.msra.mxu0 0
    %3318 = vmatprep.subr.bf16.mxu0 0
    %3319 = vmatpush1.bf16.xpose.msra.mxu0 0
    %3320 = vmatprep.subr.bf16.mxu0 0
    %3321 = vmatpush1.bf16.xpose.msra.mxu0 0
    %3322 = vmatprep.subr.bf16.mxu0 0
    %3323 = vmatpush1.bf16.xpose.msra.mxu0 0
    %3324 = vmatprep.subr.bf16.mxu0 0
    %3325 = vmatpush1.bf16.xpose.msra.mxu0 0
    %3326 = vmatprep.subr.bf16.mxu0 0
    %3327 = vmatpush1.bf16.xpose.msra.mxu0 0
    %3328 = vmatprep.subr.bf16.mxu0 0
    %3329 = vmatpush1.bf16.xpose.msra.mxu0 0
    %3330 = vmatprep.subr.bf16.mxu0 0
    %3331 = vmatpush1.bf16.xpose.msra.mxu0 0
    %3332 = vmatprep.subr.bf16.mxu0 0
    %3333 = vmatpush1.bf16.xpose.msra.mxu0 0
    %3334 = vmatprep.subr.bf16.mxu0 0
    %3335 = vmatpush1.bf16.xpose.msra.mxu0 0
    %3336 = vmatprep.subr.bf16.mxu0 0
    %3337 = vmatpush1.bf16.xpose.msra.mxu0 0
    %3338 = vmatprep.subr.bf16.mxu0 0
    %3339 = vmatpush1.bf16.xpose.msra.mxu0 0
    %3340 = vmatprep.subr.bf16.mxu0 0
    %3341 = vmatpush1.bf16.xpose.msra.mxu0 0
    %3342 = vmatprep.mubr.bf16.mxu0 0
    %3343 = vmatmul.mubr.bf16.gmra.mrb[0].mxu0 %v3305
    %v3344 = vpop.f32.mrb[0].mxu0
    %v3345 = vadd.f32 %v316, %v3344
    %v3346 = vpop.f32.mrb[0].mxu0
    %v3347 = vpop.f32.mrb[0].mxu0
    %v3348 = vpop.f32.mrb[0].mxu0
    %3349 = vdwg.mxu0
    %3350 = vrot.lane.b32.xlu0 %v554, 104
    %v3351 = vpop.permute.xlu0 %3350
    %3352 = vrot.lane.b32.xlu0 %v554, 72
    %v3353 = vpop.permute.xlu0 %3352
    %v3355 = vsel %vm562, %v3351, 0
    %v3358 = vsel %vm562, %v3353, 0
    %3360 = vmatprep.subr.bf16.mxu0 0
    %3361 = vmatpush1.bf16.xpose.msra.mxu0 %v3358
    %3362 = vmatprep.subr.bf16.mxu0 0
    %3363 = vmatpush1.bf16.xpose.msra.mxu0 0
    %3364 = vmatprep.subr.bf16.mxu0 0
    %3365 = vmatpush1.bf16.xpose.msra.mxu0 0
    %3366 = vmatprep.subr.bf16.mxu0 0
    %3367 = vmatpush1.bf16.xpose.msra.mxu0 0
    %3368 = vmatprep.subr.bf16.mxu0 0
    %3369 = vmatpush1.bf16.xpose.msra.mxu0 0
    %3370 = vmatprep.subr.bf16.mxu0 0
    %3371 = vmatpush1.bf16.xpose.msra.mxu0 0
    %3372 = vmatprep.subr.bf16.mxu0 0
    %3373 = vmatpush1.bf16.xpose.msra.mxu0 0
    %3374 = vmatprep.subr.bf16.mxu0 0
    %3375 = vmatpush1.bf16.xpose.msra.mxu0 0
    %3376 = vmatprep.subr.bf16.mxu0 0
    %3377 = vmatpush1.bf16.xpose.msra.mxu0 0
    %3378 = vmatprep.subr.bf16.mxu0 0
    %3379 = vmatpush1.bf16.xpose.msra.mxu0 0
    %3380 = vmatprep.subr.bf16.mxu0 0
    %3381 = vmatpush1.bf16.xpose.msra.mxu0 0
    %3382 = vmatprep.subr.bf16.mxu0 0
    %3383 = vmatpush1.bf16.xpose.msra.mxu0 0
    %3384 = vmatprep.subr.bf16.mxu0 0
    %3385 = vmatpush1.bf16.xpose.msra.mxu0 0
    %3386 = vmatprep.subr.bf16.mxu0 0
    %3387 = vmatpush1.bf16.xpose.msra.mxu0 0
    %3388 = vmatprep.subr.bf16.mxu0 0
    %3389 = vmatpush1.bf16.xpose.msra.mxu0 0
    %3390 = vmatprep.subr.bf16.mxu0 0
    %3391 = vmatpush1.bf16.xpose.msra.mxu0 0
    %3392 = vmatprep.mubr.bf16.mxu0 0
    %3393 = vmatmul.mubr.bf16.gmra.mrb[0].mxu0 %v3355
    %v3394 = vpop.f32.mrb[0].mxu0
    %v3395 = vadd.f32 %v316, %v3394
    %v3396 = vpop.f32.mrb[0].mxu0
    %v3397 = vpop.f32.mrb[0].mxu0
    %v3398 = vpop.f32.mrb[0].mxu0
    %3399 = vdwg.mxu0
    %3400 = vrot.lane.b32.xlu0 %v555, 104
    %v3401 = vpop.permute.xlu0 %3400
    %3402 = vrot.lane.b32.xlu0 %v555, 72
    %v3403 = vpop.permute.xlu0 %3402
    %v3405 = vsel %vm562, %v3401, 0
    %v3408 = vsel %vm562, %v3403, 0
    %3410 = vmatprep.subr.bf16.mxu0 0
    %3411 = vmatpush1.bf16.xpose.msra.mxu0 %v3408
    %3412 = vmatprep.subr.bf16.mxu0 0
    %3413 = vmatpush1.bf16.xpose.msra.mxu0 0
    %3414 = vmatprep.subr.bf16.mxu0 0
    %3415 = vmatpush1.bf16.xpose.msra.mxu0 0
    %3416 = vmatprep.subr.bf16.mxu0 0
    %3417 = vmatpush1.bf16.xpose.msra.mxu0 0
    %3418 = vmatprep.subr.bf16.mxu0 0
    %3419 = vmatpush1.bf16.xpose.msra.mxu0 0
    %3420 = vmatprep.subr.bf16.mxu0 0
    %3421 = vmatpush1.bf16.xpose.msra.mxu0 0
    %3422 = vmatprep.subr.bf16.mxu0 0
    %3423 = vmatpush1.bf16.xpose.msra.mxu0 0
    %3424 = vmatprep.subr.bf16.mxu0 0
    %3425 = vmatpush1.bf16.xpose.msra.mxu0 0
    %3426 = vmatprep.subr.bf16.mxu0 0
    %3427 = vmatpush1.bf16.xpose.msra.mxu0 0
    %3428 = vmatprep.subr.bf16.mxu0 0
    %3429 = vmatpush1.bf16.xpose.msra.mxu0 0
    %3430 = vmatprep.subr.bf16.mxu0 0
    %3431 = vmatpush1.bf16.xpose.msra.mxu0 0
    %3432 = vmatprep.subr.bf16.mxu0 0
    %3433 = vmatpush1.bf16.xpose.msra.mxu0 0
    %3434 = vmatprep.subr.bf16.mxu0 0
    %3435 = vmatpush1.bf16.xpose.msra.mxu0 0
    %3436 = vmatprep.subr.bf16.mxu0 0
    %3437 = vmatpush1.bf16.xpose.msra.mxu0 0
    %3438 = vmatprep.subr.bf16.mxu0 0
    %3439 = vmatpush1.bf16.xpose.msra.mxu0 0
    %3440 = vmatprep.subr.bf16.mxu0 0
    %3441 = vmatpush1.bf16.xpose.msra.mxu0 0
    %3442 = vmatprep.mubr.bf16.mxu0 0
    %3443 = vmatmul.mubr.bf16.gmra.mrb[0].mxu0 %v3405
    %v3444 = vpop.f32.mrb[0].mxu0
    %v3445 = vadd.f32 %v316, %v3444
    %v3446 = vpop.f32.mrb[0].mxu0
    %v3447 = vpop.f32.mrb[0].mxu0
    %v3448 = vpop.f32.mrb[0].mxu0
    %3449 = vdwg.mxu0
    %3450 = vrot.lane.b32.xlu0 %v556, 104
    %v3451 = vpop.permute.xlu0 %3450
    %3452 = vrot.lane.b32.xlu0 %v556, 72
    %v3453 = vpop.permute.xlu0 %3452
    %v3455 = vsel %vm562, %v3451, 0
    %v3458 = vsel %vm562, %v3453, 0
    %3460 = vmatprep.subr.bf16.mxu0 0
    %3461 = vmatpush1.bf16.xpose.msra.mxu0 %v3458
    %3462 = vmatprep.subr.bf16.mxu0 0
    %3463 = vmatpush1.bf16.xpose.msra.mxu0 0
    %3464 = vmatprep.subr.bf16.mxu0 0
    %3465 = vmatpush1.bf16.xpose.msra.mxu0 0
    %3466 = vmatprep.subr.bf16.mxu0 0
    %3467 = vmatpush1.bf16.xpose.msra.mxu0 0
    %3468 = vmatprep.subr.bf16.mxu0 0
    %3469 = vmatpush1.bf16.xpose.msra.mxu0 0
    %3470 = vmatprep.subr.bf16.mxu0 0
    %3471 = vmatpush1.bf16.xpose.msra.mxu0 0
    %3472 = vmatprep.subr.bf16.mxu0 0
    %3473 = vmatpush1.bf16.xpose.msra.mxu0 0
    %3474 = vmatprep.subr.bf16.mxu0 0
    %3475 = vmatpush1.bf16.xpose.msra.mxu0 0
    %3476 = vmatprep.subr.bf16.mxu0 0
    %3477 = vmatpush1.bf16.xpose.msra.mxu0 0
    %3478 = vmatprep.subr.bf16.mxu0 0
    %3479 = vmatpush1.bf16.xpose.msra.mxu0 0
    %3480 = vmatprep.subr.bf16.mxu0 0
    %3481 = vmatpush1.bf16.xpose.msra.mxu0 0
    %3482 = vmatprep.subr.bf16.mxu0 0
    %3483 = vmatpush1.bf16.xpose.msra.mxu0 0
    %3484 = vmatprep.subr.bf16.mxu0 0
    %3485 = vmatpush1.bf16.xpose.msra.mxu0 0
    %3486 = vmatprep.subr.bf16.mxu0 0
    %3487 = vmatpush1.bf16.xpose.msra.mxu0 0
    %3488 = vmatprep.subr.bf16.mxu0 0
    %3489 = vmatpush1.bf16.xpose.msra.mxu0 0
    %3490 = vmatprep.subr.bf16.mxu0 0
    %3491 = vmatpush1.bf16.xpose.msra.mxu0 0
    %3492 = vmatprep.mubr.bf16.mxu0 0
    %3493 = vmatmul.mubr.bf16.gmra.mrb[0].mxu0 %v3455
    %v3494 = vpop.f32.mrb[0].mxu0
    %v3495 = vadd.f32 %v316, %v3494
    %v3496 = vpop.f32.mrb[0].mxu0
    %v3497 = vpop.f32.mrb[0].mxu0
    %v3498 = vpop.f32.mrb[0].mxu0
    %3499 = vdwg.mxu0
    %3500 = vrot.lane.b32.xlu0 %v557, 104
    %v3501 = vpop.permute.xlu0 %3500
    %3502 = vrot.lane.b32.xlu0 %v557, 72
    %v3503 = vpop.permute.xlu0 %3502
    %v3505 = vsel %vm562, %v3501, 0
    %v3508 = vsel %vm562, %v3503, 0
    %3510 = vmatprep.subr.bf16.mxu0 0
    %3511 = vmatpush1.bf16.xpose.msra.mxu0 %v3508
    %3512 = vmatprep.subr.bf16.mxu0 0
    %3513 = vmatpush1.bf16.xpose.msra.mxu0 0
    %3514 = vmatprep.subr.bf16.mxu0 0
    %3515 = vmatpush1.bf16.xpose.msra.mxu0 0
    %3516 = vmatprep.subr.bf16.mxu0 0
    %3517 = vmatpush1.bf16.xpose.msra.mxu0 0
    %3518 = vmatprep.subr.bf16.mxu0 0
    %3519 = vmatpush1.bf16.xpose.msra.mxu0 0
    %3520 = vmatprep.subr.bf16.mxu0 0
    %3521 = vmatpush1.bf16.xpose.msra.mxu0 0
    %3522 = vmatprep.subr.bf16.mxu0 0
    %3523 = vmatpush1.bf16.xpose.msra.mxu0 0
    %3524 = vmatprep.subr.bf16.mxu0 0
    %3525 = vmatpush1.bf16.xpose.msra.mxu0 0
    %3526 = vmatprep.subr.bf16.mxu0 0
    %3527 = vmatpush1.bf16.xpose.msra.mxu0 0
    %3528 = vmatprep.subr.bf16.mxu0 0
    %3529 = vmatpush1.bf16.xpose.msra.mxu0 0
    %3530 = vmatprep.subr.bf16.mxu0 0
    %3531 = vmatpush1.bf16.xpose.msra.mxu0 0
    %3532 = vmatprep.subr.bf16.mxu0 0
    %3533 = vmatpush1.bf16.xpose.msra.mxu0 0
    %3534 = vmatprep.subr.bf16.mxu0 0
    %3535 = vmatpush1.bf16.xpose.msra.mxu0 0
    %3536 = vmatprep.subr.bf16.mxu0 0
    %3537 = vmatpush1.bf16.xpose.msra.mxu0 0
    %3538 = vmatprep.subr.bf16.mxu0 0
    %3539 = vmatpush1.bf16.xpose.msra.mxu0 0
    %3540 = vmatprep.subr.bf16.mxu0 0
    %3541 = vmatpush1.bf16.xpose.msra.mxu0 0
    %3542 = vmatprep.mubr.bf16.mxu0 0
    %3543 = vmatmul.mubr.bf16.gmra.mrb[0].mxu0 %v3505
    %v3544 = vpop.f32.mrb[0].mxu0
    %v3545 = vadd.f32 %v316, %v3544
    %v3546 = vpop.f32.mrb[0].mxu0
    %v3547 = vpop.f32.mrb[0].mxu0
    %v3548 = vpop.f32.mrb[0].mxu0
    %3549 = vdwg.mxu0
    %3550 = vrot.lane.b32.xlu0 %v558, 104
    %v3551 = vpop.permute.xlu0 %3550
    %3552 = vrot.lane.b32.xlu0 %v558, 72
    %v3553 = vpop.permute.xlu0 %3552
    %v3555 = vsel %vm562, %v3551, 0
    %v3558 = vsel %vm562, %v3553, 0
    %3560 = vmatprep.subr.bf16.mxu0 0
    %3561 = vmatpush1.bf16.xpose.msra.mxu0 %v3558
    %3562 = vmatprep.subr.bf16.mxu0 0
    %3563 = vmatpush1.bf16.xpose.msra.mxu0 0
    %3564 = vmatprep.subr.bf16.mxu0 0
    %3565 = vmatpush1.bf16.xpose.msra.mxu0 0
    %3566 = vmatprep.subr.bf16.mxu0 0
    %3567 = vmatpush1.bf16.xpose.msra.mxu0 0
    %3568 = vmatprep.subr.bf16.mxu0 0
    %3569 = vmatpush1.bf16.xpose.msra.mxu0 0
    %3570 = vmatprep.subr.bf16.mxu0 0
    %3571 = vmatpush1.bf16.xpose.msra.mxu0 0
    %3572 = vmatprep.subr.bf16.mxu0 0
    %3573 = vmatpush1.bf16.xpose.msra.mxu0 0
    %3574 = vmatprep.subr.bf16.mxu0 0
    %3575 = vmatpush1.bf16.xpose.msra.mxu0 0
    %3576 = vmatprep.subr.bf16.mxu0 0
    %3577 = vmatpush1.bf16.xpose.msra.mxu0 0
    %3578 = vmatprep.subr.bf16.mxu0 0
    %3579 = vmatpush1.bf16.xpose.msra.mxu0 0
    %3580 = vmatprep.subr.bf16.mxu0 0
    %3581 = vmatpush1.bf16.xpose.msra.mxu0 0
    %3582 = vmatprep.subr.bf16.mxu0 0
    %3583 = vmatpush1.bf16.xpose.msra.mxu0 0
    %3584 = vmatprep.subr.bf16.mxu0 0
    %3585 = vmatpush1.bf16.xpose.msra.mxu0 0
    %3586 = vmatprep.subr.bf16.mxu0 0
    %3587 = vmatpush1.bf16.xpose.msra.mxu0 0
    %3588 = vmatprep.subr.bf16.mxu0 0
    %3589 = vmatpush1.bf16.xpose.msra.mxu0 0
    %3590 = vmatprep.subr.bf16.mxu0 0
    %3591 = vmatpush1.bf16.xpose.msra.mxu0 0
    %3592 = vmatprep.mubr.bf16.mxu0 0
    %3593 = vmatmul.mubr.bf16.gmra.mrb[0].mxu0 %v3555
    %v3594 = vpop.f32.mrb[0].mxu0
    %v3595 = vadd.f32 %v316, %v3594
    %v3596 = vpop.f32.mrb[0].mxu0
    %v3597 = vpop.f32.mrb[0].mxu0
    %v3598 = vpop.f32.mrb[0].mxu0
    %3599 = vdwg.mxu0
    %3600 = vrot.lane.b32.xlu0 %v559, 104
    %v3601 = vpop.permute.xlu0 %3600
    %3602 = vrot.lane.b32.xlu0 %v559, 72
    %v3603 = vpop.permute.xlu0 %3602
    %v3605 = vsel %vm562, %v3601, 0
    %v3608 = vsel %vm562, %v3603, 0
    %3610 = vmatprep.subr.bf16.mxu0 0
    %3611 = vmatpush1.bf16.xpose.msra.mxu0 %v3608
    %3612 = vmatprep.subr.bf16.mxu0 0
    %3613 = vmatpush1.bf16.xpose.msra.mxu0 0
    %3614 = vmatprep.subr.bf16.mxu0 0
    %3615 = vmatpush1.bf16.xpose.msra.mxu0 0
    %3616 = vmatprep.subr.bf16.mxu0 0
    %3617 = vmatpush1.bf16.xpose.msra.mxu0 0
    %3618 = vmatprep.subr.bf16.mxu0 0
    %3619 = vmatpush1.bf16.xpose.msra.mxu0 0
    %3620 = vmatprep.subr.bf16.mxu0 0
    %3621 = vmatpush1.bf16.xpose.msra.mxu0 0
    %3622 = vmatprep.subr.bf16.mxu0 0
    %3623 = vmatpush1.bf16.xpose.msra.mxu0 0
    %3624 = vmatprep.subr.bf16.mxu0 0
    %3625 = vmatpush1.bf16.xpose.msra.mxu0 0
    %3626 = vmatprep.subr.bf16.mxu0 0
    %3627 = vmatpush1.bf16.xpose.msra.mxu0 0
    %3628 = vmatprep.subr.bf16.mxu0 0
    %3629 = vmatpush1.bf16.xpose.msra.mxu0 0
    %3630 = vmatprep.subr.bf16.mxu0 0
    %3631 = vmatpush1.bf16.xpose.msra.mxu0 0
    %3632 = vmatprep.subr.bf16.mxu0 0
    %3633 = vmatpush1.bf16.xpose.msra.mxu0 0
    %3634 = vmatprep.subr.bf16.mxu0 0
    %3635 = vmatpush1.bf16.xpose.msra.mxu0 0
    %3636 = vmatprep.subr.bf16.mxu0 0
    %3637 = vmatpush1.bf16.xpose.msra.mxu0 0
    %3638 = vmatprep.subr.bf16.mxu0 0
    %3639 = vmatpush1.bf16.xpose.msra.mxu0 0
    %3640 = vmatprep.subr.bf16.mxu0 0
    %3641 = vmatpush1.bf16.xpose.msra.mxu0 0
    %3642 = vmatprep.mubr.bf16.mxu0 0
    %3643 = vmatmul.mubr.bf16.gmra.mrb[0].mxu0 %v3605
    %v3644 = vpop.f32.mrb[0].mxu0
    %v3645 = vadd.f32 %v316, %v3644
    %v3646 = vpop.f32.mrb[0].mxu0
    %v3647 = vpop.f32.mrb[0].mxu0
    %v3648 = vpop.f32.mrb[0].mxu0
    %3649 = vdwg.mxu0
    %v3650 = vadd.f32 %v3295, %v948
    %v3651 = vadd.f32 %v3345, %v952
    %v3652 = vadd.f32 %v3395, %v956
    %v3653 = vadd.f32 %v3445, %v960
    %v3654 = vadd.f32 %v3495, %v964
    %v3655 = vadd.f32 %v3545, %v968
    %v3656 = vadd.f32 %v3595, %v972
    %v3657 = vadd.f32 %v3645, %v976
    %v3658 = vsel %vm562, %v3650, -inf
    %3659 = vmax.xlane.f32.xlu0 %v3658
    %v3660 = vpop.xlane.xlu0 %3659
    %v3661 = vsel %vm562, %v3651, -inf
    %3662 = vmax.xlane.f32.xlu0 %v3661
    %v3663 = vpop.xlane.xlu0 %3662
    %v3664 = vsel %vm562, %v3652, -inf
    %3665 = vmax.xlane.f32.xlu0 %v3664
    %v3666 = vpop.xlane.xlu0 %3665
    %v3667 = vsel %vm562, %v3653, -inf
    %3668 = vmax.xlane.f32.xlu0 %v3667
    %v3669 = vpop.xlane.xlu0 %3668
    %v3670 = vsel %vm562, %v3654, -inf
    %3671 = vmax.xlane.f32.xlu0 %v3670
    %v3672 = vpop.xlane.xlu0 %3671
    %v3673 = vsel %vm562, %v3655, -inf
    %3674 = vmax.xlane.f32.xlu0 %v3673
    %v3675 = vpop.xlane.xlu0 %3674
    %v3676 = vsel %vm562, %v3656, -inf
    %3677 = vmax.xlane.f32.xlu0 %v3676
    %v3678 = vpop.xlane.xlu0 %3677
    %v3679 = vsel %vm562, %v3657, -inf
    %3680 = vmax.xlane.f32.xlu0 %v3679
    %v3681 = vpop.xlane.xlu0 %3680
    %v3682 = vsub.f32 %v3650, %v3660
    %v3683 = vsub.f32 %v3651, %v3663
    %v3684 = vsub.f32 %v3652, %v3666
    %v3685 = vsub.f32 %v3653, %v3669
    %v3686 = vsub.f32 %v3654, %v3672
    %v3687 = vsub.f32 %v3655, %v3675
    %v3688 = vsub.f32 %v3656, %v3678
    %v3689 = vsub.f32 %v3657, %v3681
    %v3690 = vmul.f32 %v3682, 1.442695
    %v3691 = vpow.pop %v3690
    %v3692 = vmul.f32 %v3683, 1.442695
    %v3693 = vpow.pop %v3692
    %v3694 = vmul.f32 %v3684, 1.442695
    %v3695 = vpow.pop %v3694
    %v3696 = vmul.f32 %v3685, 1.442695
    %v3697 = vpow.pop %v3696
    %v3698 = vmul.f32 %v3686, 1.442695
    %v3699 = vpow.pop %v3698
    %v3700 = vmul.f32 %v3687, 1.442695
    %v3701 = vpow.pop %v3700
    %v3702 = vmul.f32 %v3688, 1.442695
    %v3703 = vpow.pop %v3702
    %v3704 = vmul.f32 %v3689, 1.442695
    %v3705 = vpow.pop %v3704
    %v3706 = vsel %vm562, %v3691, 0.0
    %3707 = vadd.xlane.f32.xlu0 %v3706
    %v3708 = vpop.xlane.xlu0 %3707
    %v3709 = vsel %vm562, %v3693, 0.0
    %3710 = vadd.xlane.f32.xlu0 %v3709
    %v3711 = vpop.xlane.xlu0 %3710
    %v3712 = vsel %vm562, %v3695, 0.0
    %3713 = vadd.xlane.f32.xlu0 %v3712
    %v3714 = vpop.xlane.xlu0 %3713
    %v3715 = vsel %vm562, %v3697, 0.0
    %3716 = vadd.xlane.f32.xlu0 %v3715
    %v3717 = vpop.xlane.xlu0 %3716
    %v3718 = vsel %vm562, %v3699, 0.0
    %3719 = vadd.xlane.f32.xlu0 %v3718
    %v3720 = vpop.xlane.xlu0 %3719
    %v3721 = vsel %vm562, %v3701, 0.0
    %3722 = vadd.xlane.f32.xlu0 %v3721
    %v3723 = vpop.xlane.xlu0 %3722
    %v3724 = vsel %vm562, %v3703, 0.0
    %3725 = vadd.xlane.f32.xlu0 %v3724
    %v3726 = vpop.xlane.xlu0 %3725
    %v3727 = vsel %vm562, %v3705, 0.0
    %3728 = vadd.xlane.f32.xlu0 %v3727
    %v3729 = vpop.xlane.xlu0 %3728
    %v3730 = vrcp.pop %v3708
    %v3731 = vrcp.pop %v3711
    %v3732 = vrcp.pop %v3714
    %v3733 = vrcp.pop %v3717
    %v3734 = vrcp.pop %v3720
    %v3735 = vrcp.pop %v3723
    %v3736 = vrcp.pop %v3726
    %v3737 = vrcp.pop %v3729
    %v3738 = vmul.f32 %v3691, %v3730
    %v3739 = vmul.f32 %v3693, %v3731
    %v3740 = vmul.f32 %v3695, %v3732
    %v3741 = vmul.f32 %v3697, %v3733
    %v3742 = vmul.f32 %v3699, %v3734
    %v3743 = vmul.f32 %v3701, %v3735
    %v3744 = vmul.f32 %v3703, %v3736
    %v3745 = vmul.f32 %v3705, %v3737
    %v3746 = vpack.c.bf16 %v3738, %v3738
    %v3747 = vpack.c.bf16 %v3739, %v3739
    %v3748 = vpack.c.bf16 %v3740, %v3740
    %v3749 = vpack.c.bf16 %v3741, %v3741
    %v3750 = vpack.c.bf16 %v3742, %v3742
    %v3751 = vpack.c.bf16 %v3743, %v3743
    %v3752 = vpack.c.bf16 %v3744, %v3744
    %v3753 = vpack.c.bf16 %v3745, %v3745
    %3754 = vrot.lane.b32.xlu0 %v552, 40
    %v3755 = vpop.permute.xlu0 %3754
    %v3757 = vsel %vm562, %v3746, 0
    %v3760 = vsel %vm1094, %v3755, 0
    %3762 = vmatprep.subr.bf16.mxu0 0
    %3763 = vmatpush1.bf16.msra.mxu0 %v3760
    %3764 = vmatprep.subr.bf16.mxu0 0
    %3765 = vmatpush1.bf16.msra.mxu0 0
    %3766 = vmatprep.subr.bf16.mxu0 0
    %3767 = vmatpush1.bf16.msra.mxu0 0
    %3768 = vmatprep.subr.bf16.mxu0 0
    %3769 = vmatpush1.bf16.msra.mxu0 0
    %3770 = vmatprep.subr.bf16.mxu0 0
    %3771 = vmatpush1.bf16.msra.mxu0 0
    %3772 = vmatprep.subr.bf16.mxu0 0
    %3773 = vmatpush1.bf16.msra.mxu0 0
    %3774 = vmatprep.subr.bf16.mxu0 0
    %3775 = vmatpush1.bf16.msra.mxu0 0
    %3776 = vmatprep.subr.bf16.mxu0 0
    %3777 = vmatpush1.bf16.msra.mxu0 0
    %3778 = vmatprep.subr.bf16.mxu0 0
    %3779 = vmatpush1.bf16.msra.mxu0 0
    %3780 = vmatprep.subr.bf16.mxu0 0
    %3781 = vmatpush1.bf16.msra.mxu0 0
    %3782 = vmatprep.subr.bf16.mxu0 0
    %3783 = vmatpush1.bf16.msra.mxu0 0
    %3784 = vmatprep.subr.bf16.mxu0 0
    %3785 = vmatpush1.bf16.msra.mxu0 0
    %3786 = vmatprep.subr.bf16.mxu0 0
    %3787 = vmatpush1.bf16.msra.mxu0 0
    %3788 = vmatprep.subr.bf16.mxu0 0
    %3789 = vmatpush1.bf16.msra.mxu0 0
    %3790 = vmatprep.subr.bf16.mxu0 0
    %3791 = vmatpush1.bf16.msra.mxu0 0
    %3792 = vmatprep.subr.bf16.mxu0 0
    %3793 = vmatpush1.bf16.msra.mxu0 0
    %3794 = vmatprep.mubr.bf16.mxu0 0
    %3795 = vmatmul.mubr.bf16.gmra.mrb[0].mxu0 %v3757
    %v3796 = vpop.f32.mrb[0].mxu0
    %v3797 = vadd.f32 0.0, %v3796
    %v3798 = vpop.f32.mrb[0].mxu0
    %v3799 = vpop.f32.mrb[0].mxu0
    %v3800 = vpop.f32.mrb[0].mxu0
    %3801 = vdwg.mxu0
    %3802 = vrot.lane.b32.xlu0 %v553, 40
    %v3803 = vpop.permute.xlu0 %3802
    %v3805 = vsel %vm562, %v3747, 0
    %v3808 = vsel %vm1094, %v3803, 0
    %3810 = vmatprep.subr.bf16.mxu0 0
    %3811 = vmatpush1.bf16.msra.mxu0 %v3808
    %3812 = vmatprep.subr.bf16.mxu0 0
    %3813 = vmatpush1.bf16.msra.mxu0 0
    %3814 = vmatprep.subr.bf16.mxu0 0
    %3815 = vmatpush1.bf16.msra.mxu0 0
    %3816 = vmatprep.subr.bf16.mxu0 0
    %3817 = vmatpush1.bf16.msra.mxu0 0
    %3818 = vmatprep.subr.bf16.mxu0 0
    %3819 = vmatpush1.bf16.msra.mxu0 0
    %3820 = vmatprep.subr.bf16.mxu0 0
    %3821 = vmatpush1.bf16.msra.mxu0 0
    %3822 = vmatprep.subr.bf16.mxu0 0
    %3823 = vmatpush1.bf16.msra.mxu0 0
    %3824 = vmatprep.subr.bf16.mxu0 0
    %3825 = vmatpush1.bf16.msra.mxu0 0
    %3826 = vmatprep.subr.bf16.mxu0 0
    %3827 = vmatpush1.bf16.msra.mxu0 0
    %3828 = vmatprep.subr.bf16.mxu0 0
    %3829 = vmatpush1.bf16.msra.mxu0 0
    %3830 = vmatprep.subr.bf16.mxu0 0
    %3831 = vmatpush1.bf16.msra.mxu0 0
    %3832 = vmatprep.subr.bf16.mxu0 0
    %3833 = vmatpush1.bf16.msra.mxu0 0
    %3834 = vmatprep.subr.bf16.mxu0 0
    %3835 = vmatpush1.bf16.msra.mxu0 0
    %3836 = vmatprep.subr.bf16.mxu0 0
    %3837 = vmatpush1.bf16.msra.mxu0 0
    %3838 = vmatprep.subr.bf16.mxu0 0
    %3839 = vmatpush1.bf16.msra.mxu0 0
    %3840 = vmatprep.subr.bf16.mxu0 0
    %3841 = vmatpush1.bf16.msra.mxu0 0
    %3842 = vmatprep.mubr.bf16.mxu0 0
    %3843 = vmatmul.mubr.bf16.gmra.mrb[0].mxu0 %v3805
    %v3844 = vpop.f32.mrb[0].mxu0
    %v3845 = vadd.f32 0.0, %v3844
    %v3846 = vpop.f32.mrb[0].mxu0
    %v3847 = vpop.f32.mrb[0].mxu0
    %v3848 = vpop.f32.mrb[0].mxu0
    %3849 = vdwg.mxu0
    %3850 = vrot.lane.b32.xlu0 %v554, 40
    %v3851 = vpop.permute.xlu0 %3850
    %v3853 = vsel %vm562, %v3748, 0
    %v3856 = vsel %vm1094, %v3851, 0
    %3858 = vmatprep.subr.bf16.mxu0 0
    %3859 = vmatpush1.bf16.msra.mxu0 %v3856
    %3860 = vmatprep.subr.bf16.mxu0 0
    %3861 = vmatpush1.bf16.msra.mxu0 0
    %3862 = vmatprep.subr.bf16.mxu0 0
    %3863 = vmatpush1.bf16.msra.mxu0 0
    %3864 = vmatprep.subr.bf16.mxu0 0
    %3865 = vmatpush1.bf16.msra.mxu0 0
    %3866 = vmatprep.subr.bf16.mxu0 0
    %3867 = vmatpush1.bf16.msra.mxu0 0
    %3868 = vmatprep.subr.bf16.mxu0 0
    %3869 = vmatpush1.bf16.msra.mxu0 0
    %3870 = vmatprep.subr.bf16.mxu0 0
    %3871 = vmatpush1.bf16.msra.mxu0 0
    %3872 = vmatprep.subr.bf16.mxu0 0
    %3873 = vmatpush1.bf16.msra.mxu0 0
    %3874 = vmatprep.subr.bf16.mxu0 0
    %3875 = vmatpush1.bf16.msra.mxu0 0
    %3876 = vmatprep.subr.bf16.mxu0 0
    %3877 = vmatpush1.bf16.msra.mxu0 0
    %3878 = vmatprep.subr.bf16.mxu0 0
    %3879 = vmatpush1.bf16.msra.mxu0 0
    %3880 = vmatprep.subr.bf16.mxu0 0
    %3881 = vmatpush1.bf16.msra.mxu0 0
    %3882 = vmatprep.subr.bf16.mxu0 0
    %3883 = vmatpush1.bf16.msra.mxu0 0
    %3884 = vmatprep.subr.bf16.mxu0 0
    %3885 = vmatpush1.bf16.msra.mxu0 0
    %3886 = vmatprep.subr.bf16.mxu0 0
    %3887 = vmatpush1.bf16.msra.mxu0 0
    %3888 = vmatprep.subr.bf16.mxu0 0
    %3889 = vmatpush1.bf16.msra.mxu0 0
    %3890 = vmatprep.mubr.bf16.mxu0 0
    %3891 = vmatmul.mubr.bf16.gmra.mrb[0].mxu0 %v3853
    %v3892 = vpop.f32.mrb[0].mxu0
    %v3893 = vadd.f32 0.0, %v3892
    %v3894 = vpop.f32.mrb[0].mxu0
    %v3895 = vpop.f32.mrb[0].mxu0
    %v3896 = vpop.f32.mrb[0].mxu0
    %3897 = vdwg.mxu0
    %3898 = vrot.lane.b32.xlu0 %v555, 40
    %v3899 = vpop.permute.xlu0 %3898
    %v3901 = vsel %vm562, %v3749, 0
    %v3904 = vsel %vm1094, %v3899, 0
    %3906 = vmatprep.subr.bf16.mxu0 0
    %3907 = vmatpush1.bf16.msra.mxu0 %v3904
    %3908 = vmatprep.subr.bf16.mxu0 0
    %3909 = vmatpush1.bf16.msra.mxu0 0
    %3910 = vmatprep.subr.bf16.mxu0 0
    %3911 = vmatpush1.bf16.msra.mxu0 0
    %3912 = vmatprep.subr.bf16.mxu0 0
    %3913 = vmatpush1.bf16.msra.mxu0 0
    %3914 = vmatprep.subr.bf16.mxu0 0
    %3915 = vmatpush1.bf16.msra.mxu0 0
    %3916 = vmatprep.subr.bf16.mxu0 0
    %3917 = vmatpush1.bf16.msra.mxu0 0
    %3918 = vmatprep.subr.bf16.mxu0 0
    %3919 = vmatpush1.bf16.msra.mxu0 0
    %3920 = vmatprep.subr.bf16.mxu0 0
    %3921 = vmatpush1.bf16.msra.mxu0 0
    %3922 = vmatprep.subr.bf16.mxu0 0
    %3923 = vmatpush1.bf16.msra.mxu0 0
    %3924 = vmatprep.subr.bf16.mxu0 0
    %3925 = vmatpush1.bf16.msra.mxu0 0
    %3926 = vmatprep.subr.bf16.mxu0 0
    %3927 = vmatpush1.bf16.msra.mxu0 0
    %3928 = vmatprep.subr.bf16.mxu0 0
    %3929 = vmatpush1.bf16.msra.mxu0 0
    %3930 = vmatprep.subr.bf16.mxu0 0
    %3931 = vmatpush1.bf16.msra.mxu0 0
    %3932 = vmatprep.subr.bf16.mxu0 0
    %3933 = vmatpush1.bf16.msra.mxu0 0
    %3934 = vmatprep.subr.bf16.mxu0 0
    %3935 = vmatpush1.bf16.msra.mxu0 0
    %3936 = vmatprep.subr.bf16.mxu0 0
    %3937 = vmatpush1.bf16.msra.mxu0 0
    %3938 = vmatprep.mubr.bf16.mxu0 0
    %3939 = vmatmul.mubr.bf16.gmra.mrb[0].mxu0 %v3901
    %v3940 = vpop.f32.mrb[0].mxu0
    %v3941 = vadd.f32 0.0, %v3940
    %v3942 = vpop.f32.mrb[0].mxu0
    %v3943 = vpop.f32.mrb[0].mxu0
    %v3944 = vpop.f32.mrb[0].mxu0
    %3945 = vdwg.mxu0
    %3946 = vrot.lane.b32.xlu0 %v556, 40
    %v3947 = vpop.permute.xlu0 %3946
    %v3949 = vsel %vm562, %v3750, 0
    %v3952 = vsel %vm1094, %v3947, 0
    %3954 = vmatprep.subr.bf16.mxu0 0
    %3955 = vmatpush1.bf16.msra.mxu0 %v3952
    %3956 = vmatprep.subr.bf16.mxu0 0
    %3957 = vmatpush1.bf16.msra.mxu0 0
    %3958 = vmatprep.subr.bf16.mxu0 0
    %3959 = vmatpush1.bf16.msra.mxu0 0
    %3960 = vmatprep.subr.bf16.mxu0 0
    %3961 = vmatpush1.bf16.msra.mxu0 0
    %3962 = vmatprep.subr.bf16.mxu0 0
    %3963 = vmatpush1.bf16.msra.mxu0 0
    %3964 = vmatprep.subr.bf16.mxu0 0
    %3965 = vmatpush1.bf16.msra.mxu0 0
    %3966 = vmatprep.subr.bf16.mxu0 0
    %3967 = vmatpush1.bf16.msra.mxu0 0
    %3968 = vmatprep.subr.bf16.mxu0 0
    %3969 = vmatpush1.bf16.msra.mxu0 0
    %3970 = vmatprep.subr.bf16.mxu0 0
    %3971 = vmatpush1.bf16.msra.mxu0 0
    %3972 = vmatprep.subr.bf16.mxu0 0
    %3973 = vmatpush1.bf16.msra.mxu0 0
    %3974 = vmatprep.subr.bf16.mxu0 0
    %3975 = vmatpush1.bf16.msra.mxu0 0
    %3976 = vmatprep.subr.bf16.mxu0 0
    %3977 = vmatpush1.bf16.msra.mxu0 0
    %3978 = vmatprep.subr.bf16.mxu0 0
    %3979 = vmatpush1.bf16.msra.mxu0 0
    %3980 = vmatprep.subr.bf16.mxu0 0
    %3981 = vmatpush1.bf16.msra.mxu0 0
    %3982 = vmatprep.subr.bf16.mxu0 0
    %3983 = vmatpush1.bf16.msra.mxu0 0
    %3984 = vmatprep.subr.bf16.mxu0 0
    %3985 = vmatpush1.bf16.msra.mxu0 0
    %3986 = vmatprep.mubr.bf16.mxu0 0
    %3987 = vmatmul.mubr.bf16.gmra.mrb[0].mxu0 %v3949
    %v3988 = vpop.f32.mrb[0].mxu0
    %v3989 = vadd.f32 0.0, %v3988
    %v3990 = vpop.f32.mrb[0].mxu0
    %v3991 = vpop.f32.mrb[0].mxu0
    %v3992 = vpop.f32.mrb[0].mxu0
    %3993 = vdwg.mxu0
    %3994 = vrot.lane.b32.xlu0 %v557, 40
    %v3995 = vpop.permute.xlu0 %3994
    %v3997 = vsel %vm562, %v3751, 0
    %v4000 = vsel %vm1094, %v3995, 0
    %4002 = vmatprep.subr.bf16.mxu0 0
    %4003 = vmatpush1.bf16.msra.mxu0 %v4000
    %4004 = vmatprep.subr.bf16.mxu0 0
    %4005 = vmatpush1.bf16.msra.mxu0 0
    %4006 = vmatprep.subr.bf16.mxu0 0
    %4007 = vmatpush1.bf16.msra.mxu0 0
    %4008 = vmatprep.subr.bf16.mxu0 0
    %4009 = vmatpush1.bf16.msra.mxu0 0
    %4010 = vmatprep.subr.bf16.mxu0 0
    %4011 = vmatpush1.bf16.msra.mxu0 0
    %4012 = vmatprep.subr.bf16.mxu0 0
    %4013 = vmatpush1.bf16.msra.mxu0 0
    %4014 = vmatprep.subr.bf16.mxu0 0
    %4015 = vmatpush1.bf16.msra.mxu0 0
    %4016 = vmatprep.subr.bf16.mxu0 0
    %4017 = vmatpush1.bf16.msra.mxu0 0
    %4018 = vmatprep.subr.bf16.mxu0 0
    %4019 = vmatpush1.bf16.msra.mxu0 0
    %4020 = vmatprep.subr.bf16.mxu0 0
    %4021 = vmatpush1.bf16.msra.mxu0 0
    %4022 = vmatprep.subr.bf16.mxu0 0
    %4023 = vmatpush1.bf16.msra.mxu0 0
    %4024 = vmatprep.subr.bf16.mxu0 0
    %4025 = vmatpush1.bf16.msra.mxu0 0
    %4026 = vmatprep.subr.bf16.mxu0 0
    %4027 = vmatpush1.bf16.msra.mxu0 0
    %4028 = vmatprep.subr.bf16.mxu0 0
    %4029 = vmatpush1.bf16.msra.mxu0 0
    %4030 = vmatprep.subr.bf16.mxu0 0
    %4031 = vmatpush1.bf16.msra.mxu0 0
    %4032 = vmatprep.subr.bf16.mxu0 0
    %4033 = vmatpush1.bf16.msra.mxu0 0
    %4034 = vmatprep.mubr.bf16.mxu0 0
    %4035 = vmatmul.mubr.bf16.gmra.mrb[0].mxu0 %v3997
    %v4036 = vpop.f32.mrb[0].mxu0
    %v4037 = vadd.f32 0.0, %v4036
    %v4038 = vpop.f32.mrb[0].mxu0
    %v4039 = vpop.f32.mrb[0].mxu0
    %v4040 = vpop.f32.mrb[0].mxu0
    %4041 = vdwg.mxu0
    %4042 = vrot.lane.b32.xlu0 %v558, 40
    %v4043 = vpop.permute.xlu0 %4042
    %v4045 = vsel %vm562, %v3752, 0
    %v4048 = vsel %vm1094, %v4043, 0
    %4050 = vmatprep.subr.bf16.mxu0 0
    %4051 = vmatpush1.bf16.msra.mxu0 %v4048
    %4052 = vmatprep.subr.bf16.mxu0 0
    %4053 = vmatpush1.bf16.msra.mxu0 0
    %4054 = vmatprep.subr.bf16.mxu0 0
    %4055 = vmatpush1.bf16.msra.mxu0 0
    %4056 = vmatprep.subr.bf16.mxu0 0
    %4057 = vmatpush1.bf16.msra.mxu0 0
    %4058 = vmatprep.subr.bf16.mxu0 0
    %4059 = vmatpush1.bf16.msra.mxu0 0
    %4060 = vmatprep.subr.bf16.mxu0 0
    %4061 = vmatpush1.bf16.msra.mxu0 0
    %4062 = vmatprep.subr.bf16.mxu0 0
    %4063 = vmatpush1.bf16.msra.mxu0 0
    %4064 = vmatprep.subr.bf16.mxu0 0
    %4065 = vmatpush1.bf16.msra.mxu0 0
    %4066 = vmatprep.subr.bf16.mxu0 0
    %4067 = vmatpush1.bf16.msra.mxu0 0
    %4068 = vmatprep.subr.bf16.mxu0 0
    %4069 = vmatpush1.bf16.msra.mxu0 0
    %4070 = vmatprep.subr.bf16.mxu0 0
    %4071 = vmatpush1.bf16.msra.mxu0 0
    %4072 = vmatprep.subr.bf16.mxu0 0
    %4073 = vmatpush1.bf16.msra.mxu0 0
    %4074 = vmatprep.subr.bf16.mxu0 0
    %4075 = vmatpush1.bf16.msra.mxu0 0
    %4076 = vmatprep.subr.bf16.mxu0 0
    %4077 = vmatpush1.bf16.msra.mxu0 0
    %4078 = vmatprep.subr.bf16.mxu0 0
    %4079 = vmatpush1.bf16.msra.mxu0 0
    %4080 = vmatprep.subr.bf16.mxu0 0
    %4081 = vmatpush1.bf16.msra.mxu0 0
    %4082 = vmatprep.mubr.bf16.mxu0 0
    %4083 = vmatmul.mubr.bf16.gmra.mrb[0].mxu0 %v4045
    %v4084 = vpop.f32.mrb[0].mxu0
    %v4085 = vadd.f32 0.0, %v4084
    %v4086 = vpop.f32.mrb[0].mxu0
    %v4087 = vpop.f32.mrb[0].mxu0
    %v4088 = vpop.f32.mrb[0].mxu0
    %4089 = vdwg.mxu0
    %4090 = vrot.lane.b32.xlu0 %v559, 40
    %v4091 = vpop.permute.xlu0 %4090
    %v4093 = vsel %vm562, %v3753, 0
    %v4096 = vsel %vm1094, %v4091, 0
    %4098 = vmatprep.subr.bf16.mxu0 0
    %4099 = vmatpush1.bf16.msra.mxu0 %v4096
    %4100 = vmatprep.subr.bf16.mxu0 0
    %4101 = vmatpush1.bf16.msra.mxu0 0
    %4102 = vmatprep.subr.bf16.mxu0 0
    %4103 = vmatpush1.bf16.msra.mxu0 0
    %4104 = vmatprep.subr.bf16.mxu0 0
    %4105 = vmatpush1.bf16.msra.mxu0 0
    %4106 = vmatprep.subr.bf16.mxu0 0
    %4107 = vmatpush1.bf16.msra.mxu0 0
    %4108 = vmatprep.subr.bf16.mxu0 0
    %4109 = vmatpush1.bf16.msra.mxu0 0
    %4110 = vmatprep.subr.bf16.mxu0 0
    %4111 = vmatpush1.bf16.msra.mxu0 0
    %4112 = vmatprep.subr.bf16.mxu0 0
    %4113 = vmatpush1.bf16.msra.mxu0 0
    %4114 = vmatprep.subr.bf16.mxu0 0
    %4115 = vmatpush1.bf16.msra.mxu0 0
    %4116 = vmatprep.subr.bf16.mxu0 0
    %4117 = vmatpush1.bf16.msra.mxu0 0
    %4118 = vmatprep.subr.bf16.mxu0 0
    %4119 = vmatpush1.bf16.msra.mxu0 0
    %4120 = vmatprep.subr.bf16.mxu0 0
    %4121 = vmatpush1.bf16.msra.mxu0 0
    %4122 = vmatprep.subr.bf16.mxu0 0
    %4123 = vmatpush1.bf16.msra.mxu0 0
    %4124 = vmatprep.subr.bf16.mxu0 0
    %4125 = vmatpush1.bf16.msra.mxu0 0
    %4126 = vmatprep.subr.bf16.mxu0 0
    %4127 = vmatpush1.bf16.msra.mxu0 0
    %4128 = vmatprep.subr.bf16.mxu0 0
    %4129 = vmatpush1.bf16.msra.mxu0 0
    %4130 = vmatprep.mubr.bf16.mxu0 0
    %4131 = vmatmul.mubr.bf16.gmra.mrb[0].mxu0 %v4093
    %v4132 = vpop.f32.mrb[0].mxu0
    %v4133 = vadd.f32 0.0, %v4132
    %v4134 = vpop.f32.mrb[0].mxu0
    %v4135 = vpop.f32.mrb[0].mxu0
    %v4136 = vpop.f32.mrb[0].mxu0
    %4137 = vdwg.mxu0
    %4146 = vrot.lane.b32.xlu0 %v2021, 8
    %v4147 = vpop.permute.xlu0 %4146
    %4148 = vrot.lane.b32.xlu0 %v2069, 8
    %v4149 = vpop.permute.xlu0 %4148
    %4150 = vrot.lane.b32.xlu0 %v2117, 8
    %v4151 = vpop.permute.xlu0 %4150
    %4152 = vrot.lane.b32.xlu0 %v2165, 8
    %v4153 = vpop.permute.xlu0 %4152
    %4154 = vrot.lane.b32.xlu0 %v2213, 8
    %v4155 = vpop.permute.xlu0 %4154
    %4156 = vrot.lane.b32.xlu0 %v2261, 8
    %v4157 = vpop.permute.xlu0 %4156
    %4158 = vrot.lane.b32.xlu0 %v2309, 8
    %v4159 = vpop.permute.xlu0 %4158
    %4160 = vrot.lane.b32.xlu0 %v2357, 8
    %v4161 = vpop.permute.xlu0 %4160
    %4178 = vrot.lane.b32.xlu0 %v2909, 16
    %v4179 = vpop.permute.xlu0 %4178
    %4180 = vrot.lane.b32.xlu0 %v2957, 16
    %v4181 = vpop.permute.xlu0 %4180
    %4182 = vrot.lane.b32.xlu0 %v3005, 16
    %v4183 = vpop.permute.xlu0 %4182
    %4184 = vrot.lane.b32.xlu0 %v3053, 16
    %v4185 = vpop.permute.xlu0 %4184
    %4186 = vrot.lane.b32.xlu0 %v3101, 16
    %v4187 = vpop.permute.xlu0 %4186
    %4188 = vrot.lane.b32.xlu0 %v3149, 16
    %v4189 = vpop.permute.xlu0 %4188
    %4190 = vrot.lane.b32.xlu0 %v3197, 16
    %v4191 = vpop.permute.xlu0 %4190
    %4192 = vrot.lane.b32.xlu0 %v3245, 16
    %v4193 = vpop.permute.xlu0 %4192
    %4210 = vrot.lane.b32.xlu0 %v3797, 24
    %v4211 = vpop.permute.xlu0 %4210
    %4212 = vrot.lane.b32.xlu0 %v3845, 24
    %v4213 = vpop.permute.xlu0 %4212
    %4214 = vrot.lane.b32.xlu0 %v3893, 24
    %v4215 = vpop.permute.xlu0 %4214
    %4216 = vrot.lane.b32.xlu0 %v3941, 24
    %v4217 = vpop.permute.xlu0 %4216
    %4218 = vrot.lane.b32.xlu0 %v3989, 24
    %v4219 = vpop.permute.xlu0 %4218
    %4220 = vrot.lane.b32.xlu0 %v4037, 24
    %v4221 = vpop.permute.xlu0 %4220
    %4222 = vrot.lane.b32.xlu0 %v4085, 24
    %v4223 = vpop.permute.xlu0 %4222
    %4224 = vrot.lane.b32.xlu0 %v4133, 24
    %v4225 = vpop.permute.xlu0 %4224
    %v4234 = vsel %vm562, %v1133, %v4147
    %v4235 = vsel %vm562, %v1181, %v4149
    %v4236 = vsel %vm562, %v1229, %v4151
    %v4237 = vsel %vm562, %v1277, %v4153
    %v4238 = vsel %vm562, %v1325, %v4155
    %v4239 = vsel %vm562, %v1373, %v4157
    %v4240 = vsel %vm562, %v1421, %v4159
    %v4241 = vsel %vm562, %v1469, %v4161
    %vm4242 = vcmask 130048
    %v4243 = vsel %vm4242, %v4234, %v4179
    %v4244 = vsel %vm4242, %v4235, %v4181
    %v4245 = vsel %vm4242, %v4236, %v4183
    %v4246 = vsel %vm4242, %v4237, %v4185
    %v4247 = vsel %vm4242, %v4238, %v4187
    %v4248 = vsel %vm4242, %v4239, %v4189
    %v4249 = vsel %vm4242, %v4240, %v4191
    %v4250 = vsel %vm4242, %v4241, %v4193
    %vm4251 = vcmask 195584
    %v4252 = vsel %vm4251, %v4243, %v4211
    %v4253 = vsel %vm4251, %v4244, %v4213
    %v4254 = vsel %vm4251, %v4245, %v4215
    %v4255 = vsel %vm4251, %v4246, %v4217
    %v4256 = vsel %vm4251, %v4247, %v4219
    %v4257 = vsel %vm4251, %v4248, %v4221
    %v4258 = vsel %vm4251, %v4249, %v4223
    %v4259 = vsel %vm4251, %v4250, %v4225
    %v4260 = vpack.c.bf16 %v4253, %v4252
    %v4261 = vpack.c.bf16 %v4255, %v4254
    %v4262 = vpack.c.bf16 %v4257, %v4256
    %v4263 = vpack.c.bf16 %v4259, %v4258
    %v4268 = vunpack.c.l.b16 %v340
    %v4269 = vunpack.c.l.b16 %v341
    %v4270 = vunpack.c.l.b16 %v342
    %v4271 = vunpack.c.l.b16 %v343
    %v4272 = vpack.c.b16 %v4269, %v4268
    %v4273 = vpack.c.b16 %v4271, %v4270
    %v4277 = vsel %vm373, %v4260, 0
    %v4280 = vsel %vm373, %v4261, 0
    %v4283 = vsel %vm373, %v4262, 0
    %v4286 = vsel %vm373, %v4263, 0
    %4288 = vmatprep.subr.bf16.mxu0 0
    %4289 = vmatpush1.bf16.msra.mxu0 %v4272
    %4290 = vmatprep.subr.bf16.mxu0 0
    %4291 = vmatpush1.bf16.msra.mxu0 %v4273
    %4292 = vmatprep.subr.bf16.mxu0 0
    %4293 = vmatpush1.bf16.msra.mxu0 0
    %4294 = vmatprep.subr.bf16.mxu0 0
    %4295 = vmatpush1.bf16.msra.mxu0 0
    %4296 = vmatprep.subr.bf16.mxu0 0
    %4297 = vmatpush1.bf16.msra.mxu0 0
    %4298 = vmatprep.subr.bf16.mxu0 0
    %4299 = vmatpush1.bf16.msra.mxu0 0
    %4300 = vmatprep.subr.bf16.mxu0 0
    %4301 = vmatpush1.bf16.msra.mxu0 0
    %4302 = vmatprep.subr.bf16.mxu0 0
    %4303 = vmatpush1.bf16.msra.mxu0 0
    %4304 = vmatprep.subr.bf16.mxu0 0
    %4305 = vmatpush1.bf16.msra.mxu0 0
    %4306 = vmatprep.subr.bf16.mxu0 0
    %4307 = vmatpush1.bf16.msra.mxu0 0
    %4308 = vmatprep.subr.bf16.mxu0 0
    %4309 = vmatpush1.bf16.msra.mxu0 0
    %4310 = vmatprep.subr.bf16.mxu0 0
    %4311 = vmatpush1.bf16.msra.mxu0 0
    %4312 = vmatprep.subr.bf16.mxu0 0
    %4313 = vmatpush1.bf16.msra.mxu0 0
    %4314 = vmatprep.subr.bf16.mxu0 0
    %4315 = vmatpush1.bf16.msra.mxu0 0
    %4316 = vmatprep.subr.bf16.mxu0 0
    %4317 = vmatpush1.bf16.msra.mxu0 0
    %4318 = vmatprep.subr.bf16.mxu0 0
    %4319 = vmatpush1.bf16.msra.mxu0 0
    %4320 = vmatprep.mubr.bf16.mxu0 0
    %4321 = vmatmul.mubr.bf16.gmra.mrb[0].mxu0 %v4277
    %v4322 = vpop.f32.mrb[0].mxu0
    %v4323 = vadd.f32 0.0, %v4322
    %v4324 = vpop.f32.mrb[0].mxu0
    %v4325 = vpop.f32.mrb[0].mxu0
    %v4326 = vadd.f32 0.0, %v4325
    %v4327 = vpop.f32.mrb[0].mxu0
    %4328 = vmatprep.mubr.bf16.mxu0 0
    %4329 = vmatmul.mubr.bf16.gmra.mrb[0].mxu0 %v4280
    %v4330 = vpop.f32.mrb[0].mxu0
    %v4331 = vadd.f32 0.0, %v4330
    %v4332 = vpop.f32.mrb[0].mxu0
    %v4333 = vpop.f32.mrb[0].mxu0
    %v4334 = vadd.f32 0.0, %v4333
    %v4335 = vpop.f32.mrb[0].mxu0
    %4336 = vmatprep.mubr.bf16.mxu0 0
    %4337 = vmatmul.mubr.bf16.gmra.mrb[0].mxu0 %v4283
    %v4338 = vpop.f32.mrb[0].mxu0
    %v4339 = vadd.f32 0.0, %v4338
    %v4340 = vpop.f32.mrb[0].mxu0
    %v4341 = vpop.f32.mrb[0].mxu0
    %v4342 = vadd.f32 0.0, %v4341
    %v4343 = vpop.f32.mrb[0].mxu0
    %4344 = vmatprep.mubr.bf16.mxu0 0
    %4345 = vmatmul.mubr.bf16.gmra.mrb[0].mxu0 %v4286
    %v4346 = vpop.f32.mrb[0].mxu0
    %v4347 = vadd.f32 0.0, %v4346
    %v4348 = vpop.f32.mrb[0].mxu0
    %v4349 = vpop.f32.mrb[0].mxu0
    %v4350 = vadd.f32 0.0, %v4349
    %v4351 = vpop.f32.mrb[0].mxu0
    %4352 = vdwg.mxu0
    %v4353 = vadd.f32 %v323, %v4323
    %v4354 = vadd.f32 %v324, %v4326
    %v4355 = vadd.f32 %v325, %v4331
    %v4356 = vadd.f32 %v326, %v4334
    %v4357 = vadd.f32 %v327, %v4339
    %v4358 = vadd.f32 %v328, %v4342
    %v4359 = vadd.f32 %v329, %v4347
    %v4360 = vadd.f32 %v330, %v4350
    %v4361 = vmul.f32 %v4353, %v4353
    %v4362 = vmul.f32 %v4354, %v4354
    %v4363 = vmul.f32 %v4355, %v4355
    %v4364 = vmul.f32 %v4356, %v4356
    %v4365 = vmul.f32 %v4357, %v4357
    %v4366 = vmul.f32 %v4358, %v4358
    %v4367 = vmul.f32 %v4359, %v4359
    %v4368 = vmul.f32 %v4360, %v4360
    %v4369 = vsel %vm373, %v4361, 0.0
    %4370 = vadd.xlane.f32.xlu0 %v4369
    %v4371 = vpop.xlane.xlu0 %4370
    %v4372 = vsel %vm373, %v4362, 0.0
    %4373 = vadd.xlane.f32.xlu0 %v4372
    %v4374 = vpop.xlane.xlu0 %4373
    %v4375 = vsel %vm373, %v4363, 0.0
    %4376 = vadd.xlane.f32.xlu0 %v4375
    %v4377 = vpop.xlane.xlu0 %4376
    %v4378 = vsel %vm373, %v4364, 0.0
    %4379 = vadd.xlane.f32.xlu0 %v4378
    %v4380 = vpop.xlane.xlu0 %4379
    %v4381 = vsel %vm373, %v4365, 0.0
    %4382 = vadd.xlane.f32.xlu0 %v4381
    %v4383 = vpop.xlane.xlu0 %4382
    %v4384 = vsel %vm373, %v4366, 0.0
    %4385 = vadd.xlane.f32.xlu0 %v4384
    %v4386 = vpop.xlane.xlu0 %4385
    %v4387 = vsel %vm373, %v4367, 0.0
    %4388 = vadd.xlane.f32.xlu0 %v4387
    %v4389 = vpop.xlane.xlu0 %4388
    %v4390 = vsel %vm373, %v4368, 0.0
    %4391 = vadd.xlane.f32.xlu0 %v4390
    %v4392 = vpop.xlane.xlu0 %4391
    %v4393 = vmul.f32 %v4371, %v398
    %v4394 = vmul.f32 %v4374, %v398
    %v4395 = vmul.f32 %v4377, %v398
    %v4396 = vmul.f32 %v4380, %v398
    %v4397 = vmul.f32 %v4383, %v398
    %v4398 = vmul.f32 %v4386, %v398
    %v4399 = vmul.f32 %v4389, %v398
    %v4400 = vmul.f32 %v4392, %v398
    %v4401 = vadd.f32 %v4393, 1e-06
    %v4402 = vadd.f32 %v4394, 1e-06
    %v4403 = vadd.f32 %v4395, 1e-06
    %v4404 = vadd.f32 %v4396, 1e-06
    %v4405 = vadd.f32 %v4397, 1e-06
    %v4406 = vadd.f32 %v4398, 1e-06
    %v4407 = vadd.f32 %v4399, 1e-06
    %v4408 = vadd.f32 %v4400, 1e-06
    %v4409 = vrsqrt.pop %v4401
    %v4410 = vrsqrt.pop %v4402
    %v4411 = vrsqrt.pop %v4403
    %v4412 = vrsqrt.pop %v4404
    %v4413 = vrsqrt.pop %v4405
    %v4414 = vrsqrt.pop %v4406
    %v4415 = vrsqrt.pop %v4407
    %v4416 = vrsqrt.pop %v4408
    %v4417 = vmul.f32 %v4353, %v4409
    %v4418 = vmul.f32 %v4354, %v4410
    %v4419 = vmul.f32 %v4355, %v4411
    %v4420 = vmul.f32 %v4356, %v4412
    %v4421 = vmul.f32 %v4357, %v4413
    %v4422 = vmul.f32 %v4358, %v4414
    %v4423 = vmul.f32 %v4359, %v4415
    %v4424 = vmul.f32 %v4360, %v4416
    %v4425 = vlaneseq
    %v4426 = vshrl.u32 %v4425, 7
    %v4427 = vsub.s32 0, %v4426
    %v4428 = vrot.slane %v364, %v4427
    %v4429 = vmul.f32 %v4417, %v4428
    %v4430 = vmul.f32 %v4418, %v4428
    %v4431 = vmul.f32 %v4419, %v4428
    %v4432 = vmul.f32 %v4420, %v4428
    %v4433 = vmul.f32 %v4421, %v4428
    %v4434 = vmul.f32 %v4422, %v4428
    %v4435 = vmul.f32 %v4423, %v4428
    %v4436 = vmul.f32 %v4424, %v4428
    %v4437 = vpack.c.bf16 %v4430, %v4429
    %v4438 = vpack.c.bf16 %v4432, %v4431
    %v4439 = vpack.c.bf16 %v4434, %v4433
    %v4440 = vpack.c.bf16 %v4436, %v4435
    %v4445 = vunpack.c.l.b16 %v346
    %v4446 = vunpack.c.l.b16 %v347
    %v4447 = vunpack.c.l.b16 %v348
    %v4448 = vunpack.c.l.b16 %v349
    %v4449 = vpack.c.b16 %v4446, %v4445
    %v4450 = vpack.c.b16 %v4448, %v4447
    %v4454 = vsel %vm373, %v4437, 0
    %v4457 = vsel %vm373, %v4438, 0
    %v4460 = vsel %vm373, %v4439, 0
    %v4463 = vsel %vm373, %v4440, 0
    %4465 = vmatprep.subr.bf16.mxu0 0
    %4466 = vmatpush1.bf16.msra.mxu0 %v4449
    %4467 = vmatprep.subr.bf16.mxu0 0
    %4468 = vmatpush1.bf16.msra.mxu0 %v4450
    %4469 = vmatprep.subr.bf16.mxu0 0
    %4470 = vmatpush1.bf16.msra.mxu0 0
    %4471 = vmatprep.subr.bf16.mxu0 0
    %4472 = vmatpush1.bf16.msra.mxu0 0
    %4473 = vmatprep.subr.bf16.mxu0 0
    %4474 = vmatpush1.bf16.msra.mxu0 0
    %4475 = vmatprep.subr.bf16.mxu0 0
    %4476 = vmatpush1.bf16.msra.mxu0 0
    %4477 = vmatprep.subr.bf16.mxu0 0
    %4478 = vmatpush1.bf16.msra.mxu0 0
    %4479 = vmatprep.subr.bf16.mxu0 0
    %4480 = vmatpush1.bf16.msra.mxu0 0
    %4481 = vmatprep.subr.bf16.mxu0 0
    %4482 = vmatpush1.bf16.msra.mxu0 0
    %4483 = vmatprep.subr.bf16.mxu0 0
    %4484 = vmatpush1.bf16.msra.mxu0 0
    %4485 = vmatprep.subr.bf16.mxu0 0
    %4486 = vmatpush1.bf16.msra.mxu0 0
    %4487 = vmatprep.subr.bf16.mxu0 0
    %4488 = vmatpush1.bf16.msra.mxu0 0
    %4489 = vmatprep.subr.bf16.mxu0 0
    %4490 = vmatpush1.bf16.msra.mxu0 0
    %4491 = vmatprep.subr.bf16.mxu0 0
    %4492 = vmatpush1.bf16.msra.mxu0 0
    %4493 = vmatprep.subr.bf16.mxu0 0
    %4494 = vmatpush1.bf16.msra.mxu0 0
    %4495 = vmatprep.subr.bf16.mxu0 0
    %4496 = vmatpush1.bf16.msra.mxu0 0
    %4497 = vmatprep.mubr.bf16.mxu0 0
    %4498 = vmatmul.mubr.bf16.gmra.mrb[0].mxu0 %v4454
    %v4499 = vpop.f32.mrb[0].mxu0
    %v4500 = vadd.f32 0.0, %v4499
    %v4501 = vpop.f32.mrb[0].mxu0
    %v4502 = vpop.f32.mrb[0].mxu0
    %v4503 = vadd.f32 0.0, %v4502
    %v4504 = vpop.f32.mrb[0].mxu0
    %4505 = vmatprep.mubr.bf16.mxu0 0
    %4506 = vmatmul.mubr.bf16.gmra.mrb[0].mxu0 %v4457
    %v4507 = vpop.f32.mrb[0].mxu0
    %v4508 = vadd.f32 0.0, %v4507
    %v4509 = vpop.f32.mrb[0].mxu0
    %v4510 = vpop.f32.mrb[0].mxu0
    %v4511 = vadd.f32 0.0, %v4510
    %v4512 = vpop.f32.mrb[0].mxu0
    %4513 = vmatprep.mubr.bf16.mxu0 0
    %4514 = vmatmul.mubr.bf16.gmra.mrb[0].mxu0 %v4460
    %v4515 = vpop.f32.mrb[0].mxu0
    %v4516 = vadd.f32 0.0, %v4515
    %v4517 = vpop.f32.mrb[0].mxu0
    %v4518 = vpop.f32.mrb[0].mxu0
    %v4519 = vadd.f32 0.0, %v4518
    %v4520 = vpop.f32.mrb[0].mxu0
    %4521 = vmatprep.mubr.bf16.mxu0 0
    %4522 = vmatmul.mubr.bf16.gmra.mrb[0].mxu0 %v4463
    %v4523 = vpop.f32.mrb[0].mxu0
    %v4524 = vadd.f32 0.0, %v4523
    %v4525 = vpop.f32.mrb[0].mxu0
    %v4526 = vpop.f32.mrb[0].mxu0
    %v4527 = vadd.f32 0.0, %v4526
    %v4528 = vpop.f32.mrb[0].mxu0
    %4529 = vdwg.mxu0
    %v4530 = vmax.f32 %v4500, 0.0
    %v4531 = vmax.f32 %v4503, 0.0
    %v4532 = vmax.f32 %v4508, 0.0
    %v4533 = vmax.f32 %v4511, 0.0
    %v4534 = vmax.f32 %v4516, 0.0
    %v4535 = vmax.f32 %v4519, 0.0
    %v4536 = vmax.f32 %v4524, 0.0
    %v4537 = vmax.f32 %v4527, 0.0
    %v4538 = vpack.c.bf16 %v4531, %v4530
    %v4539 = vpack.c.bf16 %v4533, %v4532
    %v4540 = vpack.c.bf16 %v4535, %v4534
    %v4541 = vpack.c.bf16 %v4537, %v4536
    %v4550 = vunpack.c.l.b16 %v353
    %v4551 = vunpack.c.l.b16 %v354
    %v4552 = vunpack.c.l.b16 %v355
    %v4553 = vunpack.c.l.b16 %v356
    %v4554 = vunpack.c.l.b16 %v357
    %v4555 = vunpack.c.l.b16 %v358
    %v4556 = vunpack.c.l.b16 %v359
    %v4557 = vunpack.c.l.b16 %v360
    %v4558 = vpack.c.b16 %v4551, %v4550
    %v4559 = vpack.c.b16 %v4553, %v4552
    %v4560 = vpack.c.b16 %v4555, %v4554
    %v4561 = vpack.c.b16 %v4557, %v4556
    %v4567 = vsel %vm182, %v4538, 0
    %v4570 = vsel %vm182, %v4539, 0
    %v4573 = vsel %vm182, %v4540, 0
    %v4576 = vsel %vm182, %v4541, 0
    %4578 = vmatprep.subr.bf16.mxu0 0
    %4579 = vmatpush1.bf16.msra.mxu0 %v4558
    %4580 = vmatprep.subr.bf16.mxu0 0
    %4581 = vmatpush1.bf16.msra.mxu0 %v4559
    %4582 = vmatprep.subr.bf16.mxu0 0
    %4583 = vmatpush1.bf16.msra.mxu0 %v4560
    %4584 = vmatprep.subr.bf16.mxu0 0
    %4585 = vmatpush1.bf16.msra.mxu0 %v4561
    %4586 = vmatprep.subr.bf16.mxu0 0
    %4587 = vmatpush1.bf16.msra.mxu0 0
    %4588 = vmatprep.subr.bf16.mxu0 0
    %4589 = vmatpush1.bf16.msra.mxu0 0
    %4590 = vmatprep.subr.bf16.mxu0 0
    %4591 = vmatpush1.bf16.msra.mxu0 0
    %4592 = vmatprep.subr.bf16.mxu0 0
    %4593 = vmatpush1.bf16.msra.mxu0 0
    %4594 = vmatprep.subr.bf16.mxu0 0
    %4595 = vmatpush1.bf16.msra.mxu0 0
    %4596 = vmatprep.subr.bf16.mxu0 0
    %4597 = vmatpush1.bf16.msra.mxu0 0
    %4598 = vmatprep.subr.bf16.mxu0 0
    %4599 = vmatpush1.bf16.msra.mxu0 0
    %4600 = vmatprep.subr.bf16.mxu0 0
    %4601 = vmatpush1.bf16.msra.mxu0 0
    %4602 = vmatprep.subr.bf16.mxu0 0
    %4603 = vmatpush1.bf16.msra.mxu0 0
    %4604 = vmatprep.subr.bf16.mxu0 0
    %4605 = vmatpush1.bf16.msra.mxu0 0
    %4606 = vmatprep.subr.bf16.mxu0 0
    %4607 = vmatpush1.bf16.msra.mxu0 0
    %4608 = vmatprep.subr.bf16.mxu0 0
    %4609 = vmatpush1.bf16.msra.mxu0 0
    %4610 = vmatprep.mubr.bf16.mxu0 0
    %4611 = vmatmul.mubr.bf16.gmra.mrb[0].mxu0 %v4567
    %v4612 = vpop.f32.mrb[0].mxu0
    %v4613 = vadd.f32 0.0, %v4612
    %v4614 = vpop.f32.mrb[0].mxu0
    %v4615 = vpop.f32.mrb[0].mxu0
    %v4616 = vadd.f32 0.0, %v4615
    %v4617 = vpop.f32.mrb[0].mxu0
    %4618 = vmatprep.mubr.bf16.mxu0 0
    %4619 = vmatmul.mubr.bf16.gmra.mrb[0].mxu0 %v4570
    %v4620 = vpop.f32.mrb[0].mxu0
    %v4621 = vadd.f32 0.0, %v4620
    %v4622 = vpop.f32.mrb[0].mxu0
    %v4623 = vpop.f32.mrb[0].mxu0
    %v4624 = vadd.f32 0.0, %v4623
    %v4625 = vpop.f32.mrb[0].mxu0
    %4626 = vmatprep.mubr.bf16.mxu0 0
    %4627 = vmatmul.mubr.bf16.gmra.mrb[0].mxu0 %v4573
    %v4628 = vpop.f32.mrb[0].mxu0
    %v4629 = vadd.f32 0.0, %v4628
    %v4630 = vpop.f32.mrb[0].mxu0
    %v4631 = vpop.f32.mrb[0].mxu0
    %v4632 = vadd.f32 0.0, %v4631
    %v4633 = vpop.f32.mrb[0].mxu0
    %4634 = vmatprep.mubr.bf16.mxu0 0
    %4635 = vmatmul.mubr.bf16.gmra.mrb[0].mxu0 %v4576
    %v4636 = vpop.f32.mrb[0].mxu0
    %v4637 = vadd.f32 0.0, %v4636
    %v4638 = vpop.f32.mrb[0].mxu0
    %v4639 = vpop.f32.mrb[0].mxu0
    %v4640 = vadd.f32 0.0, %v4639
    %v4641 = vpop.f32.mrb[0].mxu0
    %4642 = vdwg.mxu0
    %v4643 = vadd.f32 %v4353, %v4613
    %v4644 = vadd.f32 %v4354, %v4616
    %v4645 = vadd.f32 %v4355, %v4621
    %v4646 = vadd.f32 %v4356, %v4624
    %v4647 = vadd.f32 %v4357, %v4629
    %v4648 = vadd.f32 %v4358, %v4632
    %v4649 = vadd.f32 %v4359, %v4637
    %v4650 = vadd.f32 %v4360, %v4640
  $region50: #{fid_encoder_forward.1} parent=0 // loop_footer
    %s322 = sadd.s32 1, %s318
  $region51: #{fid_encoder_forward.1} parent=0 // loop_footer_branch
    %317 = sbr.rel target = $region47
  $region52: #{fid_encoder_forward.1} parent=0 // loop_exit
    _
  %v4651 = vld [vmem:[%s10] sm:$0x1]
  %v4652 = vmul.f32 %v323, %v323
  %v4653 = vmul.f32 %v324, %v324
  %v4654 = vmul.f32 %v325, %v325
  %v4655 = vmul.f32 %v326, %v326
  %v4656 = vmul.f32 %v327, %v327
  %v4657 = vmul.f32 %v328, %v328
  %v4658 = vmul.f32 %v329, %v329
  %v4659 = vmul.f32 %v330, %v330
  %vm4660 = vcmask 261120
  %v4661 = vsel %vm4660, %v4652, 0.0
  %4662 = vadd.xlane.f32.xlu0 %v4661
  %v4663 = vpop.xlane.xlu0 %4662
  %v4664 = vsel %vm4660, %v4653, 0.0
  %4665 = vadd.xlane.f32.xlu0 %v4664
  %v4666 = vpop.xlane.xlu0 %4665
  %v4667 = vsel %vm4660, %v4654, 0.0
  %4668 = vadd.xlane.f32.xlu0 %v4667
  %v4669 = vpop.xlane.xlu0 %4668
  %v4670 = vsel %vm4660, %v4655, 0.0
  %4671 = vadd.xlane.f32.xlu0 %v4670
  %v4672 = vpop.xlane.xlu0 %4671
  %v4673 = vsel %vm4660, %v4656, 0.0
  %4674 = vadd.xlane.f32.xlu0 %v4673
  %v4675 = vpop.xlane.xlu0 %4674
  %v4676 = vsel %vm4660, %v4657, 0.0
  %4677 = vadd.xlane.f32.xlu0 %v4676
  %v4678 = vpop.xlane.xlu0 %4677
  %v4679 = vsel %vm4660, %v4658, 0.0
  %4680 = vadd.xlane.f32.xlu0 %v4679
  %v4681 = vpop.xlane.xlu0 %4680
  %v4682 = vsel %vm4660, %v4659, 0.0
  %4683 = vadd.xlane.f32.xlu0 %v4682
  %v4684 = vpop.xlane.xlu0 %4683
  %v4685 = vrcp.pop 32.0
  %v4686 = vmul.f32 %v4663, %v4685
  %v4687 = vmul.f32 %v4666, %v4685
  %v4688 = vmul.f32 %v4669, %v4685
  %v4689 = vmul.f32 %v4672, %v4685
  %v4690 = vmul.f32 %v4675, %v4685
  %v4691 = vmul.f32 %v4678, %v4685
  %v4692 = vmul.f32 %v4681, %v4685
  %v4693 = vmul.f32 %v4684, %v4685
  %v4694 = vadd.f32 %v4686, 1e-06
  %v4695 = vadd.f32 %v4687, 1e-06
  %v4696 = vadd.f32 %v4688, 1e-06
  %v4697 = vadd.f32 %v4689, 1e-06
  %v4698 = vadd.f32 %v4690, 1e-06
  %v4699 = vadd.f32 %v4691, 1e-06
  %v4700 = vadd.f32 %v4692, 1e-06
  %v4701 = vadd.f32 %v4693, 1e-06
  %v4702 = vrsqrt.pop %v4694
  %v4703 = vrsqrt.pop %v4695
  %v4704 = vrsqrt.pop %v4696
  %v4705 = vrsqrt.pop %v4697
  %v4706 = vrsqrt.pop %v4698
  %v4707 = vrsqrt.pop %v4699
  %v4708 = vrsqrt.pop %v4700
  %v4709 = vrsqrt.pop %v4701
  %v4710 = vmul.f32 %v323, %v4702
  %v4711 = vmul.f32 %v324, %v4703
  %v4712 = vmul.f32 %v325, %v4704
  %v4713 = vmul.f32 %v326, %v4705
  %v4714 = vmul.f32 %v327, %v4706
  %v4715 = vmul.f32 %v328, %v4707
  %v4716 = vmul.f32 %v329, %v4708
  %v4717 = vmul.f32 %v330, %v4709
  %v4719 = vlaneseq
  %v4720 = vshrl.u32 %v4719, 7
  %v4721 = vsub.s32 0, %v4720
  %v4722 = vrot.slane %v4651, %v4721
  %v4724 = vmul.f32 %v4710, %v4722
  %v4725 = vmul.f32 %v4711, %v4722
  %v4726 = vmul.f32 %v4712, %v4722
  %v4727 = vmul.f32 %v4713, %v4722
  %v4728 = vmul.f32 %v4714, %v4722
  %v4729 = vmul.f32 %v4715, %v4722
  %v4730 = vmul.f32 %v4716, %v4722
  %v4731 = vmul.f32 %v4717, %v4722
  %4732 = vst.msk [vmem:[#allocation2] sm:$0xff] %vm4660, %v4724
  %4733 = vst.msk [vmem:[#allocation2 + $0x8] sm:$0xff] %vm4660, %v4725
  %4734 = vst.msk [vmem:[#allocation2 + $0x10] sm:$0xff] %vm4660, %v4726
  %4735 = vst.msk [vmem:[#allocation2 + $0x18] sm:$0xff] %vm4660, %v4727
  %4736 = vst.msk [vmem:[#allocation2 + $0x20] sm:$0xff] %vm4660, %v4728
  %4737 = vst.msk [vmem:[#allocation2 + $0x28] sm:$0xff] %vm4660, %v4729
  %4738 = vst.msk [vmem:[#allocation2 + $0x30] sm:$0xff] %vm4660, %v4730
  %4739 = vst.msk [vmem:[#allocation2 + $0x38] sm:$0xff] %vm4660, %v4731
  %v4740 = vld [vmem:[#allocation2] ss:$8 sm:$0xf]
  %v4741 = vld [vmem:[#allocation2] ss:$8 sm:$0xf0]
  %v4742 = vor.u32 %v4740, %v4741
  %s4743 = scalar_lea.vmem [#allocation2], 1
  %v4744 = vld [vmem:[%s4743] ss:$8 sm:$0xf]
  %v4745 = vld [vmem:[%s4743] ss:$8 sm:$0xf0]
  %v4746 = vor.u32 %v4744, %v4745
  %s4747 = scalar_lea.vmem [#allocation2], 2
  %v4748 = vld [vmem:[%s4747] ss:$8 sm:$0xf]
  %v4749 = vld [vmem:[%s4747] ss:$8 sm:$0xf0]
  %v4750 = vor.u32 %v4748, %v4749
  %s4751 = scalar_lea.vmem [#allocation2], 3
  %v4752 = vld [vmem:[%s4751] ss:$8 sm:$0xf]
  %v4753 = vld [vmem:[%s4751] ss:$8 sm:$0xf0]
  %v4754 = vor.u32 %v4752, %v4753
  %s4755 = scalar_lea.vmem [#allocation2], 4
  %v4756 = vld [vmem:[%s4755] ss:$8 sm:$0xf]
  %v4757 = vld [vmem:[%s4755] ss:$8 sm:$0xf0]
  %v4758 = vor.u32 %v4756, %v4757
  %s4759 = scalar_lea.vmem [#allocation2], 5
  %v4760 = vld [vmem:[%s4759] ss:$8 sm:$0xf]
  %v4761 = vld [vmem:[%s4759] ss:$8 sm:$0xf0]
  %v4762 = vor.u32 %v4760, %v4761
  %s4763 = scalar_lea.vmem [#allocation2], 6
  %v4764 = vld [vmem:[%s4763] ss:$8 sm:$0xf]
  %v4765 = vld [vmem:[%s4763] ss:$8 sm:$0xf0]
  %v4766 = vor.u32 %v4764, %v4765
  %s4767 = scalar_lea.vmem [#allocation2], 7
  %v4768 = vld [vmem:[%s4767] ss:$8 sm:$0xf]
  %v4769 = vld [vmem:[%s4767] ss:$8 sm:$0xf0]
  %v4770 = vor.u32 %v4768, %v4769
  %4772 = vrot.lane.b32.xlu0 %v4746, 32
  %v4773 = vpop.permute.xlu0 %4772
  %4776 = vrot.lane.b32.xlu0 %v4750, 64
  %v4777 = vpop.permute.xlu0 %4776
  %4780 = vrot.lane.b32.xlu0 %v4754, 96
  %v4781 = vpop.permute.xlu0 %4780
  %4784 = vrot.lane.b32.xlu0 %v4762, 32
  %v4785 = vpop.permute.xlu0 %4784
  %4788 = vrot.lane.b32.xlu0 %v4766, 64
  %v4789 = vpop.permute.xlu0 %4788
  %4792 = vrot.lane.b32.xlu0 %v4770, 96
  %v4793 = vpop.permute.xlu0 %4792
  %v4795 = vsel %vm4660, %v4742, %v4773
  %v4796 = vsel %vm182, %v4795, %v4777
  %vm4797 = vcmask 785408
  %v4798 = vsel %vm4797, %v4796, %v4781
  %v4799 = vsel %vm4660, %v4758, %v4785
  %v4800 = vsel %vm182, %v4799, %v4789
  %v4801 = vsel %vm4797, %v4800, %v4793
  %4802 = vst [vmem:[%s11] sm:$0xff] %v4798
  %4803 = vst [vmem:[%s11 + $0x8] sm:$0xff] %v4801
  // Predicated region
  $region53: #{fid_encoder_forward.1} parent=0 // pred_check
    _
  $region54: #{fid_encoder_forward.1} parent=0 // pred_check_branch
    %4805 = sbr.rel (0) target = $region56
  $region55: #{fid_encoder_forward.1} parent=0 // pred_region
    _
  $region56: #{fid_encoder_forward.1} parent=0 // pred_fallthru
    _
  // Predicated region
  $region57: #{fid_encoder_forward.1} parent=0 // pred_check
    _
  $region58: #{fid_encoder_forward.1} parent=0 // pred_check_branch
    %4807 = sbr.rel (0) target = $region60
  $region59: #{fid_encoder_forward.1} parent=0 // pred_region
    _
  $region60: #{fid_encoder_forward.1} parent=0 // pred_fallthru
    _

</llo_original>
